<compile_context>
chip_gen: v6e
topology: v6e:2x2x1
jax: 0.10.0
libtpu: 0.0.40
codegen_flags: <defaults>
</compile_context>

<pallas_src>
import functools

import jax
import jax.numpy as jnp
from jax.experimental import pallas as pl
from jax.experimental.pallas import tpu as pltpu


def gated_equivariant_kernel(
    x_ref,      # (TN, H)       f32
    v_ref,      # (3, TN, H)    f32
    w12t_ref,   # (H, H + O)    bf16  [vec1_proj.weight.T | vec2_proj.weight.T]
    wu1a_ref,   # (H, I)        bf16  update_net[0].weight.T[:H]
    wu1b_ref,   # (H, I)        bf16  update_net[0].weight.T[H:]
    b1_ref,     # (1, I)        f32
    wu2t_ref,   # (I, 2*O)      bf16  update_net[2].weight.T
    b2_ref,     # (1, 2*O)      f32
    out_ref,    # (TN, 4*O)     f32   packed [x_new | gated vec2 c0 | c1 | c2]
):
    tn, hidden = x_ref.shape
    out_c = out_ref.shape[-1] // 4

    # --- fused vec1/vec2 projection: one (3*TN, H) @ (H, H+O) matmul --------
    v2d = v_ref[...].reshape(3 * tn, hidden).astype(jnp.bfloat16)
    proj = jnp.dot(v2d, w12t_ref[...], preferred_element_type=jnp.float32)
    vp = proj[:, :hidden].reshape(3, tn, hidden)        # vec1_proj(v)
    vec2 = proj[:, hidden:].reshape(3, tn, out_c)       # vec2_proj(v)

    # vec1 = || vec1_proj(v) || over the 3 spatial components -> (TN, H), f32
    vec1 = jnp.sqrt(vp[0] * vp[0] + vp[1] * vp[1] + vp[2] * vp[2])

    # --- update_net(cat([x, vec1], -1)) without an in-kernel concat ---------
    h = (
        jnp.dot(x_ref[...].astype(jnp.bfloat16), wu1a_ref[...],
                preferred_element_type=jnp.float32)
        + jnp.dot(vec1.astype(jnp.bfloat16), wu1b_ref[...],
                  preferred_element_type=jnp.float32)
        + b1_ref[...]
    )
    h = h * jax.nn.sigmoid(h)                            # SiLU

    o = jnp.dot(h.astype(jnp.bfloat16), wu2t_ref[...],
                preferred_element_type=jnp.float32) + b2_ref[...]

    x_new = o[:, :out_c]                                 # (TN, O)
    gate = o[:, out_c:]                                  # (TN, O)

    # scalar_activation=False (module default) -> no activation on x_new.
    out_ref[...] = jnp.concatenate(
        [x_new, gate * vec2[0], gate * vec2[1], gate * vec2[2]], axis=-1
    ).astype(out_ref.dtype)


def _round_up(a, b):
    return (a + b - 1) // b * b


def pack_kernel_params(params):
    """f32 reference params -> kernel-ready params (bf16, fused/split, 2-D biases)."""
    w1t, w2t, wu1t, b1, wu2t, b2 = params
    hidden = w1t.shape[0]
    w12t = jnp.concatenate([w1t, w2t], axis=1).astype(jnp.bfloat16)    # (H, H+O)
    wu1a = wu1t[:hidden].astype(jnp.bfloat16)                          # (H, I)
    wu1b = wu1t[hidden:].astype(jnp.bfloat16)                          # (H, I)
    return (
        w12t, wu1a, wu1b,
        b1.reshape(1, -1).astype(jnp.float32),
        wu2t.astype(jnp.bfloat16),
        b2.reshape(1, -1).astype(jnp.float32),
    )


def gated_equivariant_block(x, v, kparams, *, out_channels, tile_n=256):
    """x: (N, H) f32, v: (3, N, H) f32 (component-major).
    Returns x_out (N, O), v_out (N, 3, O)."""
    n, hidden = x.shape
    assert v.shape == (3, n, hidden)
    w12t, wu1a, wu1b, b1, wu2t, b2 = kparams
    inter = wu1a.shape[1]
    out_c = out_channels
    assert w12t.shape == (hidden, hidden + out_c)

    # Big tiles amortize per-step overhead and fill the MXU M dim; clamp so
    # tiny problems don't over-pad.  Pad N to a multiple of the tile.
    tile_n = min(tile_n, _round_up(n, 8))
    assert tile_n % 8 == 0, "tile_n must be a multiple of 8 (sublane tiling)"
    n_pad = _round_up(n, tile_n)
    if n_pad != n:
        x = jnp.pad(x, ((0, n_pad - n), (0, 0)))
        v = jnp.pad(v, ((0, 0), (0, n_pad - n), (0, 0)))

    grid = (n_pad // tile_n,)
    const = lambda i: (0, 0)

    # VMEM budget: double-buffered x/v/out tiles + resident weights (+ slack).
    # NOTE(v7x): keep tile_n so this stays well under 64 MiB physical, and keep
    # the grid length >= 2 so the "parallel" axis shards across both TCs.
    itemsize = jnp.dtype(x.dtype).itemsize
    tile_bytes = (tile_n * hidden + 3 * tile_n * hidden + tile_n * 4 * out_c) * itemsize
    weight_bytes = (
        (hidden * (hidden + out_c) + 2 * hidden * inter + inter * 2 * out_c) * 2
        + (inter + 2 * out_c) * 4
    )
    vmem_limit = max(2 * tile_bytes + 2 * weight_bytes + (2 << 20), 32 * 1024 * 1024)

    packed = pl.pallas_call(
        gated_equivariant_kernel,
        out_shape=jax.ShapeDtypeStruct((n_pad, 4 * out_c), x.dtype),
        grid_spec=pltpu.PrefetchScalarGridSpec(
            num_scalar_prefetch=0,
            grid=grid,
            in_specs=[
                pl.BlockSpec((tile_n, hidden), lambda i: (i, 0)),
                pl.BlockSpec((3, tile_n, hidden), lambda i: (0, i, 0)),
                pl.BlockSpec((hidden, hidden + out_c), const),
                pl.BlockSpec((hidden, inter), const),
                pl.BlockSpec((hidden, inter), const),
                pl.BlockSpec((1, inter), const),
                pl.BlockSpec((inter, 2 * out_c), const),
                pl.BlockSpec((1, 2 * out_c), const),
            ],
            out_specs=pl.BlockSpec((tile_n, 4 * out_c), lambda i: (i, 0)),
        ),
        compiler_params=pltpu.CompilerParams(
            dimension_semantics=("parallel",),
            vmem_limit_bytes=vmem_limit,
        ),
    )(x, v, w12t, wu1a, wu1b, b1, wu2t, b2)

    x_out = packed[:n, :out_c]
    # Columns [O:4O] are [c0 | c1 | c2] -> reshapes straight to (N, 3, O).
    v_out = packed[:n, out_c:].reshape(n, 3, out_c)
    return x_out, v_out


def gated_equivariant_block_n3h(x, v_n3h, kparams, *, out_channels, tile_n=256):
    """PyTorch-layout convenience wrapper (v: (N, 3, H)).  Prefer keeping v in
    (3, N, H) between layers to avoid these extra HBM transposes."""
    return gated_equivariant_block(
        x, jnp.transpose(v_n3h, (1, 0, 2)), kparams,
        out_channels=out_channels, tile_n=tile_n)


def _xavier_uniform(key, shape):
    # torch.nn.init.xavier_uniform_ on a (fan_out, fan_in) Linear weight
    fan_out, fan_in = shape
    bound = jnp.sqrt(6.0 / (fan_in + fan_out))
    return jax.random.uniform(key, shape, jnp.float32, -bound, bound)


def init_params(key, hidden_channels, out_channels, intermediate_channels=None):
    if intermediate_channels is None:
        intermediate_channels = hidden_channels
    H, O, I = hidden_channels, out_channels, intermediate_channels
    k1, k2, k3, k4 = jax.random.split(key, 4)
    w1 = _xavier_uniform(k1, (H, H))            # vec1_proj.weight
    w2 = _xavier_uniform(k2, (O, H))            # vec2_proj.weight
    wu1 = _xavier_uniform(k3, (I, 2 * H))       # update_net[0].weight
    b1 = jnp.zeros((I,), jnp.float32)           # update_net[0].bias
    wu2 = _xavier_uniform(k4, (2 * O, I))       # update_net[2].weight
    b2 = jnp.zeros((2 * O,), jnp.float32)       # update_net[2].bias
    # store transposed weights (in @ W.T == in @ Wt)
    return (w1.T, w2.T, wu1.T, b1, wu2.T, b2)


def reference(x, v_c3, params, out_channels, matmul_dtype=jnp.float32):
    """Plain-JAX reference mirroring the PyTorch forward (v in (3, N, H)).
    matmul_dtype=bf16 reproduces the kernel's operand quantization exactly."""
    w1t, w2t, wu1t, b1, wu2t, b2 = params
    c = lambda a: a.astype(matmul_dtype)
    vp = jnp.einsum("cnh,hk->cnk", c(v_c3), c(w1t),
                    preferred_element_type=jnp.float32)
    vec1 = jnp.sqrt(jnp.sum(vp * vp, axis=0))                     # (N, H)
    vec2 = jnp.einsum("cnh,ho->cno", c(v_c3), c(w2t),
                      preferred_element_type=jnp.float32)         # (3, N, O)
    xc = jnp.concatenate([x, vec1], axis=-1)
    h = jnp.dot(c(xc), c(wu1t), preferred_element_type=jnp.float32) + b1
    h = h * jax.nn.sigmoid(h)
    o = jnp.dot(c(h), c(wu2t), preferred_element_type=jnp.float32) + b2
    x_new = o[:, :out_channels]
    gate = o[:, out_channels:]
    v_out = jnp.transpose(gate[None, :, :] * vec2, (1, 0, 2))     # (N, 3, O)
    return x_new, v_out


if __name__ == "__main__":
    N, H, O, I = 300, 128, 64, 128        # N deliberately not a tile multiple
    key = jax.random.PRNGKey(0)
    kx, kv, kp = jax.random.split(key, 3)

    x = jax.random.normal(kx, (N, H), jnp.float32)
    v = jax.random.normal(kv, (3, N, H), jnp.float32)   # component-major layout
    params = init_params(kp, H, O, I)
    kparams = pack_kernel_params(params)

    fwd = jax.jit(functools.partial(
        gated_equivariant_block, out_channels=O, tile_n=256))
    x_out, v_out = fwd(x, v, kparams)
    jax.block_until_ready((x_out, v_out))
    assert x_out.shape == (N, O) and v_out.shape == (N, 3, O)

    # Tight check vs. a reference that applies the same bf16 operand rounding.
    x_rb, v_rb = reference(x, v, params, O, matmul_dtype=jnp.bfloat16)
    assert jnp.allclose(x_out, x_rb, atol=1e-2, rtol=1e-2)
    assert jnp.allclose(v_out, v_rb, atol=1e-2, rtol=1e-2)

    # Loose check vs. the full-f32 forward (difference is bf16 rounding only).
    x_rf, v_rf = reference(x, v, params, O)
    assert jnp.allclose(x_out, x_rf, atol=0.25, rtol=0.05)
    assert jnp.allclose(v_out, v_rf, atol=0.25, rtol=0.05)

    print("KERNEL_OK")
</pallas_src>

<mosaic_0001>
module attributes {stable_mosaic.version = 11 : i64} {
  func.func @gated_equivariant_kernel(%arg0: i32, %arg1: memref<256x128xf32, #tpu.memory_space<vmem>>, %arg2: memref<3x256x128xf32, #tpu.memory_space<vmem>>, %arg3: memref<128x192xbf16, #tpu.memory_space<vmem>>, %arg4: memref<128x128xbf16, #tpu.memory_space<vmem>>, %arg5: memref<128x128xbf16, #tpu.memory_space<vmem>>, %arg6: memref<1x128xf32, #tpu.memory_space<vmem>>, %arg7: memref<128x128xbf16, #tpu.memory_space<vmem>>, %arg8: memref<1x128xf32, #tpu.memory_space<vmem>>, %arg9: memref<256x256xf32, #tpu.memory_space<vmem>>) attributes {dimension_semantics = [#tpu.dimension_semantics<parallel>], iteration_bounds = array<i64: 2>, scalar_prefetch = 0 : i64, scratch_operands = 0 : i64, tpu.core_type = #tpu.core_type<tc>, window_params = [{transform_indices = @transform_0, window_bounds = array<i64: 256, 128>}, {transform_indices = @transform_1, window_bounds = array<i64: 3, 256, 128>}, {pipeline_mode = #tpu.pipeline_mode<synchronous>, transform_indices = @transform_2, window_bounds = array<i64: 128, 192>}, {pipeline_mode = #tpu.pipeline_mode<synchronous>, transform_indices = @transform_3, window_bounds = array<i64: 128, 128>}, {pipeline_mode = #tpu.pipeline_mode<synchronous>, transform_indices = @transform_4, window_bounds = array<i64: 128, 128>}, {pipeline_mode = #tpu.pipeline_mode<synchronous>, transform_indices = @transform_5, window_bounds = array<i64: 1, 128>}, {pipeline_mode = #tpu.pipeline_mode<synchronous>, transform_indices = @transform_6, window_bounds = array<i64: 128, 128>}, {pipeline_mode = #tpu.pipeline_mode<synchronous>, transform_indices = @transform_7, window_bounds = array<i64: 1, 128>}, {transform_indices = @transform_8, window_bounds = array<i64: 256, 256>}]} {
    %c0 = arith.constant 0 : index
    %c0_0 = arith.constant 0 : index
    %c0_1 = arith.constant 0 : index
    %0 = vector.load %arg2[%c0, %c0_0, %c0_1] : memref<3x256x128xf32, #tpu.memory_space<vmem>>, vector<3x256x128xf32>
    %1 = vector.shape_cast %0 : vector<3x256x128xf32> to vector<768x128xf32>
    %2 = arith.truncf %1 : vector<768x128xf32> to vector<768x128xbf16>
    %c0_2 = arith.constant 0 : index
    %c0_3 = arith.constant 0 : index
    %3 = vector.load %arg3[%c0_2, %c0_3] : memref<128x192xbf16, #tpu.memory_space<vmem>>, vector<128x192xbf16>
    %cst = arith.constant dense<0.000000e+00> : vector<768x192xf32>
    %4 = tpu.matmul %2, %3, %cst {dimension_numbers = #tpu.dot_dimension_numbers<[1], [0], [0], [1], [0, 0, 1, 1], [], []>} : vector<768x128xbf16>, vector<128x192xbf16>, vector<768x192xf32> -> vector<768x192xf32>
    %5 = vector.extract_strided_slice %4 {offsets = [0, 0], sizes = [768, 128], strides = [1, 1]} : vector<768x192xf32> to vector<768x128xf32>
    %6 = vector.shape_cast %5 : vector<768x128xf32> to vector<3x256x128xf32>
    %7 = vector.extract_strided_slice %4 {offsets = [0, 128], sizes = [768, 64], strides = [1, 1]} : vector<768x192xf32> to vector<768x64xf32>
    %8 = vector.shape_cast %7 : vector<768x64xf32> to vector<3x256x64xf32>
    %9 = vector.extract_strided_slice %6 {offsets = [0, 0, 0], sizes = [1, 256, 128], strides = [1, 1, 1]} : vector<3x256x128xf32> to vector<1x256x128xf32>
    %10 = vector.shape_cast %9 : vector<1x256x128xf32> to vector<256x128xf32>
    %11 = vector.extract_strided_slice %6 {offsets = [0, 0, 0], sizes = [1, 256, 128], strides = [1, 1, 1]} : vector<3x256x128xf32> to vector<1x256x128xf32>
    %12 = vector.shape_cast %11 : vector<1x256x128xf32> to vector<256x128xf32>
    %13 = arith.mulf %10, %12 : vector<256x128xf32>
    %14 = vector.extract_strided_slice %6 {offsets = [1, 0, 0], sizes = [1, 256, 128], strides = [1, 1, 1]} : vector<3x256x128xf32> to vector<1x256x128xf32>
    %15 = vector.shape_cast %14 : vector<1x256x128xf32> to vector<256x128xf32>
    %16 = vector.extract_strided_slice %6 {offsets = [1, 0, 0], sizes = [1, 256, 128], strides = [1, 1, 1]} : vector<3x256x128xf32> to vector<1x256x128xf32>
    %17 = vector.shape_cast %16 : vector<1x256x128xf32> to vector<256x128xf32>
    %18 = arith.mulf %15, %17 : vector<256x128xf32>
    %19 = arith.addf %13, %18 : vector<256x128xf32>
    %20 = vector.extract_strided_slice %6 {offsets = [2, 0, 0], sizes = [1, 256, 128], strides = [1, 1, 1]} : vector<3x256x128xf32> to vector<1x256x128xf32>
    %21 = vector.shape_cast %20 : vector<1x256x128xf32> to vector<256x128xf32>
    %22 = vector.extract_strided_slice %6 {offsets = [2, 0, 0], sizes = [1, 256, 128], strides = [1, 1, 1]} : vector<3x256x128xf32> to vector<1x256x128xf32>
    %23 = vector.shape_cast %22 : vector<1x256x128xf32> to vector<256x128xf32>
    %24 = arith.mulf %21, %23 : vector<256x128xf32>
    %25 = arith.addf %19, %24 : vector<256x128xf32>
    %26 = math.sqrt %25 : vector<256x128xf32>
    %c0_4 = arith.constant 0 : index
    %c0_5 = arith.constant 0 : index
    %27 = vector.load %arg1[%c0_4, %c0_5] : memref<256x128xf32, #tpu.memory_space<vmem>>, vector<256x128xf32>
    %28 = arith.truncf %27 : vector<256x128xf32> to vector<256x128xbf16>
    %c0_6 = arith.constant 0 : index
    %c0_7 = arith.constant 0 : index
    %29 = vector.load %arg4[%c0_6, %c0_7] : memref<128x128xbf16, #tpu.memory_space<vmem>>, vector<128x128xbf16>
    %cst_8 = arith.constant dense<0.000000e+00> : vector<256x128xf32>
    %30 = tpu.matmul %28, %29, %cst_8 {dimension_numbers = #tpu.dot_dimension_numbers<[1], [0], [0], [1], [0, 0, 1, 1], [], []>} : vector<256x128xbf16>, vector<128x128xbf16>, vector<256x128xf32> -> vector<256x128xf32>
    %31 = arith.truncf %26 : vector<256x128xf32> to vector<256x128xbf16>
    %c0_9 = arith.constant 0 : index
    %c0_10 = arith.constant 0 : index
    %32 = vector.load %arg5[%c0_9, %c0_10] : memref<128x128xbf16, #tpu.memory_space<vmem>>, vector<128x128xbf16>
    %cst_11 = arith.constant dense<0.000000e+00> : vector<256x128xf32>
    %33 = tpu.matmul %31, %32, %cst_11 {dimension_numbers = #tpu.dot_dimension_numbers<[1], [0], [0], [1], [0, 0, 1, 1], [], []>} : vector<256x128xbf16>, vector<128x128xbf16>, vector<256x128xf32> -> vector<256x128xf32>
    %34 = arith.addf %30, %33 : vector<256x128xf32>
    %c0_12 = arith.constant 0 : index
    %c0_13 = arith.constant 0 : index
    %35 = vector.load %arg6[%c0_12, %c0_13] : memref<1x128xf32, #tpu.memory_space<vmem>>, vector<1x128xf32>
    %36 = vector.broadcast %35 : vector<1x128xf32> to vector<256x128xf32>
    %37 = arith.addf %34, %36 : vector<256x128xf32>
    %38 = arith.negf %37 : vector<256x128xf32>
    %39 = math.exp %38 : vector<256x128xf32>
    %cst_14 = arith.constant 1.000000e+00 : f32
    %40 = vector.broadcast %cst_14 : f32 to vector<256x128xf32>
    %41 = arith.addf %40, %39 : vector<256x128xf32>
    %42 = arith.divf %40, %41 : vector<256x128xf32>
    %43 = arith.mulf %37, %42 : vector<256x128xf32>
    %44 = arith.truncf %43 : vector<256x128xf32> to vector<256x128xbf16>
    %c0_15 = arith.constant 0 : index
    %c0_16 = arith.constant 0 : index
    %45 = vector.load %arg7[%c0_15, %c0_16] : memref<128x128xbf16, #tpu.memory_space<vmem>>, vector<128x128xbf16>
    %cst_17 = arith.constant dense<0.000000e+00> : vector<256x128xf32>
    %46 = tpu.matmul %44, %45, %cst_17 {dimension_numbers = #tpu.dot_dimension_numbers<[1], [0], [0], [1], [0, 0, 1, 1], [], []>} : vector<256x128xbf16>, vector<128x128xbf16>, vector<256x128xf32> -> vector<256x128xf32>
    %c0_18 = arith.constant 0 : index
    %c0_19 = arith.constant 0 : index
    %47 = vector.load %arg8[%c0_18, %c0_19] : memref<1x128xf32, #tpu.memory_space<vmem>>, vector<1x128xf32>
    %48 = vector.broadcast %47 : vector<1x128xf32> to vector<256x128xf32>
    %49 = arith.addf %46, %48 : vector<256x128xf32>
    %50 = vector.extract_strided_slice %49 {offsets = [0, 0], sizes = [256, 64], strides = [1, 1]} : vector<256x128xf32> to vector<256x64xf32>
    %51 = vector.extract_strided_slice %49 {offsets = [0, 64], sizes = [256, 64], strides = [1, 1]} : vector<256x128xf32> to vector<256x64xf32>
    %52 = vector.extract_strided_slice %8 {offsets = [0, 0, 0], sizes = [1, 256, 64], strides = [1, 1, 1]} : vector<3x256x64xf32> to vector<1x256x64xf32>
    %53 = vector.shape_cast %52 : vector<1x256x64xf32> to vector<256x64xf32>
    %54 = arith.mulf %51, %53 : vector<256x64xf32>
    %55 = vector.extract_strided_slice %8 {offsets = [1, 0, 0], sizes = [1, 256, 64], strides = [1, 1, 1]} : vector<3x256x64xf32> to vector<1x256x64xf32>
    %56 = vector.shape_cast %55 : vector<1x256x64xf32> to vector<256x64xf32>
    %57 = arith.mulf %51, %56 : vector<256x64xf32>
    %58 = vector.extract_strided_slice %8 {offsets = [2, 0, 0], sizes = [1, 256, 64], strides = [1, 1, 1]} : vector<3x256x64xf32> to vector<1x256x64xf32>
    %59 = vector.shape_cast %58 : vector<1x256x64xf32> to vector<256x64xf32>
    %60 = arith.mulf %51, %59 : vector<256x64xf32>
    %61 = tpu.concatenate %50, %54, %57, %60 in 1 : vector<256x64xf32>, vector<256x64xf32>, vector<256x64xf32>, vector<256x64xf32> -> vector<256x256xf32>
    %c0_20 = arith.constant 0 : index
    %c0_21 = arith.constant 0 : index
    %62 = vector.load %arg9[%c0_20, %c0_21] : memref<256x256xf32, #tpu.memory_space<vmem>>, vector<256x256xf32>
    tpu.vector_store %arg9[%c0_20, %c0_21], %61 {strides = array<i32>} : memref<256x256xf32, #tpu.memory_space<vmem>>, vector<256x256xf32>,
    return
  }
  func.func @transform_0(%arg0: i32) -> (i32, i32) {
    %c0_i32 = arith.constant 0 : i32
    %c0_i32_0 = arith.constant 0 : i32
    return %arg0, %c0_i32 : i32, i32
  }
  func.func @transform_1(%arg0: i32) -> (i32, i32, i32) {
    %c0_i32 = arith.constant 0 : i32
    %c0_i32_0 = arith.constant 0 : i32
    %c0_i32_1 = arith.constant 0 : i32
    return %c0_i32, %arg0, %c0_i32_0 : i32, i32, i32
  }
  func.func @transform_2(%arg0: i32) -> (i32, i32) {
    %c0_i32 = arith.constant 0 : i32
    %c0_i32_0 = arith.constant 0 : i32
    %c0_i32_1 = arith.constant 0 : i32
    return %c0_i32, %c0_i32_0 : i32, i32
  }
  func.func @transform_3(%arg0: i32) -> (i32, i32) {
    %c0_i32 = arith.constant 0 : i32
    %c0_i32_0 = arith.constant 0 : i32
    %c0_i32_1 = arith.constant 0 : i32
    return %c0_i32, %c0_i32_0 : i32, i32
  }
  func.func @transform_4(%arg0: i32) -> (i32, i32) {
    %c0_i32 = arith.constant 0 : i32
    %c0_i32_0 = arith.constant 0 : i32
    %c0_i32_1 = arith.constant 0 : i32
    return %c0_i32, %c0_i32_0 : i32, i32
  }
  func.func @transform_5(%arg0: i32) -> (i32, i32) {
    %c0_i32 = arith.constant 0 : i32
    %c0_i32_0 = arith.constant 0 : i32
    %c0_i32_1 = arith.constant 0 : i32
    return %c0_i32, %c0_i32_0 : i32, i32
  }
  func.func @transform_6(%arg0: i32) -> (i32, i32) {
    %c0_i32 = arith.constant 0 : i32
    %c0_i32_0 = arith.constant 0 : i32
    %c0_i32_1 = arith.constant 0 : i32
    return %c0_i32, %c0_i32_0 : i32, i32
  }
  func.func @transform_7(%arg0: i32) -> (i32, i32) {
    %c0_i32 = arith.constant 0 : i32
    %c0_i32_0 = arith.constant 0 : i32
    %c0_i32_1 = arith.constant 0 : i32
    return %c0_i32, %c0_i32_0 : i32, i32
  }
  func.func @transform_8(%arg0: i32) -> (i32, i32) {
    %c0_i32 = arith.constant 0 : i32
    %c0_i32_0 = arith.constant 0 : i32
    return %arg0, %c0_i32 : i32, i32
  }
}

</mosaic_0001>

<llo_original>
// kernel: gated_equivariant_block.1
$region0: #{gated_equivariant_block.1}
  #allocation0 [shape = 'u32[]', space=smem, size = 0x4, offset = 0x4, fixed_abs, tag = 'smem constant byte address 0x4 - core index']
  #allocation1 [shape = 'u32[144,128]{1,0:T(1,128)}', space=vmem, size = 0x12000, scoped, tag = 'internal scratch']
  %s0 = inlined_call_operand.vmem [shape: f32[512,128], index: 0, kind: input, shape index: {}]
  %s1 = inlined_call_operand.vmem [shape: f32[3,512,128], index: 1, kind: input, shape index: {}]
  %s2 = inlined_call_operand.vmem [shape: bf16[128,192], index: 2, kind: input, shape index: {}]
  %s3 = inlined_call_operand.vmem [shape: bf16[128,128], index: 3, kind: input, shape index: {}]
  %s4 = inlined_call_operand.vmem [shape: bf16[128,128], index: 4, kind: input, shape index: {}]
  %s5 = inlined_call_operand.vmem [shape: f32[1,128], index: 5, kind: input, shape index: {}]
  %s6 = inlined_call_operand.vmem [shape: bf16[128,128], index: 6, kind: input, shape index: {}]
  %s7 = inlined_call_operand.vmem [shape: f32[1,128], index: 7, kind: input, shape index: {}]
  %s8 = inlined_call_operand.vmem [shape: f32[512,256], index: 8, kind: output, shape index: {}]
  %s9 = sld [smem:[#allocation0]]
  $region103: #{gated_equivariant_block.1} parent=0
    _
  %s11 = ssub.s32 1, %s9
  %s12 = scalar_select 0, %s11, %s9
  $region1: #{gated_equivariant_block.1} parent=0
    #allocation2 [shape = 'u8[786432]{0}', space=vmem, size = 0xc0000, scoped, tag = 'input window, operand 1']
    loop: start=0, step=1, limit=4
    $region2: #{gated_equivariant_block.1} parent=1 // loop_pre_header
      _
    $region3: #{gated_equivariant_block.1} parent=1 // loop_header
      %s14 = sphi 0, %s18
      %p15 = scmp.ge.s32.totalorder %s14, 4
      %s24 = sphi 0, %s26
      %s27 = sphi 0, %s24
      %s28 = sphi 0, %s27
      %s44 = sphi 0, %s28
      %s50 = sphi 0, %s52
      %s53 = sphi 0, %s50
      %s54 = sphi 0, %s53
      %s70 = sphi 0, %s54
      %s74 = sphi 0, %s74
      %s76 = sphi 0, %s74
      %s77 = sphi 0, %s76
      %s91 = sphi 0, %s77
      %s95 = sphi 0, %s95
      %s97 = sphi 0, %s95
      %s98 = sphi 0, %s97
      %s112 = sphi 0, %s98
      %s116 = sphi 0, %s116
      %s118 = sphi 0, %s116
      %s119 = sphi 0, %s118
      %s133 = sphi 0, %s119
      %s137 = sphi 0, %s137
      %s139 = sphi 0, %s137
      %s140 = sphi 0, %s139
      %s154 = sphi 0, %s140
      %s158 = sphi 0, %s158
      %s160 = sphi 0, %s158
      %s161 = sphi 0, %s160
      %s175 = sphi 0, %s161
      %s179 = sphi 0, %s179
      %s181 = sphi 0, %s179
      %s182 = sphi 0, %s181
      %s196 = sphi 0, %s182
      %s202 = sphi 0, %s204
      %s205 = sphi 0, %s202
      %s206 = sphi 0, %s205
      %s222 = sphi 0, %s206
    $region4: #{gated_equivariant_block.1} parent=1 // loop_header_branch
      %17 = sbr.rel (%p15) target = $region8
    $region5: #{gated_equivariant_block.1} parent=1 // loop_body
      %s19 = ssub.s32 %s14, 1
      %s20 = ssub.s32 %s14, 2
      %s21 = sadd.s32 %s14, 1
      %s22 = ssub.s32 %s14, %s21
      %p23 = scmp.eq.s32.totalorder %s22, 0
      %s25 = sadd.s32 %s24, 1
      %s26 = scalar_select %p23, %s24, %s25
      %p29 = pneg %p23
      %p30 = scmp.eq.s32.totalorder %s14, 1
      %p31 = por %p29, %p30
      %p32 = scmp.ne.s32.totalorder %s24, %s27
      %p33 = scmp.eq.s32.totalorder %s14, 0
      %p34 = por %p32, %p33
      %p35 = scmp.ne.s32.totalorder %s24, %s27
      %p36 = scmp.eq.s32.totalorder %s19, 1
      %p37 = por %p35, %p36
      %p38 = scmp.ne.s32.totalorder %s27, %s28
      %p39 = scmp.eq.s32.totalorder %s19, 0
      %p40 = por %p38, %p39
      %p41 = scmp.ne.s32.totalorder %s27, %s28
      %p42 = scmp.eq.s32.totalorder %s20, 1
      %p43 = por %p41, %p42
      %p45 = scmp.ne.s32.totalorder %s28, %s44
      %p46 = scmp.eq.s32.totalorder %s20, 0
      %p47 = por %p45, %p46
      %s48 = ssub.s32 %s14, %s21
      %p49 = scmp.eq.s32.totalorder %s48, 0
      %s51 = sadd.s32 %s50, 1
      %s52 = scalar_select %p49, %s50, %s51
      %p55 = pneg %p49
      %p56 = scmp.eq.s32.totalorder %s14, 1
      %p57 = por %p55, %p56
      %p58 = scmp.ne.s32.totalorder %s50, %s53
      %p59 = scmp.eq.s32.totalorder %s14, 0
      %p60 = por %p58, %p59
      %p61 = scmp.ne.s32.totalorder %s50, %s53
      %p62 = scmp.eq.s32.totalorder %s19, 1
      %p63 = por %p61, %p62
      %p64 = scmp.ne.s32.totalorder %s53, %s54
      %p65 = scmp.eq.s32.totalorder %s19, 0
      %p66 = por %p64, %p65
      %p67 = scmp.ne.s32.totalorder %s53, %s54
      %p68 = scmp.eq.s32.totalorder %s20, 1
      %p69 = por %p67, %p68
      %p71 = scmp.ne.s32.totalorder %s54, %s70
      %p72 = scmp.eq.s32.totalorder %s20, 0
      %p73 = por %p71, %p72
      %s75 = sadd.s32 %s74, 1
      %p78 = scmp.eq.s32.totalorder %s14, 1
      %p79 = scmp.ne.s32.totalorder %s74, %s76
      %p80 = scmp.eq.s32.totalorder %s14, 0
      %p81 = por %p79, %p80
      %p82 = scmp.ne.s32.totalorder %s74, %s76
      %p83 = scmp.eq.s32.totalorder %s19, 1
      %p84 = por %p82, %p83
      %p85 = scmp.ne.s32.totalorder %s76, %s77
      %p86 = scmp.eq.s32.totalorder %s19, 0
      %p87 = por %p85, %p86
      %p88 = scmp.ne.s32.totalorder %s76, %s77
      %p89 = scmp.eq.s32.totalorder %s20, 1
      %p90 = por %p88, %p89
      %p92 = scmp.ne.s32.totalorder %s77, %s91
      %p93 = scmp.eq.s32.totalorder %s20, 0
      %p94 = por %p92, %p93
      %s96 = sadd.s32 %s95, 1
      %p99 = scmp.eq.s32.totalorder %s14, 1
      %p100 = scmp.ne.s32.totalorder %s95, %s97
      %p101 = scmp.eq.s32.totalorder %s14, 0
      %p102 = por %p100, %p101
      %p103 = scmp.ne.s32.totalorder %s95, %s97
      %p104 = scmp.eq.s32.totalorder %s19, 1
      %p105 = por %p103, %p104
      %p106 = scmp.ne.s32.totalorder %s97, %s98
      %p107 = scmp.eq.s32.totalorder %s19, 0
      %p108 = por %p106, %p107
      %p109 = scmp.ne.s32.totalorder %s97, %s98
      %p110 = scmp.eq.s32.totalorder %s20, 1
      %p111 = por %p109, %p110
      %p113 = scmp.ne.s32.totalorder %s98, %s112
      %p114 = scmp.eq.s32.totalorder %s20, 0
      %p115 = por %p113, %p114
      %s117 = sadd.s32 %s116, 1
      %p120 = scmp.eq.s32.totalorder %s14, 1
      %p121 = scmp.ne.s32.totalorder %s116, %s118
      %p122 = scmp.eq.s32.totalorder %s14, 0
      %p123 = por %p121, %p122
      %p124 = scmp.ne.s32.totalorder %s116, %s118
      %p125 = scmp.eq.s32.totalorder %s19, 1
      %p126 = por %p124, %p125
      %p127 = scmp.ne.s32.totalorder %s118, %s119
      %p128 = scmp.eq.s32.totalorder %s19, 0
      %p129 = por %p127, %p128
      %p130 = scmp.ne.s32.totalorder %s118, %s119
      %p131 = scmp.eq.s32.totalorder %s20, 1
      %p132 = por %p130, %p131
      %p134 = scmp.ne.s32.totalorder %s119, %s133
      %p135 = scmp.eq.s32.totalorder %s20, 0
      %p136 = por %p134, %p135
      %s138 = sadd.s32 %s137, 1
      %p141 = scmp.eq.s32.totalorder %s14, 1
      %p142 = scmp.ne.s32.totalorder %s137, %s139
      %p143 = scmp.eq.s32.totalorder %s14, 0
      %p144 = por %p142, %p143
      %p145 = scmp.ne.s32.totalorder %s137, %s139
      %p146 = scmp.eq.s32.totalorder %s19, 1
      %p147 = por %p145, %p146
      %p148 = scmp.ne.s32.totalorder %s139, %s140
      %p149 = scmp.eq.s32.totalorder %s19, 0
      %p150 = por %p148, %p149
      %p151 = scmp.ne.s32.totalorder %s139, %s140
      %p152 = scmp.eq.s32.totalorder %s20, 1
      %p153 = por %p151, %p152
      %p155 = scmp.ne.s32.totalorder %s140, %s154
      %p156 = scmp.eq.s32.totalorder %s20, 0
      %p157 = por %p155, %p156
      %s159 = sadd.s32 %s158, 1
      %p162 = scmp.eq.s32.totalorder %s14, 1
      %p163 = scmp.ne.s32.totalorder %s158, %s160
      %p164 = scmp.eq.s32.totalorder %s14, 0
      %p165 = por %p163, %p164
      %p166 = scmp.ne.s32.totalorder %s158, %s160
      %p167 = scmp.eq.s32.totalorder %s19, 1
      %p168 = por %p166, %p167
      %p169 = scmp.ne.s32.totalorder %s160, %s161
      %p170 = scmp.eq.s32.totalorder %s19, 0
      %p171 = por %p169, %p170
      %p172 = scmp.ne.s32.totalorder %s160, %s161
      %p173 = scmp.eq.s32.totalorder %s20, 1
      %p174 = por %p172, %p173
      %p176 = scmp.ne.s32.totalorder %s161, %s175
      %p177 = scmp.eq.s32.totalorder %s20, 0
      %p178 = por %p176, %p177
      %s180 = sadd.s32 %s179, 1
      %p183 = scmp.eq.s32.totalorder %s14, 1
      %p184 = scmp.ne.s32.totalorder %s179, %s181
      %p185 = scmp.eq.s32.totalorder %s14, 0
      %p186 = por %p184, %p185
      %p187 = scmp.ne.s32.totalorder %s179, %s181
      %p188 = scmp.eq.s32.totalorder %s19, 1
      %p189 = por %p187, %p188
      %p190 = scmp.ne.s32.totalorder %s181, %s182
      %p191 = scmp.eq.s32.totalorder %s19, 0
      %p192 = por %p190, %p191
      %p193 = scmp.ne.s32.totalorder %s181, %s182
      %p194 = scmp.eq.s32.totalorder %s20, 1
      %p195 = por %p193, %p194
      %p197 = scmp.ne.s32.totalorder %s182, %s196
      %p198 = scmp.eq.s32.totalorder %s20, 0
      %p199 = por %p197, %p198
      %s200 = ssub.s32 %s14, %s21
      %p201 = scmp.eq.s32.totalorder %s200, 0
      %s203 = sadd.s32 %s202, 1
      %s204 = scalar_select %p201, %s202, %s203
      %p207 = pneg %p201
      %p208 = scmp.eq.s32.totalorder %s14, 1
      %p209 = por %p207, %p208
      %p210 = scmp.ne.s32.totalorder %s202, %s205
      %p211 = scmp.eq.s32.totalorder %s14, 0
      %p212 = por %p210, %p211
      %p213 = scmp.ne.s32.totalorder %s202, %s205
      %p214 = scmp.eq.s32.totalorder %s19, 1
      %p215 = por %p213, %p214
      %p216 = scmp.ne.s32.totalorder %s205, %s206
      %p217 = scmp.eq.s32.totalorder %s19, 0
      %p218 = por %p216, %p217
      %p219 = scmp.ne.s32.totalorder %s205, %s206
      %p220 = scmp.eq.s32.totalorder %s20, 1
      %p221 = por %p219, %p220
      %p223 = scmp.ne.s32.totalorder %s206, %s222
      %p224 = scmp.eq.s32.totalorder %s20, 0
      %p225 = por %p223, %p224
      %p226 = scmp.le.s32.totalorder 1, %s14
      %p227 = scmp.lt.s32.totalorder %s14, 3
      %p228 = pnand %p226, %p227
      %p229 = pneg %p228
      // Predicated region
      $region9: #{gated_equivariant_block.1} parent=5 // pred_check
        _
      $region10: #{gated_equivariant_block.1} parent=5 // pred_check_branch
        %231 = sbr.rel (%p228) target = $region12
      $region11: #{gated_equivariant_block.1} parent=5 // pred_region
        %s232 = ssub.s32 %s14, 1
        // Predicated region
        $region13: #{gated_equivariant_block.1} parent=11 // pred_check
          %p233 = pneg %p87
        $region14: #{gated_equivariant_block.1} parent=11 // pred_check_branch
          %235 = sbr.rel (%p233) target = $region16
        $region15: #{gated_equivariant_block.1} parent=11 // pred_region
          _
        $region16: #{gated_equivariant_block.1} parent=11 // pred_fallthru
          _
        // Predicated region
        $region17: #{gated_equivariant_block.1} parent=11 // pred_check
          %p236 = pneg %p108
        $region18: #{gated_equivariant_block.1} parent=11 // pred_check_branch
          %238 = sbr.rel (%p236) target = $region20
        $region19: #{gated_equivariant_block.1} parent=11 // pred_region
          _
        $region20: #{gated_equivariant_block.1} parent=11 // pred_fallthru
          _
        // Predicated region
        $region21: #{gated_equivariant_block.1} parent=11 // pred_check
          %p239 = pneg %p129
        $region22: #{gated_equivariant_block.1} parent=11 // pred_check_branch
          %241 = sbr.rel (%p239) target = $region24
        $region23: #{gated_equivariant_block.1} parent=11 // pred_region
          _
        $region24: #{gated_equivariant_block.1} parent=11 // pred_fallthru
          _
        // Predicated region
        $region25: #{gated_equivariant_block.1} parent=11 // pred_check
          %p242 = pneg %p150
        $region26: #{gated_equivariant_block.1} parent=11 // pred_check_branch
          %244 = sbr.rel (%p242) target = $region28
        $region27: #{gated_equivariant_block.1} parent=11 // pred_region
          _
        $region28: #{gated_equivariant_block.1} parent=11 // pred_fallthru
          _
        // Predicated region
        $region29: #{gated_equivariant_block.1} parent=11 // pred_check
          %p245 = pneg %p171
        $region30: #{gated_equivariant_block.1} parent=11 // pred_check_branch
          %247 = sbr.rel (%p245) target = $region32
        $region31: #{gated_equivariant_block.1} parent=11 // pred_region
          _
        $region32: #{gated_equivariant_block.1} parent=11 // pred_fallthru
          _
        // Predicated region
        $region33: #{gated_equivariant_block.1} parent=11 // pred_check
          %p248 = pneg %p192
        $region34: #{gated_equivariant_block.1} parent=11 // pred_check_branch
          %250 = sbr.rel (%p248) target = $region36
        $region35: #{gated_equivariant_block.1} parent=11 // pred_region
          _
        $region36: #{gated_equivariant_block.1} parent=11 // pred_fallthru
          _
      $region12: #{gated_equivariant_block.1} parent=5 // pred_fallthru
        _
      %p251 = scmp.lt.s32.totalorder %s14, 2
      // Predicated region
      $region37: #{gated_equivariant_block.1} parent=5 // pred_check
        %p252 = pneg %p251
      $region38: #{gated_equivariant_block.1} parent=5 // pred_check_branch
        %254 = sbr.rel (%p252) target = $region40
      $region39: #{gated_equivariant_block.1} parent=5 // pred_region
        // Predicated region
        $region41: #{gated_equivariant_block.1} parent=39 // pred_check
          %p255 = pneg %p34
        $region42: #{gated_equivariant_block.1} parent=39 // pred_check_branch
          %257 = sbr.rel (%p255) target = $region44
        $region43: #{gated_equivariant_block.1} parent=39 // pred_region
          %s258 = smul.u32 32, %s14
          %p259 = scmp.lt.s32.totalorder %s258, 63
          %s260 = scalar_select %p259, %s258, 63
          %s261 = smul.addr %s260, 8
          %s262 = scalar_lea.vmem %s0, %s261
          %s263 = smul.u32 32, %s14
        $region44: #{gated_equivariant_block.1} parent=39 // pred_fallthru
          _
        // Predicated region
        $region45: #{gated_equivariant_block.1} parent=39 // pred_check
          %p264 = pneg %p60
        $region46: #{gated_equivariant_block.1} parent=39 // pred_check_branch
          %266 = sbr.rel (%p264) target = $region48
        $region47: #{gated_equivariant_block.1} parent=39 // pred_region
          %s267 = sand.u32 %s50, 1
          %s268 = sand.u32 %s50, 1
          %s269 = smul.addr %s268, 768
          %s270 = scalar_lea.vmem [#allocation2], %s269
          %s271 = smul.u32 32, %s14
          %s272 = smul.addr %s271, 8
          %s273 = scalar_lea.vmem %s1, %s272
          // Predicated region
          $region49: #{gated_equivariant_block.1} parent=47 // pred_check
            _
          $region50: #{gated_equivariant_block.1} parent=47 // pred_check_branch
            %275 = sbr.rel (0) target = $region52
          $region51: #{gated_equivariant_block.1} parent=47 // pred_region
            // Predicated region
            $region53: #{gated_equivariant_block.1} parent=51 // pred_check
              _
            $region54: #{gated_equivariant_block.1} parent=51 // pred_check_branch
              %277 = sbr.rel (0) target = $region56
            $region55: #{gated_equivariant_block.1} parent=51 // pred_region
              // Predicated region
              $region68: #{gated_equivariant_block.1} parent=55 // pred_check
                _
              $region69: #{gated_equivariant_block.1} parent=55 // pred_check_branch
                %483 = sbr.rel (0) target = $region71
              $region70: #{gated_equivariant_block.1} parent=55 // pred_region
                loop: start=0, step=1, limit=1
                $region72: #{gated_equivariant_block.1} parent=70 // loop_pre_header
                  _
                $region73: #{gated_equivariant_block.1} parent=70 // loop_header
                  %s485 = sphi 0, %s489
                  %p486 = scmp.ge.s32.totalorder %s485, 1
                  %s490 = sphi %s273, %s273
                  %s491 = sphi %s270, %s270
                $region74: #{gated_equivariant_block.1} parent=70 // loop_header_branch
                  %488 = sbr.rel (%p486) target = $region78
                $region75: #{gated_equivariant_block.1} parent=70 // loop_body
                  %v492 = vld [vmem:[%s490] sm:$0xff]
                  %493 = vst [vmem:[%s491] sm:$0xff] %v492
                  %v494 = vld [vmem:[%s490 + $0x8] sm:$0xff]
                  %495 = vst [vmem:[%s491 + $0x8] sm:$0xff] %v494
                  %v496 = vld [vmem:[%s490 + $0x10] sm:$0xff]
                  %497 = vst [vmem:[%s491 + $0x10] sm:$0xff] %v496
                  %v498 = vld [vmem:[%s490 + $0x18] sm:$0xff]
                  %499 = vst [vmem:[%s491 + $0x18] sm:$0xff] %v498
                  %v500 = vld [vmem:[%s490 + $0x20] sm:$0xff]
                  %501 = vst [vmem:[%s491 + $0x20] sm:$0xff] %v500
                  %v502 = vld [vmem:[%s490 + $0x28] sm:$0xff]
                  %503 = vst [vmem:[%s491 + $0x28] sm:$0xff] %v502
                  %v504 = vld [vmem:[%s490 + $0x30] sm:$0xff]
                  %505 = vst [vmem:[%s491 + $0x30] sm:$0xff] %v504
                  %v506 = vld [vmem:[%s490 + $0x38] sm:$0xff]
                  %507 = vst [vmem:[%s491 + $0x38] sm:$0xff] %v506
                  %v508 = vld [vmem:[%s490 + $0x40] sm:$0xff]
                  %509 = vst [vmem:[%s491 + $0x40] sm:$0xff] %v508
                  %v510 = vld [vmem:[%s490 + $0x48] sm:$0xff]
                  %511 = vst [vmem:[%s491 + $0x48] sm:$0xff] %v510
                  %v512 = vld [vmem:[%s490 + $0x50] sm:$0xff]
                  %513 = vst [vmem:[%s491 + $0x50] sm:$0xff] %v512
                  %v514 = vld [vmem:[%s490 + $0x58] sm:$0xff]
                  %515 = vst [vmem:[%s491 + $0x58] sm:$0xff] %v514
                  %v516 = vld [vmem:[%s490 + $0x60] sm:$0xff]
                  %517 = vst [vmem:[%s491 + $0x60] sm:$0xff] %v516
                  %v518 = vld [vmem:[%s490 + $0x68] sm:$0xff]
                  %519 = vst [vmem:[%s491 + $0x68] sm:$0xff] %v518
                  %v520 = vld [vmem:[%s490 + $0x70] sm:$0xff]
                  %521 = vst [vmem:[%s491 + $0x70] sm:$0xff] %v520
                  %v522 = vld [vmem:[%s490 + $0x78] sm:$0xff]
                  %523 = vst [vmem:[%s491 + $0x78] sm:$0xff] %v522
                  %v524 = vld [vmem:[%s490 + $0x80] sm:$0xff]
                  %525 = vst [vmem:[%s491 + $0x80] sm:$0xff] %v524
                  %v526 = vld [vmem:[%s490 + $0x88] sm:$0xff]
                  %527 = vst [vmem:[%s491 + $0x88] sm:$0xff] %v526
                  %v528 = vld [vmem:[%s490 + $0x90] sm:$0xff]
                  %529 = vst [vmem:[%s491 + $0x90] sm:$0xff] %v528
                  %v530 = vld [vmem:[%s490 + $0x98] sm:$0xff]
                  %531 = vst [vmem:[%s491 + $0x98] sm:$0xff] %v530
                  %v532 = vld [vmem:[%s490 + $0xa0] sm:$0xff]
                  %533 = vst [vmem:[%s491 + $0xa0] sm:$0xff] %v532
                  %v534 = vld [vmem:[%s490 + $0xa8] sm:$0xff]
                  %535 = vst [vmem:[%s491 + $0xa8] sm:$0xff] %v534
                  %v536 = vld [vmem:[%s490 + $0xb0] sm:$0xff]
                  %537 = vst [vmem:[%s491 + $0xb0] sm:$0xff] %v536
                  %v538 = vld [vmem:[%s490 + $0xb8] sm:$0xff]
                  %539 = vst [vmem:[%s491 + $0xb8] sm:$0xff] %v538
                  %v540 = vld [vmem:[%s490 + $0xc0] sm:$0xff]
                  %541 = vst [vmem:[%s491 + $0xc0] sm:$0xff] %v540
                  %v542 = vld [vmem:[%s490 + $0xc8] sm:$0xff]
                  %543 = vst [vmem:[%s491 + $0xc8] sm:$0xff] %v542
                  %v544 = vld [vmem:[%s490 + $0xd0] sm:$0xff]
                  %545 = vst [vmem:[%s491 + $0xd0] sm:$0xff] %v544
                  %v546 = vld [vmem:[%s490 + $0xd8] sm:$0xff]
                  %547 = vst [vmem:[%s491 + $0xd8] sm:$0xff] %v546
                  %v548 = vld [vmem:[%s490 + $0xe0] sm:$0xff]
                  %549 = vst [vmem:[%s491 + $0xe0] sm:$0xff] %v548
                  %v550 = vld [vmem:[%s490 + $0xe8] sm:$0xff]
                  %551 = vst [vmem:[%s491 + $0xe8] sm:$0xff] %v550
                  %v552 = vld [vmem:[%s490 + $0xf0] sm:$0xff]
                  %553 = vst [vmem:[%s491 + $0xf0] sm:$0xff] %v552
                  %v554 = vld [vmem:[%s490 + $0xf8] sm:$0xff]
                  %555 = vst [vmem:[%s491 + $0xf8] sm:$0xff] %v554
                  %v556 = vld [vmem:[%s490 + $0x200] sm:$0xff]
                  %557 = vst [vmem:[%s491 + $0x100] sm:$0xff] %v556
                  %v558 = vld [vmem:[%s490 + $0x208] sm:$0xff]
                  %559 = vst [vmem:[%s491 + $0x108] sm:$0xff] %v558
                  %v560 = vld [vmem:[%s490 + $0x210] sm:$0xff]
                  %561 = vst [vmem:[%s491 + $0x110] sm:$0xff] %v560
                  %v562 = vld [vmem:[%s490 + $0x218] sm:$0xff]
                  %563 = vst [vmem:[%s491 + $0x118] sm:$0xff] %v562
                  %v564 = vld [vmem:[%s490 + $0x220] sm:$0xff]
                  %565 = vst [vmem:[%s491 + $0x120] sm:$0xff] %v564
                  %v566 = vld [vmem:[%s490 + $0x228] sm:$0xff]
                  %567 = vst [vmem:[%s491 + $0x128] sm:$0xff] %v566
                  %v568 = vld [vmem:[%s490 + $0x230] sm:$0xff]
                  %569 = vst [vmem:[%s491 + $0x130] sm:$0xff] %v568
                  %v570 = vld [vmem:[%s490 + $0x238] sm:$0xff]
                  %571 = vst [vmem:[%s491 + $0x138] sm:$0xff] %v570
                  %v572 = vld [vmem:[%s490 + $0x240] sm:$0xff]
                  %573 = vst [vmem:[%s491 + $0x140] sm:$0xff] %v572
                  %v574 = vld [vmem:[%s490 + $0x248] sm:$0xff]
                  %575 = vst [vmem:[%s491 + $0x148] sm:$0xff] %v574
                  %v576 = vld [vmem:[%s490 + $0x250] sm:$0xff]
                  %577 = vst [vmem:[%s491 + $0x150] sm:$0xff] %v576
                  %v578 = vld [vmem:[%s490 + $0x258] sm:$0xff]
                  %579 = vst [vmem:[%s491 + $0x158] sm:$0xff] %v578
                  %v580 = vld [vmem:[%s490 + $0x260] sm:$0xff]
                  %581 = vst [vmem:[%s491 + $0x160] sm:$0xff] %v580
                  %v582 = vld [vmem:[%s490 + $0x268] sm:$0xff]
                  %583 = vst [vmem:[%s491 + $0x168] sm:$0xff] %v582
                  %v584 = vld [vmem:[%s490 + $0x270] sm:$0xff]
                  %585 = vst [vmem:[%s491 + $0x170] sm:$0xff] %v584
                  %v586 = vld [vmem:[%s490 + $0x278] sm:$0xff]
                  %587 = vst [vmem:[%s491 + $0x178] sm:$0xff] %v586
                  %v588 = vld [vmem:[%s490 + $0x280] sm:$0xff]
                  %589 = vst [vmem:[%s491 + $0x180] sm:$0xff] %v588
                  %v590 = vld [vmem:[%s490 + $0x288] sm:$0xff]
                  %591 = vst [vmem:[%s491 + $0x188] sm:$0xff] %v590
                  %v592 = vld [vmem:[%s490 + $0x290] sm:$0xff]
                  %593 = vst [vmem:[%s491 + $0x190] sm:$0xff] %v592
                  %v594 = vld [vmem:[%s490 + $0x298] sm:$0xff]
                  %595 = vst [vmem:[%s491 + $0x198] sm:$0xff] %v594
                  %v596 = vld [vmem:[%s490 + $0x2a0] sm:$0xff]
                  %597 = vst [vmem:[%s491 + $0x1a0] sm:$0xff] %v596
                  %v598 = vld [vmem:[%s490 + $0x2a8] sm:$0xff]
                  %599 = vst [vmem:[%s491 + $0x1a8] sm:$0xff] %v598
                  %v600 = vld [vmem:[%s490 + $0x2b0] sm:$0xff]
                  %601 = vst [vmem:[%s491 + $0x1b0] sm:$0xff] %v600
                  %v602 = vld [vmem:[%s490 + $0x2b8] sm:$0xff]
                  %603 = vst [vmem:[%s491 + $0x1b8] sm:$0xff] %v602
                  %v604 = vld [vmem:[%s490 + $0x2c0] sm:$0xff]
                  %605 = vst [vmem:[%s491 + $0x1c0] sm:$0xff] %v604
                  %v606 = vld [vmem:[%s490 + $0x2c8] sm:$0xff]
                  %607 = vst [vmem:[%s491 + $0x1c8] sm:$0xff] %v606
                  %v608 = vld [vmem:[%s490 + $0x2d0] sm:$0xff]
                  %609 = vst [vmem:[%s491 + $0x1d0] sm:$0xff] %v608
                  %v610 = vld [vmem:[%s490 + $0x2d8] sm:$0xff]
                  %611 = vst [vmem:[%s491 + $0x1d8] sm:$0xff] %v610
                  %v612 = vld [vmem:[%s490 + $0x2e0] sm:$0xff]
                  %613 = vst [vmem:[%s491 + $0x1e0] sm:$0xff] %v612
                  %v614 = vld [vmem:[%s490 + $0x2e8] sm:$0xff]
                  %615 = vst [vmem:[%s491 + $0x1e8] sm:$0xff] %v614
                  %v616 = vld [vmem:[%s490 + $0x2f0] sm:$0xff]
                  %617 = vst [vmem:[%s491 + $0x1f0] sm:$0xff] %v616
                  %v618 = vld [vmem:[%s490 + $0x2f8] sm:$0xff]
                  %619 = vst [vmem:[%s491 + $0x1f8] sm:$0xff] %v618
                  %v620 = vld [vmem:[%s490 + $0x400] sm:$0xff]
                  %621 = vst [vmem:[%s491 + $0x200] sm:$0xff] %v620
                  %v622 = vld [vmem:[%s490 + $0x408] sm:$0xff]
                  %623 = vst [vmem:[%s491 + $0x208] sm:$0xff] %v622
                  %v624 = vld [vmem:[%s490 + $0x410] sm:$0xff]
                  %625 = vst [vmem:[%s491 + $0x210] sm:$0xff] %v624
                  %v626 = vld [vmem:[%s490 + $0x418] sm:$0xff]
                  %627 = vst [vmem:[%s491 + $0x218] sm:$0xff] %v626
                  %v628 = vld [vmem:[%s490 + $0x420] sm:$0xff]
                  %629 = vst [vmem:[%s491 + $0x220] sm:$0xff] %v628
                  %v630 = vld [vmem:[%s490 + $0x428] sm:$0xff]
                  %631 = vst [vmem:[%s491 + $0x228] sm:$0xff] %v630
                  %v632 = vld [vmem:[%s490 + $0x430] sm:$0xff]
                  %633 = vst [vmem:[%s491 + $0x230] sm:$0xff] %v632
                  %v634 = vld [vmem:[%s490 + $0x438] sm:$0xff]
                  %635 = vst [vmem:[%s491 + $0x238] sm:$0xff] %v634
                  %v636 = vld [vmem:[%s490 + $0x440] sm:$0xff]
                  %637 = vst [vmem:[%s491 + $0x240] sm:$0xff] %v636
                  %v638 = vld [vmem:[%s490 + $0x448] sm:$0xff]
                  %639 = vst [vmem:[%s491 + $0x248] sm:$0xff] %v638
                  %v640 = vld [vmem:[%s490 + $0x450] sm:$0xff]
                  %641 = vst [vmem:[%s491 + $0x250] sm:$0xff] %v640
                  %v642 = vld [vmem:[%s490 + $0x458] sm:$0xff]
                  %643 = vst [vmem:[%s491 + $0x258] sm:$0xff] %v642
                  %v644 = vld [vmem:[%s490 + $0x460] sm:$0xff]
                  %645 = vst [vmem:[%s491 + $0x260] sm:$0xff] %v644
                  %v646 = vld [vmem:[%s490 + $0x468] sm:$0xff]
                  %647 = vst [vmem:[%s491 + $0x268] sm:$0xff] %v646
                  %v648 = vld [vmem:[%s490 + $0x470] sm:$0xff]
                  %649 = vst [vmem:[%s491 + $0x270] sm:$0xff] %v648
                  %v650 = vld [vmem:[%s490 + $0x478] sm:$0xff]
                  %651 = vst [vmem:[%s491 + $0x278] sm:$0xff] %v650
                  %v652 = vld [vmem:[%s490 + $0x480] sm:$0xff]
                  %653 = vst [vmem:[%s491 + $0x280] sm:$0xff] %v652
                  %v654 = vld [vmem:[%s490 + $0x488] sm:$0xff]
                  %655 = vst [vmem:[%s491 + $0x288] sm:$0xff] %v654
                  %v656 = vld [vmem:[%s490 + $0x490] sm:$0xff]
                  %657 = vst [vmem:[%s491 + $0x290] sm:$0xff] %v656
                  %v658 = vld [vmem:[%s490 + $0x498] sm:$0xff]
                  %659 = vst [vmem:[%s491 + $0x298] sm:$0xff] %v658
                  %v660 = vld [vmem:[%s490 + $0x4a0] sm:$0xff]
                  %661 = vst [vmem:[%s491 + $0x2a0] sm:$0xff] %v660
                  %v662 = vld [vmem:[%s490 + $0x4a8] sm:$0xff]
                  %663 = vst [vmem:[%s491 + $0x2a8] sm:$0xff] %v662
                  %v664 = vld [vmem:[%s490 + $0x4b0] sm:$0xff]
                  %665 = vst [vmem:[%s491 + $0x2b0] sm:$0xff] %v664
                  %v666 = vld [vmem:[%s490 + $0x4b8] sm:$0xff]
                  %667 = vst [vmem:[%s491 + $0x2b8] sm:$0xff] %v666
                  %v668 = vld [vmem:[%s490 + $0x4c0] sm:$0xff]
                  %669 = vst [vmem:[%s491 + $0x2c0] sm:$0xff] %v668
                  %v670 = vld [vmem:[%s490 + $0x4c8] sm:$0xff]
                  %671 = vst [vmem:[%s491 + $0x2c8] sm:$0xff] %v670
                  %v672 = vld [vmem:[%s490 + $0x4d0] sm:$0xff]
                  %673 = vst [vmem:[%s491 + $0x2d0] sm:$0xff] %v672
                  %v674 = vld [vmem:[%s490 + $0x4d8] sm:$0xff]
                  %675 = vst [vmem:[%s491 + $0x2d8] sm:$0xff] %v674
                  %v676 = vld [vmem:[%s490 + $0x4e0] sm:$0xff]
                  %677 = vst [vmem:[%s491 + $0x2e0] sm:$0xff] %v676
                  %v678 = vld [vmem:[%s490 + $0x4e8] sm:$0xff]
                  %679 = vst [vmem:[%s491 + $0x2e8] sm:$0xff] %v678
                  %v680 = vld [vmem:[%s490 + $0x4f0] sm:$0xff]
                  %681 = vst [vmem:[%s491 + $0x2f0] sm:$0xff] %v680
                  %v682 = vld [vmem:[%s490 + $0x4f8] sm:$0xff]
                  %683 = vst [vmem:[%s491 + $0x2f8] sm:$0xff] %v682
                $region76: #{gated_equivariant_block.1} parent=70 // loop_footer
                  %s489 = sadd.s32 1, %s485
                $region77: #{gated_equivariant_block.1} parent=70 // loop_footer_branch
                  %484 = sbr.rel target = $region73
                $region78: #{gated_equivariant_block.1} parent=70 // loop_exit
                  _
              $region71: #{gated_equivariant_block.1} parent=55 // pred_fallthru
                _
              // Predicated region
              $region79: #{gated_equivariant_block.1} parent=55 // pred_check
                _
              $region80: #{gated_equivariant_block.1} parent=55 // pred_check_branch
                %685 = sbr.rel target = $region82
              $region81: #{gated_equivariant_block.1} parent=55 // pred_region
                _
              $region82: #{gated_equivariant_block.1} parent=55 // pred_fallthru
                _
            $region56: #{gated_equivariant_block.1} parent=51 // pred_fallthru
              _
            // Predicated region
            $region57: #{gated_equivariant_block.1} parent=51 // pred_check
              _
            $region58: #{gated_equivariant_block.1} parent=51 // pred_check_branch
              %279 = sbr.rel target = $region60
            $region59: #{gated_equivariant_block.1} parent=51 // pred_region
              %s281 = ssub.s32 256, 1
              loop: start=0, step=1, limit=1
              $region61: #{gated_equivariant_block.1} parent=59 // loop_pre_header
                _
              $region62: #{gated_equivariant_block.1} parent=59 // loop_header
                %s283 = sphi 0, %s287
                %p284 = scmp.ge.s32.totalorder %s283, 1
                %s288 = sphi %s273, %s273
                %s289 = sphi %s270, %s270
              $region63: #{gated_equivariant_block.1} parent=59 // loop_header_branch
                %286 = sbr.rel (%p284) target = $region67
              $region64: #{gated_equivariant_block.1} parent=59 // loop_body
                %v290 = vld [vmem:[%s288] sm:%s281]
                %291 = vst [vmem:[%s289] sm:%s281] %v290
                %v292 = vld [vmem:[%s288 + $0x8] sm:%s281]
                %293 = vst [vmem:[%s289 + $0x8] sm:%s281] %v292
                %v294 = vld [vmem:[%s288 + $0x10] sm:%s281]
                %295 = vst [vmem:[%s289 + $0x10] sm:%s281] %v294
                %v296 = vld [vmem:[%s288 + $0x18] sm:%s281]
                %297 = vst [vmem:[%s289 + $0x18] sm:%s281] %v296
                %v298 = vld [vmem:[%s288 + $0x20] sm:%s281]
                %299 = vst [vmem:[%s289 + $0x20] sm:%s281] %v298
                %v300 = vld [vmem:[%s288 + $0x28] sm:%s281]
                %301 = vst [vmem:[%s289 + $0x28] sm:%s281] %v300
                %v302 = vld [vmem:[%s288 + $0x30] sm:%s281]
                %303 = vst [vmem:[%s289 + $0x30] sm:%s281] %v302
                %v304 = vld [vmem:[%s288 + $0x38] sm:%s281]
                %305 = vst [vmem:[%s289 + $0x38] sm:%s281] %v304
                %v306 = vld [vmem:[%s288 + $0x40] sm:%s281]
                %307 = vst [vmem:[%s289 + $0x40] sm:%s281] %v306
                %v308 = vld [vmem:[%s288 + $0x48] sm:%s281]
                %309 = vst [vmem:[%s289 + $0x48] sm:%s281] %v308
                %v310 = vld [vmem:[%s288 + $0x50] sm:%s281]
                %311 = vst [vmem:[%s289 + $0x50] sm:%s281] %v310
                %v312 = vld [vmem:[%s288 + $0x58] sm:%s281]
                %313 = vst [vmem:[%s289 + $0x58] sm:%s281] %v312
                %v314 = vld [vmem:[%s288 + $0x60] sm:%s281]
                %315 = vst [vmem:[%s289 + $0x60] sm:%s281] %v314
                %v316 = vld [vmem:[%s288 + $0x68] sm:%s281]
                %317 = vst [vmem:[%s289 + $0x68] sm:%s281] %v316
                %v318 = vld [vmem:[%s288 + $0x70] sm:%s281]
                %319 = vst [vmem:[%s289 + $0x70] sm:%s281] %v318
                %v320 = vld [vmem:[%s288 + $0x78] sm:%s281]
                %321 = vst [vmem:[%s289 + $0x78] sm:%s281] %v320
                %v322 = vld [vmem:[%s288 + $0x80] sm:%s281]
                %323 = vst [vmem:[%s289 + $0x80] sm:%s281] %v322
                %v324 = vld [vmem:[%s288 + $0x88] sm:%s281]
                %325 = vst [vmem:[%s289 + $0x88] sm:%s281] %v324
                %v326 = vld [vmem:[%s288 + $0x90] sm:%s281]
                %327 = vst [vmem:[%s289 + $0x90] sm:%s281] %v326
                %v328 = vld [vmem:[%s288 + $0x98] sm:%s281]
                %329 = vst [vmem:[%s289 + $0x98] sm:%s281] %v328
                %v330 = vld [vmem:[%s288 + $0xa0] sm:%s281]
                %331 = vst [vmem:[%s289 + $0xa0] sm:%s281] %v330
                %v332 = vld [vmem:[%s288 + $0xa8] sm:%s281]
                %333 = vst [vmem:[%s289 + $0xa8] sm:%s281] %v332
                %v334 = vld [vmem:[%s288 + $0xb0] sm:%s281]
                %335 = vst [vmem:[%s289 + $0xb0] sm:%s281] %v334
                %v336 = vld [vmem:[%s288 + $0xb8] sm:%s281]
                %337 = vst [vmem:[%s289 + $0xb8] sm:%s281] %v336
                %v338 = vld [vmem:[%s288 + $0xc0] sm:%s281]
                %339 = vst [vmem:[%s289 + $0xc0] sm:%s281] %v338
                %v340 = vld [vmem:[%s288 + $0xc8] sm:%s281]
                %341 = vst [vmem:[%s289 + $0xc8] sm:%s281] %v340
                %v342 = vld [vmem:[%s288 + $0xd0] sm:%s281]
                %343 = vst [vmem:[%s289 + $0xd0] sm:%s281] %v342
                %v344 = vld [vmem:[%s288 + $0xd8] sm:%s281]
                %345 = vst [vmem:[%s289 + $0xd8] sm:%s281] %v344
                %v346 = vld [vmem:[%s288 + $0xe0] sm:%s281]
                %347 = vst [vmem:[%s289 + $0xe0] sm:%s281] %v346
                %v348 = vld [vmem:[%s288 + $0xe8] sm:%s281]
                %349 = vst [vmem:[%s289 + $0xe8] sm:%s281] %v348
                %v350 = vld [vmem:[%s288 + $0xf0] sm:%s281]
                %351 = vst [vmem:[%s289 + $0xf0] sm:%s281] %v350
                %v352 = vld [vmem:[%s288 + $0xf8] sm:%s281]
                %353 = vst [vmem:[%s289 + $0xf8] sm:%s281] %v352
                %v354 = vld [vmem:[%s288 + $0x200] sm:%s281]
                %355 = vst [vmem:[%s289 + $0x100] sm:%s281] %v354
                %v356 = vld [vmem:[%s288 + $0x208] sm:%s281]
                %357 = vst [vmem:[%s289 + $0x108] sm:%s281] %v356
                %v358 = vld [vmem:[%s288 + $0x210] sm:%s281]
                %359 = vst [vmem:[%s289 + $0x110] sm:%s281] %v358
                %v360 = vld [vmem:[%s288 + $0x218] sm:%s281]
                %361 = vst [vmem:[%s289 + $0x118] sm:%s281] %v360
                %v362 = vld [vmem:[%s288 + $0x220] sm:%s281]
                %363 = vst [vmem:[%s289 + $0x120] sm:%s281] %v362
                %v364 = vld [vmem:[%s288 + $0x228] sm:%s281]
                %365 = vst [vmem:[%s289 + $0x128] sm:%s281] %v364
                %v366 = vld [vmem:[%s288 + $0x230] sm:%s281]
                %367 = vst [vmem:[%s289 + $0x130] sm:%s281] %v366
                %v368 = vld [vmem:[%s288 + $0x238] sm:%s281]
                %369 = vst [vmem:[%s289 + $0x138] sm:%s281] %v368
                %v370 = vld [vmem:[%s288 + $0x240] sm:%s281]
                %371 = vst [vmem:[%s289 + $0x140] sm:%s281] %v370
                %v372 = vld [vmem:[%s288 + $0x248] sm:%s281]
                %373 = vst [vmem:[%s289 + $0x148] sm:%s281] %v372
                %v374 = vld [vmem:[%s288 + $0x250] sm:%s281]
                %375 = vst [vmem:[%s289 + $0x150] sm:%s281] %v374
                %v376 = vld [vmem:[%s288 + $0x258] sm:%s281]
                %377 = vst [vmem:[%s289 + $0x158] sm:%s281] %v376
                %v378 = vld [vmem:[%s288 + $0x260] sm:%s281]
                %379 = vst [vmem:[%s289 + $0x160] sm:%s281] %v378
                %v380 = vld [vmem:[%s288 + $0x268] sm:%s281]
                %381 = vst [vmem:[%s289 + $0x168] sm:%s281] %v380
                %v382 = vld [vmem:[%s288 + $0x270] sm:%s281]
                %383 = vst [vmem:[%s289 + $0x170] sm:%s281] %v382
                %v384 = vld [vmem:[%s288 + $0x278] sm:%s281]
                %385 = vst [vmem:[%s289 + $0x178] sm:%s281] %v384
                %v386 = vld [vmem:[%s288 + $0x280] sm:%s281]
                %387 = vst [vmem:[%s289 + $0x180] sm:%s281] %v386
                %v388 = vld [vmem:[%s288 + $0x288] sm:%s281]
                %389 = vst [vmem:[%s289 + $0x188] sm:%s281] %v388
                %v390 = vld [vmem:[%s288 + $0x290] sm:%s281]
                %391 = vst [vmem:[%s289 + $0x190] sm:%s281] %v390
                %v392 = vld [vmem:[%s288 + $0x298] sm:%s281]
                %393 = vst [vmem:[%s289 + $0x198] sm:%s281] %v392
                %v394 = vld [vmem:[%s288 + $0x2a0] sm:%s281]
                %395 = vst [vmem:[%s289 + $0x1a0] sm:%s281] %v394
                %v396 = vld [vmem:[%s288 + $0x2a8] sm:%s281]
                %397 = vst [vmem:[%s289 + $0x1a8] sm:%s281] %v396
                %v398 = vld [vmem:[%s288 + $0x2b0] sm:%s281]
                %399 = vst [vmem:[%s289 + $0x1b0] sm:%s281] %v398
                %v400 = vld [vmem:[%s288 + $0x2b8] sm:%s281]
                %401 = vst [vmem:[%s289 + $0x1b8] sm:%s281] %v400
                %v402 = vld [vmem:[%s288 + $0x2c0] sm:%s281]
                %403 = vst [vmem:[%s289 + $0x1c0] sm:%s281] %v402
                %v404 = vld [vmem:[%s288 + $0x2c8] sm:%s281]
                %405 = vst [vmem:[%s289 + $0x1c8] sm:%s281] %v404
                %v406 = vld [vmem:[%s288 + $0x2d0] sm:%s281]
                %407 = vst [vmem:[%s289 + $0x1d0] sm:%s281] %v406
                %v408 = vld [vmem:[%s288 + $0x2d8] sm:%s281]
                %409 = vst [vmem:[%s289 + $0x1d8] sm:%s281] %v408
                %v410 = vld [vmem:[%s288 + $0x2e0] sm:%s281]
                %411 = vst [vmem:[%s289 + $0x1e0] sm:%s281] %v410
                %v412 = vld [vmem:[%s288 + $0x2e8] sm:%s281]
                %413 = vst [vmem:[%s289 + $0x1e8] sm:%s281] %v412
                %v414 = vld [vmem:[%s288 + $0x2f0] sm:%s281]
                %415 = vst [vmem:[%s289 + $0x1f0] sm:%s281] %v414
                %v416 = vld [vmem:[%s288 + $0x2f8] sm:%s281]
                %417 = vst [vmem:[%s289 + $0x1f8] sm:%s281] %v416
                %v418 = vld [vmem:[%s288 + $0x400] sm:%s281]
                %419 = vst [vmem:[%s289 + $0x200] sm:%s281] %v418
                %v420 = vld [vmem:[%s288 + $0x408] sm:%s281]
                %421 = vst [vmem:[%s289 + $0x208] sm:%s281] %v420
                %v422 = vld [vmem:[%s288 + $0x410] sm:%s281]
                %423 = vst [vmem:[%s289 + $0x210] sm:%s281] %v422
                %v424 = vld [vmem:[%s288 + $0x418] sm:%s281]
                %425 = vst [vmem:[%s289 + $0x218] sm:%s281] %v424
                %v426 = vld [vmem:[%s288 + $0x420] sm:%s281]
                %427 = vst [vmem:[%s289 + $0x220] sm:%s281] %v426
                %v428 = vld [vmem:[%s288 + $0x428] sm:%s281]
                %429 = vst [vmem:[%s289 + $0x228] sm:%s281] %v428
                %v430 = vld [vmem:[%s288 + $0x430] sm:%s281]
                %431 = vst [vmem:[%s289 + $0x230] sm:%s281] %v430
                %v432 = vld [vmem:[%s288 + $0x438] sm:%s281]
                %433 = vst [vmem:[%s289 + $0x238] sm:%s281] %v432
                %v434 = vld [vmem:[%s288 + $0x440] sm:%s281]
                %435 = vst [vmem:[%s289 + $0x240] sm:%s281] %v434
                %v436 = vld [vmem:[%s288 + $0x448] sm:%s281]
                %437 = vst [vmem:[%s289 + $0x248] sm:%s281] %v436
                %v438 = vld [vmem:[%s288 + $0x450] sm:%s281]
                %439 = vst [vmem:[%s289 + $0x250] sm:%s281] %v438
                %v440 = vld [vmem:[%s288 + $0x458] sm:%s281]
                %441 = vst [vmem:[%s289 + $0x258] sm:%s281] %v440
                %v442 = vld [vmem:[%s288 + $0x460] sm:%s281]
                %443 = vst [vmem:[%s289 + $0x260] sm:%s281] %v442
                %v444 = vld [vmem:[%s288 + $0x468] sm:%s281]
                %445 = vst [vmem:[%s289 + $0x268] sm:%s281] %v444
                %v446 = vld [vmem:[%s288 + $0x470] sm:%s281]
                %447 = vst [vmem:[%s289 + $0x270] sm:%s281] %v446
                %v448 = vld [vmem:[%s288 + $0x478] sm:%s281]
                %449 = vst [vmem:[%s289 + $0x278] sm:%s281] %v448
                %v450 = vld [vmem:[%s288 + $0x480] sm:%s281]
                %451 = vst [vmem:[%s289 + $0x280] sm:%s281] %v450
                %v452 = vld [vmem:[%s288 + $0x488] sm:%s281]
                %453 = vst [vmem:[%s289 + $0x288] sm:%s281] %v452
                %v454 = vld [vmem:[%s288 + $0x490] sm:%s281]
                %455 = vst [vmem:[%s289 + $0x290] sm:%s281] %v454
                %v456 = vld [vmem:[%s288 + $0x498] sm:%s281]
                %457 = vst [vmem:[%s289 + $0x298] sm:%s281] %v456
                %v458 = vld [vmem:[%s288 + $0x4a0] sm:%s281]
                %459 = vst [vmem:[%s289 + $0x2a0] sm:%s281] %v458
                %v460 = vld [vmem:[%s288 + $0x4a8] sm:%s281]
                %461 = vst [vmem:[%s289 + $0x2a8] sm:%s281] %v460
                %v462 = vld [vmem:[%s288 + $0x4b0] sm:%s281]
                %463 = vst [vmem:[%s289 + $0x2b0] sm:%s281] %v462
                %v464 = vld [vmem:[%s288 + $0x4b8] sm:%s281]
                %465 = vst [vmem:[%s289 + $0x2b8] sm:%s281] %v464
                %v466 = vld [vmem:[%s288 + $0x4c0] sm:%s281]
                %467 = vst [vmem:[%s289 + $0x2c0] sm:%s281] %v466
                %v468 = vld [vmem:[%s288 + $0x4c8] sm:%s281]
                %469 = vst [vmem:[%s289 + $0x2c8] sm:%s281] %v468
                %v470 = vld [vmem:[%s288 + $0x4d0] sm:%s281]
                %471 = vst [vmem:[%s289 + $0x2d0] sm:%s281] %v470
                %v472 = vld [vmem:[%s288 + $0x4d8] sm:%s281]
                %473 = vst [vmem:[%s289 + $0x2d8] sm:%s281] %v472
                %v474 = vld [vmem:[%s288 + $0x4e0] sm:%s281]
                %475 = vst [vmem:[%s289 + $0x2e0] sm:%s281] %v474
                %v476 = vld [vmem:[%s288 + $0x4e8] sm:%s281]
                %477 = vst [vmem:[%s289 + $0x2e8] sm:%s281] %v476
                %v478 = vld [vmem:[%s288 + $0x4f0] sm:%s281]
                %479 = vst [vmem:[%s289 + $0x2f0] sm:%s281] %v478
                %v480 = vld [vmem:[%s288 + $0x4f8] sm:%s281]
                %481 = vst [vmem:[%s289 + $0x2f8] sm:%s281] %v480
              $region65: #{gated_equivariant_block.1} parent=59 // loop_footer
                %s287 = sadd.s32 1, %s283
              $region66: #{gated_equivariant_block.1} parent=59 // loop_footer_branch
                %282 = sbr.rel target = $region62
              $region67: #{gated_equivariant_block.1} parent=59 // loop_exit
                _
            $region60: #{gated_equivariant_block.1} parent=51 // pred_fallthru
              _
          $region52: #{gated_equivariant_block.1} parent=47 // pred_fallthru
            _
          %686 = vnop
        $region48: #{gated_equivariant_block.1} parent=39 // pred_fallthru
          _
      $region40: #{gated_equivariant_block.1} parent=5 // pred_fallthru
        _
      %p687 = scmp.le.s32.totalorder 1, %s14
      %p688 = scmp.lt.s32.totalorder %s14, 3
      %p689 = pnand %p687, %p688
      %p690 = pneg %p689
      // Predicated region
      $region83: #{gated_equivariant_block.1} parent=5 // pred_check
        _
      $region84: #{gated_equivariant_block.1} parent=5 // pred_check_branch
        %692 = sbr.rel (%p689) target = $region86
      $region85: #{gated_equivariant_block.1} parent=5 // pred_region
        %s693 = ssub.s32 %s14, 1
        %s694 = sand.u32 %s53, 1
        %s695 = sand.u32 %s53, 1
        %s696 = smul.addr %s695, 768
        %s697 = scalar_lea.vmem [#allocation2], %s696
        // Predicated region
        $region87: #{gated_equivariant_block.1} parent=85 // pred_check
          %p698 = pneg %p66
        $region88: #{gated_equivariant_block.1} parent=85 // pred_check_branch
          %700 = sbr.rel (%p698) target = $region90
        $region89: #{gated_equivariant_block.1} parent=85 // pred_region
          _
        $region90: #{gated_equivariant_block.1} parent=85 // pred_fallthru
          _
        %s701 = smul.u32 32, %s19
        %p702 = scmp.lt.s32.totalorder %s701, 63
        %s703 = scalar_select %p702, %s701, 63
        %s704 = smul.addr %s703, 8
        %s705 = scalar_lea.vmem %s0, %s704
        %p706 = pneg %p40
        %p707 = pneg %p37
        %s708 = sand.u32 %s53, 1
        %s709 = sand.u32 %s53, 1
        %s710 = smul.addr %s709, 768
        %s711 = scalar_lea.vmem [#allocation2], %s710
        %p712 = pneg %p66
        %p713 = pneg %p63
        %p714 = pneg %p87
        %p715 = pneg %p84
        %p716 = pneg %p108
        %p717 = pneg %p105
        %p718 = pneg %p129
        %p719 = pneg %p126
        %p720 = pneg %p150
        %p721 = pneg %p147
        %p722 = pneg %p171
        %p723 = pneg %p168
        %p724 = pneg %p192
        %p725 = pneg %p189
        %p726 = pneg %p218
        %p727 = pneg %p215
        %s728 = smul.u32 32, %s19
        %p729 = scmp.lt.s32.totalorder %s728, 63
        %s730 = scalar_select %p729, %s728, 63
        %s731 = smul.addr %s730, 2
        %s732 = smul.addr %s731, 8
        %s733 = scalar_lea.vmem %s8, %s732
        %s734 = smul.u32 32, %s19
        %p735 = scmp.lt.s32.totalorder %s734, 63
        %s736 = scalar_select %p735, %s734, 63
        %s737 = smul.addr %s736, 8
        %s738 = scalar_lea.vmem %s0, %s737
        %s739 = smul.u32 32, %s19
        %s740 = smul.u32 32, %s19
        %s741 = smul.u32 32, %s19
        %p742 = scmp.lt.s32.totalorder %s741, 63
        %s743 = scalar_select %p742, %s741, 63
        %s744 = smul.addr %s743, 2
        %s745 = smul.addr %s744, 8
        %s746 = scalar_lea.vmem %s8, %s745
        %s747 = smul.u32 32, %s19
        %v749 = vld [vmem:[%s697] sm:$0xff]
        %v750 = vld [vmem:[%s697 + $0x8] sm:$0xff]
        %v751 = vld [vmem:[%s697 + $0x10] sm:$0xff]
        %v752 = vld [vmem:[%s697 + $0x18] sm:$0xff]
        %v753 = vld [vmem:[%s697 + $0x20] sm:$0xff]
        %v754 = vld [vmem:[%s697 + $0x28] sm:$0xff]
        %v755 = vld [vmem:[%s697 + $0x30] sm:$0xff]
        %v756 = vld [vmem:[%s697 + $0x38] sm:$0xff]
        %v757 = vld [vmem:[%s697 + $0x40] sm:$0xff]
        %v758 = vld [vmem:[%s697 + $0x48] sm:$0xff]
        %v759 = vld [vmem:[%s697 + $0x50] sm:$0xff]
        %v760 = vld [vmem:[%s697 + $0x58] sm:$0xff]
        %v761 = vld [vmem:[%s697 + $0x60] sm:$0xff]
        %v762 = vld [vmem:[%s697 + $0x68] sm:$0xff]
        %v763 = vld [vmem:[%s697 + $0x70] sm:$0xff]
        %v764 = vld [vmem:[%s697 + $0x78] sm:$0xff]
        %v765 = vld [vmem:[%s697 + $0x80] sm:$0xff]
        %v766 = vld [vmem:[%s697 + $0x88] sm:$0xff]
        %v767 = vld [vmem:[%s697 + $0x90] sm:$0xff]
        %v768 = vld [vmem:[%s697 + $0x98] sm:$0xff]
        %v769 = vld [vmem:[%s697 + $0xa0] sm:$0xff]
        %v770 = vld [vmem:[%s697 + $0xa8] sm:$0xff]
        %v771 = vld [vmem:[%s697 + $0xb0] sm:$0xff]
        %v772 = vld [vmem:[%s697 + $0xb8] sm:$0xff]
        %v773 = vld [vmem:[%s697 + $0xc0] sm:$0xff]
        %v774 = vld [vmem:[%s697 + $0xc8] sm:$0xff]
        %v775 = vld [vmem:[%s697 + $0xd0] sm:$0xff]
        %v776 = vld [vmem:[%s697 + $0xd8] sm:$0xff]
        %v777 = vld [vmem:[%s697 + $0xe0] sm:$0xff]
        %v778 = vld [vmem:[%s697 + $0xe8] sm:$0xff]
        %v779 = vld [vmem:[%s697 + $0xf0] sm:$0xff]
        %v780 = vld [vmem:[%s697 + $0xf8] sm:$0xff]
        %v781 = vld [vmem:[%s697 + $0x100] sm:$0xff]
        %v782 = vld [vmem:[%s697 + $0x108] sm:$0xff]
        %v783 = vld [vmem:[%s697 + $0x110] sm:$0xff]
        %v784 = vld [vmem:[%s697 + $0x118] sm:$0xff]
        %v785 = vld [vmem:[%s697 + $0x120] sm:$0xff]
        %v786 = vld [vmem:[%s697 + $0x128] sm:$0xff]
        %v787 = vld [vmem:[%s697 + $0x130] sm:$0xff]
        %v788 = vld [vmem:[%s697 + $0x138] sm:$0xff]
        %v789 = vld [vmem:[%s697 + $0x140] sm:$0xff]
        %v790 = vld [vmem:[%s697 + $0x148] sm:$0xff]
        %v791 = vld [vmem:[%s697 + $0x150] sm:$0xff]
        %v792 = vld [vmem:[%s697 + $0x158] sm:$0xff]
        %v793 = vld [vmem:[%s697 + $0x160] sm:$0xff]
        %v794 = vld [vmem:[%s697 + $0x168] sm:$0xff]
        %v795 = vld [vmem:[%s697 + $0x170] sm:$0xff]
        %v796 = vld [vmem:[%s697 + $0x178] sm:$0xff]
        %v797 = vld [vmem:[%s697 + $0x180] sm:$0xff]
        %v798 = vld [vmem:[%s697 + $0x188] sm:$0xff]
        %v799 = vld [vmem:[%s697 + $0x190] sm:$0xff]
        %v800 = vld [vmem:[%s697 + $0x198] sm:$0xff]
        %v801 = vld [vmem:[%s697 + $0x1a0] sm:$0xff]
        %v802 = vld [vmem:[%s697 + $0x1a8] sm:$0xff]
        %v803 = vld [vmem:[%s697 + $0x1b0] sm:$0xff]
        %v804 = vld [vmem:[%s697 + $0x1b8] sm:$0xff]
        %v805 = vld [vmem:[%s697 + $0x1c0] sm:$0xff]
        %v806 = vld [vmem:[%s697 + $0x1c8] sm:$0xff]
        %v807 = vld [vmem:[%s697 + $0x1d0] sm:$0xff]
        %v808 = vld [vmem:[%s697 + $0x1d8] sm:$0xff]
        %v809 = vld [vmem:[%s697 + $0x1e0] sm:$0xff]
        %v810 = vld [vmem:[%s697 + $0x1e8] sm:$0xff]
        %v811 = vld [vmem:[%s697 + $0x1f0] sm:$0xff]
        %v812 = vld [vmem:[%s697 + $0x1f8] sm:$0xff]
        %v813 = vld [vmem:[%s697 + $0x200] sm:$0xff]
        %v814 = vld [vmem:[%s697 + $0x208] sm:$0xff]
        %v815 = vld [vmem:[%s697 + $0x210] sm:$0xff]
        %v816 = vld [vmem:[%s697 + $0x218] sm:$0xff]
        %v817 = vld [vmem:[%s697 + $0x220] sm:$0xff]
        %v818 = vld [vmem:[%s697 + $0x228] sm:$0xff]
        %v819 = vld [vmem:[%s697 + $0x230] sm:$0xff]
        %v820 = vld [vmem:[%s697 + $0x238] sm:$0xff]
        %v821 = vld [vmem:[%s697 + $0x240] sm:$0xff]
        %v822 = vld [vmem:[%s697 + $0x248] sm:$0xff]
        %v823 = vld [vmem:[%s697 + $0x250] sm:$0xff]
        %v824 = vld [vmem:[%s697 + $0x258] sm:$0xff]
        %v825 = vld [vmem:[%s697 + $0x260] sm:$0xff]
        %v826 = vld [vmem:[%s697 + $0x268] sm:$0xff]
        %v827 = vld [vmem:[%s697 + $0x270] sm:$0xff]
        %v828 = vld [vmem:[%s697 + $0x278] sm:$0xff]
        %v829 = vld [vmem:[%s697 + $0x280] sm:$0xff]
        %v830 = vld [vmem:[%s697 + $0x288] sm:$0xff]
        %v831 = vld [vmem:[%s697 + $0x290] sm:$0xff]
        %v832 = vld [vmem:[%s697 + $0x298] sm:$0xff]
        %v833 = vld [vmem:[%s697 + $0x2a0] sm:$0xff]
        %v834 = vld [vmem:[%s697 + $0x2a8] sm:$0xff]
        %v835 = vld [vmem:[%s697 + $0x2b0] sm:$0xff]
        %v836 = vld [vmem:[%s697 + $0x2b8] sm:$0xff]
        %v837 = vld [vmem:[%s697 + $0x2c0] sm:$0xff]
        %v838 = vld [vmem:[%s697 + $0x2c8] sm:$0xff]
        %v839 = vld [vmem:[%s697 + $0x2d0] sm:$0xff]
        %v840 = vld [vmem:[%s697 + $0x2d8] sm:$0xff]
        %v841 = vld [vmem:[%s697 + $0x2e0] sm:$0xff]
        %v842 = vld [vmem:[%s697 + $0x2e8] sm:$0xff]
        %v843 = vld [vmem:[%s697 + $0x2f0] sm:$0xff]
        %v844 = vld [vmem:[%s697 + $0x2f8] sm:$0xff]
        %v845 = vpack.c.bf16 %v750, %v749
        %v846 = vpack.c.bf16 %v752, %v751
        %v847 = vpack.c.bf16 %v754, %v753
        %v848 = vpack.c.bf16 %v756, %v755
        %v849 = vpack.c.bf16 %v758, %v757
        %v850 = vpack.c.bf16 %v760, %v759
        %v851 = vpack.c.bf16 %v762, %v761
        %v852 = vpack.c.bf16 %v764, %v763
        %v853 = vpack.c.bf16 %v766, %v765
        %v854 = vpack.c.bf16 %v768, %v767
        %v855 = vpack.c.bf16 %v770, %v769
        %v856 = vpack.c.bf16 %v772, %v771
        %v857 = vpack.c.bf16 %v774, %v773
        %v858 = vpack.c.bf16 %v776, %v775
        %v859 = vpack.c.bf16 %v778, %v777
        %v860 = vpack.c.bf16 %v780, %v779
        %v861 = vpack.c.bf16 %v782, %v781
        %v862 = vpack.c.bf16 %v784, %v783
        %v863 = vpack.c.bf16 %v786, %v785
        %v864 = vpack.c.bf16 %v788, %v787
        %v865 = vpack.c.bf16 %v790, %v789
        %v866 = vpack.c.bf16 %v792, %v791
        %v867 = vpack.c.bf16 %v794, %v793
        %v868 = vpack.c.bf16 %v796, %v795
        %v869 = vpack.c.bf16 %v798, %v797
        %v870 = vpack.c.bf16 %v800, %v799
        %v871 = vpack.c.bf16 %v802, %v801
        %v872 = vpack.c.bf16 %v804, %v803
        %v873 = vpack.c.bf16 %v806, %v805
        %v874 = vpack.c.bf16 %v808, %v807
        %v875 = vpack.c.bf16 %v810, %v809
        %v876 = vpack.c.bf16 %v812, %v811
        %v877 = vpack.c.bf16 %v814, %v813
        %v878 = vpack.c.bf16 %v816, %v815
        %v879 = vpack.c.bf16 %v818, %v817
        %v880 = vpack.c.bf16 %v820, %v819
        %v881 = vpack.c.bf16 %v822, %v821
        %v882 = vpack.c.bf16 %v824, %v823
        %v883 = vpack.c.bf16 %v826, %v825
        %v884 = vpack.c.bf16 %v828, %v827
        %v885 = vpack.c.bf16 %v830, %v829
        %v886 = vpack.c.bf16 %v832, %v831
        %v887 = vpack.c.bf16 %v834, %v833
        %v888 = vpack.c.bf16 %v836, %v835
        %v889 = vpack.c.bf16 %v838, %v837
        %v890 = vpack.c.bf16 %v840, %v839
        %v891 = vpack.c.bf16 %v842, %v841
        %v892 = vpack.c.bf16 %v844, %v843
        %v893 = vld [vmem:[%s2] sm:$0xff]
        %v894 = vld [vmem:[%s2 + $0x8] sm:$0xff]
        %v895 = vld [vmem:[%s2 + $0x10] sm:$0xff]
        %v896 = vld [vmem:[%s2 + $0x18] sm:$0xff]
        %v897 = vld [vmem:[%s2 + $0x20] sm:$0xff]
        %v898 = vld [vmem:[%s2 + $0x28] sm:$0xff]
        %v899 = vld [vmem:[%s2 + $0x30] sm:$0xff]
        %v900 = vld [vmem:[%s2 + $0x38] sm:$0xff]
        %v901 = vld [vmem:[%s2 + $0x40] sm:$0xff]
        %v902 = vld [vmem:[%s2 + $0x48] sm:$0xff]
        %v903 = vld [vmem:[%s2 + $0x50] sm:$0xff]
        %v904 = vld [vmem:[%s2 + $0x58] sm:$0xff]
        %v905 = vld [vmem:[%s2 + $0x60] sm:$0xff]
        %v906 = vld [vmem:[%s2 + $0x68] sm:$0xff]
        %v907 = vld [vmem:[%s2 + $0x70] sm:$0xff]
        %v908 = vld [vmem:[%s2 + $0x78] sm:$0xff]
        %v925 = vunpack.c.l.b16 %v893
        %v926 = vunpack.c.h.b16 %v893
        %v927 = vunpack.c.l.b16 %v894
        %v928 = vunpack.c.h.b16 %v894
        %v929 = vunpack.c.l.b16 %v895
        %v930 = vunpack.c.h.b16 %v895
        %v931 = vunpack.c.l.b16 %v896
        %v932 = vunpack.c.h.b16 %v896
        %v933 = vunpack.c.l.b16 %v897
        %v934 = vunpack.c.h.b16 %v897
        %v935 = vunpack.c.l.b16 %v898
        %v936 = vunpack.c.h.b16 %v898
        %v937 = vunpack.c.l.b16 %v899
        %v938 = vunpack.c.h.b16 %v899
        %v939 = vunpack.c.l.b16 %v900
        %v940 = vunpack.c.h.b16 %v900
        %v941 = vunpack.c.l.b16 %v901
        %v942 = vunpack.c.h.b16 %v901
        %v943 = vunpack.c.l.b16 %v902
        %v944 = vunpack.c.h.b16 %v902
        %v945 = vunpack.c.l.b16 %v903
        %v946 = vunpack.c.h.b16 %v903
        %v947 = vunpack.c.l.b16 %v904
        %v948 = vunpack.c.h.b16 %v904
        %v949 = vunpack.c.l.b16 %v905
        %v950 = vunpack.c.h.b16 %v905
        %v951 = vunpack.c.l.b16 %v906
        %v952 = vunpack.c.h.b16 %v906
        %v953 = vunpack.c.l.b16 %v907
        %v954 = vunpack.c.h.b16 %v907
        %v955 = vunpack.c.l.b16 %v908
        %v956 = vunpack.c.h.b16 %v908
        %v957 = vpack.c.b16 %v927, %v925
        %v958 = vpack.c.b16 %v928, %v926
        %v959 = vpack.c.b16 %v931, %v929
        %v960 = vpack.c.b16 %v932, %v930
        %v961 = vpack.c.b16 %v935, %v933
        %v962 = vpack.c.b16 %v936, %v934
        %v963 = vpack.c.b16 %v939, %v937
        %v964 = vpack.c.b16 %v940, %v938
        %v965 = vpack.c.b16 %v943, %v941
        %v966 = vpack.c.b16 %v944, %v942
        %v967 = vpack.c.b16 %v947, %v945
        %v968 = vpack.c.b16 %v948, %v946
        %v969 = vpack.c.b16 %v951, %v949
        %v970 = vpack.c.b16 %v952, %v950
        %v971 = vpack.c.b16 %v955, %v953
        %v972 = vpack.c.b16 %v956, %v954
        %989 = vmatprep.subr.bf16.mxu0 %v972
        %990 = vmatpush1.bf16.msra.mxu0 %v971
        %991 = vmatprep.subr.bf16.mxu0 %v970
        %992 = vmatpush1.bf16.msra.mxu0 %v969
        %993 = vmatprep.subr.bf16.mxu0 %v968
        %994 = vmatpush1.bf16.msra.mxu0 %v967
        %995 = vmatprep.subr.bf16.mxu0 %v966
        %996 = vmatpush1.bf16.msra.mxu0 %v965
        %997 = vmatprep.subr.bf16.mxu0 %v964
        %998 = vmatpush1.bf16.msra.mxu0 %v963
        %999 = vmatprep.subr.bf16.mxu0 %v962
        %1000 = vmatpush1.bf16.msra.mxu0 %v961
        %1001 = vmatprep.subr.bf16.mxu0 %v960
        %1002 = vmatpush1.bf16.msra.mxu0 %v959
        %1003 = vmatprep.subr.bf16.mxu0 %v958
        %1004 = vmatpush1.bf16.msra.mxu0 %v957
        %1005 = vmatprep.subr.bf16.mxu0 0
        %1006 = vmatpush2.bf16.msra.mxu0 0
        %1007 = vmatprep.subr.bf16.mxu0 0
        %1008 = vmatpush2.bf16.msra.mxu0 0
        %1009 = vmatprep.subr.bf16.mxu0 0
        %1010 = vmatpush2.bf16.msra.mxu0 0
        %1011 = vmatprep.subr.bf16.mxu0 0
        %1012 = vmatpush2.bf16.msra.mxu0 0
        %1013 = vmatprep.subr.bf16.mxu0 0
        %1014 = vmatpush2.bf16.msra.mxu0 0
        %1015 = vmatprep.subr.bf16.mxu0 0
        %1016 = vmatpush2.bf16.msra.mxu0 0
        %1017 = vmatprep.subr.bf16.mxu0 0
        %1018 = vmatpush2.bf16.msra.mxu0 0
        %1019 = vmatprep.subr.bf16.mxu0 0
        %1020 = vmatpush2.bf16.msra.mxu0 0
        %1021 = vmatprep.mubr.bf16.mxu0 0
        %1022 = vmatmul.mubr.bf16.gmra.mxu0 %v845
        %v1023 = vpop.f32.mrf.mxu0
        %v1024 = vadd.f32 0.0, %v1023
        %v1025 = vpop.f32.mrf.mxu0
        %v1026 = vadd.f32 0.0, %v1025
        %v1027 = vpop.f32.mrf.mxu0
        %v1028 = vadd.f32 0.0, %v1027
        %v1029 = vpop.f32.mrf.mxu0
        %v1030 = vadd.f32 0.0, %v1029
        %1031 = vmatprep.mubr.bf16.mxu0 0
        %1032 = vmatmul.mubr.bf16.gmra.mxu0 %v846
        %v1033 = vpop.f32.mrf.mxu0
        %v1034 = vadd.f32 0.0, %v1033
        %v1035 = vpop.f32.mrf.mxu0
        %v1036 = vadd.f32 0.0, %v1035
        %v1037 = vpop.f32.mrf.mxu0
        %v1038 = vadd.f32 0.0, %v1037
        %v1039 = vpop.f32.mrf.mxu0
        %v1040 = vadd.f32 0.0, %v1039
        %1041 = vmatprep.mubr.bf16.mxu0 0
        %1042 = vmatmul.mubr.bf16.gmra.mxu0 %v847
        %v1043 = vpop.f32.mrf.mxu0
        %v1044 = vadd.f32 0.0, %v1043
        %v1045 = vpop.f32.mrf.mxu0
        %v1046 = vadd.f32 0.0, %v1045
        %v1047 = vpop.f32.mrf.mxu0
        %v1048 = vadd.f32 0.0, %v1047
        %v1049 = vpop.f32.mrf.mxu0
        %v1050 = vadd.f32 0.0, %v1049
        %1051 = vmatprep.mubr.bf16.mxu0 0
        %1052 = vmatmul.mubr.bf16.gmra.mxu0 %v848
        %v1053 = vpop.f32.mrf.mxu0
        %v1054 = vadd.f32 0.0, %v1053
        %v1055 = vpop.f32.mrf.mxu0
        %v1056 = vadd.f32 0.0, %v1055
        %v1057 = vpop.f32.mrf.mxu0
        %v1058 = vadd.f32 0.0, %v1057
        %v1059 = vpop.f32.mrf.mxu0
        %v1060 = vadd.f32 0.0, %v1059
        %1061 = vmatprep.mubr.bf16.mxu0 0
        %1062 = vmatmul.mubr.bf16.gmra.mxu0 %v849
        %v1063 = vpop.f32.mrf.mxu0
        %v1064 = vadd.f32 0.0, %v1063
        %v1065 = vpop.f32.mrf.mxu0
        %v1066 = vadd.f32 0.0, %v1065
        %v1067 = vpop.f32.mrf.mxu0
        %v1068 = vadd.f32 0.0, %v1067
        %v1069 = vpop.f32.mrf.mxu0
        %v1070 = vadd.f32 0.0, %v1069
        %1071 = vmatprep.mubr.bf16.mxu0 0
        %1072 = vmatmul.mubr.bf16.gmra.mxu0 %v850
        %v1073 = vpop.f32.mrf.mxu0
        %v1074 = vadd.f32 0.0, %v1073
        %v1075 = vpop.f32.mrf.mxu0
        %v1076 = vadd.f32 0.0, %v1075
        %v1077 = vpop.f32.mrf.mxu0
        %v1078 = vadd.f32 0.0, %v1077
        %v1079 = vpop.f32.mrf.mxu0
        %v1080 = vadd.f32 0.0, %v1079
        %1081 = vmatprep.mubr.bf16.mxu0 0
        %1082 = vmatmul.mubr.bf16.gmra.mxu0 %v851
        %v1083 = vpop.f32.mrf.mxu0
        %v1084 = vadd.f32 0.0, %v1083
        %v1085 = vpop.f32.mrf.mxu0
        %v1086 = vadd.f32 0.0, %v1085
        %v1087 = vpop.f32.mrf.mxu0
        %v1088 = vadd.f32 0.0, %v1087
        %v1089 = vpop.f32.mrf.mxu0
        %v1090 = vadd.f32 0.0, %v1089
        %1091 = vmatprep.mubr.bf16.mxu0 0
        %1092 = vmatmul.mubr.bf16.gmra.mxu0 %v852
        %v1093 = vpop.f32.mrf.mxu0
        %v1094 = vadd.f32 0.0, %v1093
        %v1095 = vpop.f32.mrf.mxu0
        %v1096 = vadd.f32 0.0, %v1095
        %v1097 = vpop.f32.mrf.mxu0
        %v1098 = vadd.f32 0.0, %v1097
        %v1099 = vpop.f32.mrf.mxu0
        %v1100 = vadd.f32 0.0, %v1099
        %1101 = vmatprep.mubr.bf16.mxu0 0
        %1102 = vmatmul.mubr.bf16.gmra.mxu0 %v853
        %v1103 = vpop.f32.mrf.mxu0
        %v1104 = vadd.f32 0.0, %v1103
        %v1105 = vpop.f32.mrf.mxu0
        %v1106 = vadd.f32 0.0, %v1105
        %v1107 = vpop.f32.mrf.mxu0
        %v1108 = vadd.f32 0.0, %v1107
        %v1109 = vpop.f32.mrf.mxu0
        %v1110 = vadd.f32 0.0, %v1109
        %1111 = vmatprep.mubr.bf16.mxu0 0
        %1112 = vmatmul.mubr.bf16.gmra.mxu0 %v854
        %v1113 = vpop.f32.mrf.mxu0
        %v1114 = vadd.f32 0.0, %v1113
        %v1115 = vpop.f32.mrf.mxu0
        %v1116 = vadd.f32 0.0, %v1115
        %v1117 = vpop.f32.mrf.mxu0
        %v1118 = vadd.f32 0.0, %v1117
        %v1119 = vpop.f32.mrf.mxu0
        %v1120 = vadd.f32 0.0, %v1119
        %1121 = vmatprep.mubr.bf16.mxu0 0
        %1122 = vmatmul.mubr.bf16.gmra.mxu0 %v855
        %v1123 = vpop.f32.mrf.mxu0
        %v1124 = vadd.f32 0.0, %v1123
        %v1125 = vpop.f32.mrf.mxu0
        %v1126 = vadd.f32 0.0, %v1125
        %v1127 = vpop.f32.mrf.mxu0
        %v1128 = vadd.f32 0.0, %v1127
        %v1129 = vpop.f32.mrf.mxu0
        %v1130 = vadd.f32 0.0, %v1129
        %1131 = vmatprep.mubr.bf16.mxu0 0
        %1132 = vmatmul.mubr.bf16.gmra.mxu0 %v856
        %v1133 = vpop.f32.mrf.mxu0
        %v1134 = vadd.f32 0.0, %v1133
        %v1135 = vpop.f32.mrf.mxu0
        %v1136 = vadd.f32 0.0, %v1135
        %v1137 = vpop.f32.mrf.mxu0
        %v1138 = vadd.f32 0.0, %v1137
        %v1139 = vpop.f32.mrf.mxu0
        %v1140 = vadd.f32 0.0, %v1139
        %1141 = vmatprep.mubr.bf16.mxu0 0
        %1142 = vmatmul.mubr.bf16.gmra.mxu0 %v857
        %v1143 = vpop.f32.mrf.mxu0
        %v1144 = vadd.f32 0.0, %v1143
        %v1145 = vpop.f32.mrf.mxu0
        %v1146 = vadd.f32 0.0, %v1145
        %v1147 = vpop.f32.mrf.mxu0
        %v1148 = vadd.f32 0.0, %v1147
        %v1149 = vpop.f32.mrf.mxu0
        %v1150 = vadd.f32 0.0, %v1149
        %1151 = vmatprep.mubr.bf16.mxu0 0
        %1152 = vmatmul.mubr.bf16.gmra.mxu0 %v858
        %v1153 = vpop.f32.mrf.mxu0
        %v1154 = vadd.f32 0.0, %v1153
        %v1155 = vpop.f32.mrf.mxu0
        %v1156 = vadd.f32 0.0, %v1155
        %v1157 = vpop.f32.mrf.mxu0
        %v1158 = vadd.f32 0.0, %v1157
        %v1159 = vpop.f32.mrf.mxu0
        %v1160 = vadd.f32 0.0, %v1159
        %1161 = vmatprep.mubr.bf16.mxu0 0
        %1162 = vmatmul.mubr.bf16.gmra.mxu0 %v859
        %v1163 = vpop.f32.mrf.mxu0
        %v1164 = vadd.f32 0.0, %v1163
        %v1165 = vpop.f32.mrf.mxu0
        %v1166 = vadd.f32 0.0, %v1165
        %v1167 = vpop.f32.mrf.mxu0
        %v1168 = vadd.f32 0.0, %v1167
        %v1169 = vpop.f32.mrf.mxu0
        %v1170 = vadd.f32 0.0, %v1169
        %1171 = vmatprep.mubr.bf16.mxu0 0
        %1172 = vmatmul.mubr.bf16.gmra.mxu0 %v860
        %v1173 = vpop.f32.mrf.mxu0
        %v1174 = vadd.f32 0.0, %v1173
        %v1175 = vpop.f32.mrf.mxu0
        %v1176 = vadd.f32 0.0, %v1175
        %v1177 = vpop.f32.mrf.mxu0
        %v1178 = vadd.f32 0.0, %v1177
        %v1179 = vpop.f32.mrf.mxu0
        %v1180 = vadd.f32 0.0, %v1179
        %1181 = vmatprep.mubr.bf16.mxu0 0
        %1182 = vmatmul.mubr.bf16.gmra.mxu0 %v861
        %v1183 = vpop.f32.mrf.mxu0
        %v1184 = vadd.f32 0.0, %v1183
        %v1185 = vpop.f32.mrf.mxu0
        %v1186 = vadd.f32 0.0, %v1185
        %v1187 = vpop.f32.mrf.mxu0
        %v1188 = vadd.f32 0.0, %v1187
        %v1189 = vpop.f32.mrf.mxu0
        %v1190 = vadd.f32 0.0, %v1189
        %1191 = vmatprep.mubr.bf16.mxu0 0
        %1192 = vmatmul.mubr.bf16.gmra.mxu0 %v862
        %v1193 = vpop.f32.mrf.mxu0
        %v1194 = vadd.f32 0.0, %v1193
        %v1195 = vpop.f32.mrf.mxu0
        %v1196 = vadd.f32 0.0, %v1195
        %v1197 = vpop.f32.mrf.mxu0
        %v1198 = vadd.f32 0.0, %v1197
        %v1199 = vpop.f32.mrf.mxu0
        %v1200 = vadd.f32 0.0, %v1199
        %1201 = vmatprep.mubr.bf16.mxu0 0
        %1202 = vmatmul.mubr.bf16.gmra.mxu0 %v863
        %v1203 = vpop.f32.mrf.mxu0
        %v1204 = vadd.f32 0.0, %v1203
        %v1205 = vpop.f32.mrf.mxu0
        %v1206 = vadd.f32 0.0, %v1205
        %v1207 = vpop.f32.mrf.mxu0
        %v1208 = vadd.f32 0.0, %v1207
        %v1209 = vpop.f32.mrf.mxu0
        %v1210 = vadd.f32 0.0, %v1209
        %1211 = vmatprep.mubr.bf16.mxu0 0
        %1212 = vmatmul.mubr.bf16.gmra.mxu0 %v864
        %v1213 = vpop.f32.mrf.mxu0
        %v1214 = vadd.f32 0.0, %v1213
        %v1215 = vpop.f32.mrf.mxu0
        %v1216 = vadd.f32 0.0, %v1215
        %v1217 = vpop.f32.mrf.mxu0
        %v1218 = vadd.f32 0.0, %v1217
        %v1219 = vpop.f32.mrf.mxu0
        %v1220 = vadd.f32 0.0, %v1219
        %1221 = vmatprep.mubr.bf16.mxu0 0
        %1222 = vmatmul.mubr.bf16.gmra.mxu0 %v865
        %v1223 = vpop.f32.mrf.mxu0
        %v1224 = vadd.f32 0.0, %v1223
        %v1225 = vpop.f32.mrf.mxu0
        %v1226 = vadd.f32 0.0, %v1225
        %v1227 = vpop.f32.mrf.mxu0
        %v1228 = vadd.f32 0.0, %v1227
        %v1229 = vpop.f32.mrf.mxu0
        %v1230 = vadd.f32 0.0, %v1229
        %1231 = vmatprep.mubr.bf16.mxu0 0
        %1232 = vmatmul.mubr.bf16.gmra.mxu0 %v866
        %v1233 = vpop.f32.mrf.mxu0
        %v1234 = vadd.f32 0.0, %v1233
        %v1235 = vpop.f32.mrf.mxu0
        %v1236 = vadd.f32 0.0, %v1235
        %v1237 = vpop.f32.mrf.mxu0
        %v1238 = vadd.f32 0.0, %v1237
        %v1239 = vpop.f32.mrf.mxu0
        %v1240 = vadd.f32 0.0, %v1239
        %1241 = vmatprep.mubr.bf16.mxu0 0
        %1242 = vmatmul.mubr.bf16.gmra.mxu0 %v867
        %v1243 = vpop.f32.mrf.mxu0
        %v1244 = vadd.f32 0.0, %v1243
        %v1245 = vpop.f32.mrf.mxu0
        %v1246 = vadd.f32 0.0, %v1245
        %v1247 = vpop.f32.mrf.mxu0
        %v1248 = vadd.f32 0.0, %v1247
        %v1249 = vpop.f32.mrf.mxu0
        %v1250 = vadd.f32 0.0, %v1249
        %1251 = vmatprep.mubr.bf16.mxu0 0
        %1252 = vmatmul.mubr.bf16.gmra.mxu0 %v868
        %v1253 = vpop.f32.mrf.mxu0
        %v1254 = vadd.f32 0.0, %v1253
        %v1255 = vpop.f32.mrf.mxu0
        %v1256 = vadd.f32 0.0, %v1255
        %v1257 = vpop.f32.mrf.mxu0
        %v1258 = vadd.f32 0.0, %v1257
        %v1259 = vpop.f32.mrf.mxu0
        %v1260 = vadd.f32 0.0, %v1259
        %1261 = vmatprep.mubr.bf16.mxu0 0
        %1262 = vmatmul.mubr.bf16.gmra.mxu0 %v869
        %v1263 = vpop.f32.mrf.mxu0
        %v1264 = vadd.f32 0.0, %v1263
        %v1265 = vpop.f32.mrf.mxu0
        %v1266 = vadd.f32 0.0, %v1265
        %v1267 = vpop.f32.mrf.mxu0
        %v1268 = vadd.f32 0.0, %v1267
        %v1269 = vpop.f32.mrf.mxu0
        %v1270 = vadd.f32 0.0, %v1269
        %1271 = vmatprep.mubr.bf16.mxu0 0
        %1272 = vmatmul.mubr.bf16.gmra.mxu0 %v870
        %v1273 = vpop.f32.mrf.mxu0
        %v1274 = vadd.f32 0.0, %v1273
        %v1275 = vpop.f32.mrf.mxu0
        %v1276 = vadd.f32 0.0, %v1275
        %v1277 = vpop.f32.mrf.mxu0
        %v1278 = vadd.f32 0.0, %v1277
        %v1279 = vpop.f32.mrf.mxu0
        %v1280 = vadd.f32 0.0, %v1279
        %1281 = vmatprep.mubr.bf16.mxu0 0
        %1282 = vmatmul.mubr.bf16.gmra.mxu0 %v871
        %v1283 = vpop.f32.mrf.mxu0
        %v1284 = vadd.f32 0.0, %v1283
        %v1285 = vpop.f32.mrf.mxu0
        %v1286 = vadd.f32 0.0, %v1285
        %v1287 = vpop.f32.mrf.mxu0
        %v1288 = vadd.f32 0.0, %v1287
        %v1289 = vpop.f32.mrf.mxu0
        %v1290 = vadd.f32 0.0, %v1289
        %1291 = vmatprep.mubr.bf16.mxu0 0
        %1292 = vmatmul.mubr.bf16.gmra.mxu0 %v872
        %v1293 = vpop.f32.mrf.mxu0
        %v1294 = vadd.f32 0.0, %v1293
        %v1295 = vpop.f32.mrf.mxu0
        %v1296 = vadd.f32 0.0, %v1295
        %v1297 = vpop.f32.mrf.mxu0
        %v1298 = vadd.f32 0.0, %v1297
        %v1299 = vpop.f32.mrf.mxu0
        %v1300 = vadd.f32 0.0, %v1299
        %1301 = vmatprep.mubr.bf16.mxu0 0
        %1302 = vmatmul.mubr.bf16.gmra.mxu0 %v873
        %v1303 = vpop.f32.mrf.mxu0
        %v1304 = vadd.f32 0.0, %v1303
        %v1305 = vpop.f32.mrf.mxu0
        %v1306 = vadd.f32 0.0, %v1305
        %v1307 = vpop.f32.mrf.mxu0
        %v1308 = vadd.f32 0.0, %v1307
        %v1309 = vpop.f32.mrf.mxu0
        %v1310 = vadd.f32 0.0, %v1309
        %1311 = vmatprep.mubr.bf16.mxu0 0
        %1312 = vmatmul.mubr.bf16.gmra.mxu0 %v874
        %v1313 = vpop.f32.mrf.mxu0
        %v1314 = vadd.f32 0.0, %v1313
        %v1315 = vpop.f32.mrf.mxu0
        %v1316 = vadd.f32 0.0, %v1315
        %v1317 = vpop.f32.mrf.mxu0
        %v1318 = vadd.f32 0.0, %v1317
        %v1319 = vpop.f32.mrf.mxu0
        %v1320 = vadd.f32 0.0, %v1319
        %1321 = vmatprep.mubr.bf16.mxu0 0
        %1322 = vmatmul.mubr.bf16.gmra.mxu0 %v875
        %v1323 = vpop.f32.mrf.mxu0
        %v1324 = vadd.f32 0.0, %v1323
        %v1325 = vpop.f32.mrf.mxu0
        %v1326 = vadd.f32 0.0, %v1325
        %v1327 = vpop.f32.mrf.mxu0
        %v1328 = vadd.f32 0.0, %v1327
        %v1329 = vpop.f32.mrf.mxu0
        %v1330 = vadd.f32 0.0, %v1329
        %1331 = vmatprep.mubr.bf16.mxu0 0
        %1332 = vmatmul.mubr.bf16.gmra.mxu0 %v876
        %v1333 = vpop.f32.mrf.mxu0
        %v1334 = vadd.f32 0.0, %v1333
        %v1335 = vpop.f32.mrf.mxu0
        %v1336 = vadd.f32 0.0, %v1335
        %v1337 = vpop.f32.mrf.mxu0
        %v1338 = vadd.f32 0.0, %v1337
        %v1339 = vpop.f32.mrf.mxu0
        %v1340 = vadd.f32 0.0, %v1339
        %1341 = vmatprep.mubr.bf16.mxu0 0
        %1342 = vmatmul.mubr.bf16.gmra.mxu0 %v877
        %v1343 = vpop.f32.mrf.mxu0
        %v1344 = vadd.f32 0.0, %v1343
        %v1345 = vpop.f32.mrf.mxu0
        %v1346 = vadd.f32 0.0, %v1345
        %v1347 = vpop.f32.mrf.mxu0
        %v1348 = vadd.f32 0.0, %v1347
        %v1349 = vpop.f32.mrf.mxu0
        %v1350 = vadd.f32 0.0, %v1349
        %1351 = vmatprep.mubr.bf16.mxu0 0
        %1352 = vmatmul.mubr.bf16.gmra.mxu0 %v878
        %v1353 = vpop.f32.mrf.mxu0
        %v1354 = vadd.f32 0.0, %v1353
        %v1355 = vpop.f32.mrf.mxu0
        %v1356 = vadd.f32 0.0, %v1355
        %v1357 = vpop.f32.mrf.mxu0
        %v1358 = vadd.f32 0.0, %v1357
        %v1359 = vpop.f32.mrf.mxu0
        %v1360 = vadd.f32 0.0, %v1359
        %1361 = vmatprep.mubr.bf16.mxu0 0
        %1362 = vmatmul.mubr.bf16.gmra.mxu0 %v879
        %v1363 = vpop.f32.mrf.mxu0
        %v1364 = vadd.f32 0.0, %v1363
        %v1365 = vpop.f32.mrf.mxu0
        %v1366 = vadd.f32 0.0, %v1365
        %v1367 = vpop.f32.mrf.mxu0
        %v1368 = vadd.f32 0.0, %v1367
        %v1369 = vpop.f32.mrf.mxu0
        %v1370 = vadd.f32 0.0, %v1369
        %1371 = vmatprep.mubr.bf16.mxu0 0
        %1372 = vmatmul.mubr.bf16.gmra.mxu0 %v880
        %v1373 = vpop.f32.mrf.mxu0
        %v1374 = vadd.f32 0.0, %v1373
        %v1375 = vpop.f32.mrf.mxu0
        %v1376 = vadd.f32 0.0, %v1375
        %v1377 = vpop.f32.mrf.mxu0
        %v1378 = vadd.f32 0.0, %v1377
        %v1379 = vpop.f32.mrf.mxu0
        %v1380 = vadd.f32 0.0, %v1379
        %1381 = vmatprep.mubr.bf16.mxu0 0
        %1382 = vmatmul.mubr.bf16.gmra.mxu0 %v881
        %v1383 = vpop.f32.mrf.mxu0
        %v1384 = vadd.f32 0.0, %v1383
        %v1385 = vpop.f32.mrf.mxu0
        %v1386 = vadd.f32 0.0, %v1385
        %v1387 = vpop.f32.mrf.mxu0
        %v1388 = vadd.f32 0.0, %v1387
        %v1389 = vpop.f32.mrf.mxu0
        %v1390 = vadd.f32 0.0, %v1389
        %1391 = vmatprep.mubr.bf16.mxu0 0
        %1392 = vmatmul.mubr.bf16.gmra.mxu0 %v882
        %v1393 = vpop.f32.mrf.mxu0
        %v1394 = vadd.f32 0.0, %v1393
        %v1395 = vpop.f32.mrf.mxu0
        %v1396 = vadd.f32 0.0, %v1395
        %v1397 = vpop.f32.mrf.mxu0
        %v1398 = vadd.f32 0.0, %v1397
        %v1399 = vpop.f32.mrf.mxu0
        %v1400 = vadd.f32 0.0, %v1399
        %1401 = vmatprep.mubr.bf16.mxu0 0
        %1402 = vmatmul.mubr.bf16.gmra.mxu0 %v883
        %v1403 = vpop.f32.mrf.mxu0
        %v1404 = vadd.f32 0.0, %v1403
        %v1405 = vpop.f32.mrf.mxu0
        %v1406 = vadd.f32 0.0, %v1405
        %v1407 = vpop.f32.mrf.mxu0
        %v1408 = vadd.f32 0.0, %v1407
        %v1409 = vpop.f32.mrf.mxu0
        %v1410 = vadd.f32 0.0, %v1409
        %1411 = vmatprep.mubr.bf16.mxu0 0
        %1412 = vmatmul.mubr.bf16.gmra.mxu0 %v884
        %v1413 = vpop.f32.mrf.mxu0
        %v1414 = vadd.f32 0.0, %v1413
        %v1415 = vpop.f32.mrf.mxu0
        %v1416 = vadd.f32 0.0, %v1415
        %v1417 = vpop.f32.mrf.mxu0
        %v1418 = vadd.f32 0.0, %v1417
        %v1419 = vpop.f32.mrf.mxu0
        %v1420 = vadd.f32 0.0, %v1419
        %1421 = vmatprep.mubr.bf16.mxu0 0
        %1422 = vmatmul.mubr.bf16.gmra.mxu0 %v885
        %v1423 = vpop.f32.mrf.mxu0
        %v1424 = vadd.f32 0.0, %v1423
        %v1425 = vpop.f32.mrf.mxu0
        %v1426 = vadd.f32 0.0, %v1425
        %v1427 = vpop.f32.mrf.mxu0
        %v1428 = vadd.f32 0.0, %v1427
        %v1429 = vpop.f32.mrf.mxu0
        %v1430 = vadd.f32 0.0, %v1429
        %1431 = vmatprep.mubr.bf16.mxu0 0
        %1432 = vmatmul.mubr.bf16.gmra.mxu0 %v886
        %v1433 = vpop.f32.mrf.mxu0
        %v1434 = vadd.f32 0.0, %v1433
        %v1435 = vpop.f32.mrf.mxu0
        %v1436 = vadd.f32 0.0, %v1435
        %v1437 = vpop.f32.mrf.mxu0
        %v1438 = vadd.f32 0.0, %v1437
        %v1439 = vpop.f32.mrf.mxu0
        %v1440 = vadd.f32 0.0, %v1439
        %1441 = vmatprep.mubr.bf16.mxu0 0
        %1442 = vmatmul.mubr.bf16.gmra.mxu0 %v887
        %v1443 = vpop.f32.mrf.mxu0
        %v1444 = vadd.f32 0.0, %v1443
        %v1445 = vpop.f32.mrf.mxu0
        %v1446 = vadd.f32 0.0, %v1445
        %v1447 = vpop.f32.mrf.mxu0
        %v1448 = vadd.f32 0.0, %v1447
        %v1449 = vpop.f32.mrf.mxu0
        %v1450 = vadd.f32 0.0, %v1449
        %1451 = vmatprep.mubr.bf16.mxu0 0
        %1452 = vmatmul.mubr.bf16.gmra.mxu0 %v888
        %v1453 = vpop.f32.mrf.mxu0
        %v1454 = vadd.f32 0.0, %v1453
        %v1455 = vpop.f32.mrf.mxu0
        %v1456 = vadd.f32 0.0, %v1455
        %v1457 = vpop.f32.mrf.mxu0
        %v1458 = vadd.f32 0.0, %v1457
        %v1459 = vpop.f32.mrf.mxu0
        %v1460 = vadd.f32 0.0, %v1459
        %1461 = vmatprep.mubr.bf16.mxu0 0
        %1462 = vmatmul.mubr.bf16.gmra.mxu0 %v889
        %v1463 = vpop.f32.mrf.mxu0
        %v1464 = vadd.f32 0.0, %v1463
        %v1465 = vpop.f32.mrf.mxu0
        %v1466 = vadd.f32 0.0, %v1465
        %v1467 = vpop.f32.mrf.mxu0
        %v1468 = vadd.f32 0.0, %v1467
        %v1469 = vpop.f32.mrf.mxu0
        %v1470 = vadd.f32 0.0, %v1469
        %1471 = vmatprep.mubr.bf16.mxu0 0
        %1472 = vmatmul.mubr.bf16.gmra.mxu0 %v890
        %v1473 = vpop.f32.mrf.mxu0
        %v1474 = vadd.f32 0.0, %v1473
        %v1475 = vpop.f32.mrf.mxu0
        %v1476 = vadd.f32 0.0, %v1475
        %v1477 = vpop.f32.mrf.mxu0
        %v1478 = vadd.f32 0.0, %v1477
        %v1479 = vpop.f32.mrf.mxu0
        %v1480 = vadd.f32 0.0, %v1479
        %1481 = vmatprep.mubr.bf16.mxu0 0
        %1482 = vmatmul.mubr.bf16.gmra.mxu0 %v891
        %v1483 = vpop.f32.mrf.mxu0
        %v1484 = vadd.f32 0.0, %v1483
        %v1485 = vpop.f32.mrf.mxu0
        %v1486 = vadd.f32 0.0, %v1485
        %v1487 = vpop.f32.mrf.mxu0
        %v1488 = vadd.f32 0.0, %v1487
        %v1489 = vpop.f32.mrf.mxu0
        %v1490 = vadd.f32 0.0, %v1489
        %1491 = vmatprep.mubr.bf16.mxu0 0
        %1492 = vmatmul.mubr.bf16.gmra.mxu0 %v892
        %v1493 = vpop.f32.mrf.mxu0
        %v1494 = vadd.f32 0.0, %v1493
        %v1495 = vpop.f32.mrf.mxu0
        %v1496 = vadd.f32 0.0, %v1495
        %v1497 = vpop.f32.mrf.mxu0
        %v1498 = vadd.f32 0.0, %v1497
        %v1499 = vpop.f32.mrf.mxu0
        %v1500 = vadd.f32 0.0, %v1499
        %1501 = vdwg.mxu0
        %v1502 = vmul.f32 %v1024, %v1024
        %v1503 = vmul.f32 %v1028, %v1028
        %v1504 = vmul.f32 %v1034, %v1034
        %v1505 = vmul.f32 %v1038, %v1038
        %v1506 = vmul.f32 %v1044, %v1044
        %v1507 = vmul.f32 %v1048, %v1048
        %v1508 = vmul.f32 %v1054, %v1054
        %v1509 = vmul.f32 %v1058, %v1058
        %v1510 = vmul.f32 %v1064, %v1064
        %v1511 = vmul.f32 %v1068, %v1068
        %v1512 = vmul.f32 %v1074, %v1074
        %v1513 = vmul.f32 %v1078, %v1078
        %v1514 = vmul.f32 %v1084, %v1084
        %v1515 = vmul.f32 %v1088, %v1088
        %v1516 = vmul.f32 %v1094, %v1094
        %v1517 = vmul.f32 %v1098, %v1098
        %v1518 = vmul.f32 %v1104, %v1104
        %v1519 = vmul.f32 %v1108, %v1108
        %v1520 = vmul.f32 %v1114, %v1114
        %v1521 = vmul.f32 %v1118, %v1118
        %v1522 = vmul.f32 %v1124, %v1124
        %v1523 = vmul.f32 %v1128, %v1128
        %v1524 = vmul.f32 %v1134, %v1134
        %v1525 = vmul.f32 %v1138, %v1138
        %v1526 = vmul.f32 %v1144, %v1144
        %v1527 = vmul.f32 %v1148, %v1148
        %v1528 = vmul.f32 %v1154, %v1154
        %v1529 = vmul.f32 %v1158, %v1158
        %v1530 = vmul.f32 %v1164, %v1164
        %v1531 = vmul.f32 %v1168, %v1168
        %v1532 = vmul.f32 %v1174, %v1174
        %v1533 = vmul.f32 %v1178, %v1178
        %v1534 = vmul.f32 %v1184, %v1184
        %v1535 = vmul.f32 %v1188, %v1188
        %v1536 = vmul.f32 %v1194, %v1194
        %v1537 = vmul.f32 %v1198, %v1198
        %v1538 = vmul.f32 %v1204, %v1204
        %v1539 = vmul.f32 %v1208, %v1208
        %v1540 = vmul.f32 %v1214, %v1214
        %v1541 = vmul.f32 %v1218, %v1218
        %v1542 = vmul.f32 %v1224, %v1224
        %v1543 = vmul.f32 %v1228, %v1228
        %v1544 = vmul.f32 %v1234, %v1234
        %v1545 = vmul.f32 %v1238, %v1238
        %v1546 = vmul.f32 %v1244, %v1244
        %v1547 = vmul.f32 %v1248, %v1248
        %v1548 = vmul.f32 %v1254, %v1254
        %v1549 = vmul.f32 %v1258, %v1258
        %v1550 = vmul.f32 %v1264, %v1264
        %v1551 = vmul.f32 %v1268, %v1268
        %v1552 = vmul.f32 %v1274, %v1274
        %v1553 = vmul.f32 %v1278, %v1278
        %v1554 = vmul.f32 %v1284, %v1284
        %v1555 = vmul.f32 %v1288, %v1288
        %v1556 = vmul.f32 %v1294, %v1294
        %v1557 = vmul.f32 %v1298, %v1298
        %v1558 = vmul.f32 %v1304, %v1304
        %v1559 = vmul.f32 %v1308, %v1308
        %v1560 = vmul.f32 %v1314, %v1314
        %v1561 = vmul.f32 %v1318, %v1318
        %v1562 = vmul.f32 %v1324, %v1324
        %v1563 = vmul.f32 %v1328, %v1328
        %v1564 = vmul.f32 %v1334, %v1334
        %v1565 = vmul.f32 %v1338, %v1338
        %v1566 = vadd.f32 %v1502, %v1534
        %v1567 = vadd.f32 %v1503, %v1535
        %v1568 = vadd.f32 %v1504, %v1536
        %v1569 = vadd.f32 %v1505, %v1537
        %v1570 = vadd.f32 %v1506, %v1538
        %v1571 = vadd.f32 %v1507, %v1539
        %v1572 = vadd.f32 %v1508, %v1540
        %v1573 = vadd.f32 %v1509, %v1541
        %v1574 = vadd.f32 %v1510, %v1542
        %v1575 = vadd.f32 %v1511, %v1543
        %v1576 = vadd.f32 %v1512, %v1544
        %v1577 = vadd.f32 %v1513, %v1545
        %v1578 = vadd.f32 %v1514, %v1546
        %v1579 = vadd.f32 %v1515, %v1547
        %v1580 = vadd.f32 %v1516, %v1548
        %v1581 = vadd.f32 %v1517, %v1549
        %v1582 = vadd.f32 %v1518, %v1550
        %v1583 = vadd.f32 %v1519, %v1551
        %v1584 = vadd.f32 %v1520, %v1552
        %v1585 = vadd.f32 %v1521, %v1553
        %v1586 = vadd.f32 %v1522, %v1554
        %v1587 = vadd.f32 %v1523, %v1555
        %v1588 = vadd.f32 %v1524, %v1556
        %v1589 = vadd.f32 %v1525, %v1557
        %v1590 = vadd.f32 %v1526, %v1558
        %v1591 = vadd.f32 %v1527, %v1559
        %v1592 = vadd.f32 %v1528, %v1560
        %v1593 = vadd.f32 %v1529, %v1561
        %v1594 = vadd.f32 %v1530, %v1562
        %v1595 = vadd.f32 %v1531, %v1563
        %v1596 = vadd.f32 %v1532, %v1564
        %v1597 = vadd.f32 %v1533, %v1565
        %v1598 = vmul.f32 %v1344, %v1344
        %v1599 = vmul.f32 %v1348, %v1348
        %v1600 = vmul.f32 %v1354, %v1354
        %v1601 = vmul.f32 %v1358, %v1358
        %v1602 = vmul.f32 %v1364, %v1364
        %v1603 = vmul.f32 %v1368, %v1368
        %v1604 = vmul.f32 %v1374, %v1374
        %v1605 = vmul.f32 %v1378, %v1378
        %v1606 = vmul.f32 %v1384, %v1384
        %v1607 = vmul.f32 %v1388, %v1388
        %v1608 = vmul.f32 %v1394, %v1394
        %v1609 = vmul.f32 %v1398, %v1398
        %v1610 = vmul.f32 %v1404, %v1404
        %v1611 = vmul.f32 %v1408, %v1408
        %v1612 = vmul.f32 %v1414, %v1414
        %v1613 = vmul.f32 %v1418, %v1418
        %v1614 = vmul.f32 %v1424, %v1424
        %v1615 = vmul.f32 %v1428, %v1428
        %v1616 = vmul.f32 %v1434, %v1434
        %v1617 = vmul.f32 %v1438, %v1438
        %v1618 = vmul.f32 %v1444, %v1444
        %v1619 = vmul.f32 %v1448, %v1448
        %v1620 = vmul.f32 %v1454, %v1454
        %v1621 = vmul.f32 %v1458, %v1458
        %v1622 = vmul.f32 %v1464, %v1464
        %v1623 = vmul.f32 %v1468, %v1468
        %v1624 = vmul.f32 %v1474, %v1474
        %v1625 = vmul.f32 %v1478, %v1478
        %v1626 = vmul.f32 %v1484, %v1484
        %v1627 = vmul.f32 %v1488, %v1488
        %v1628 = vmul.f32 %v1494, %v1494
        %v1629 = vmul.f32 %v1498, %v1498
        %v1630 = vadd.f32 %v1566, %v1598
        %v1631 = vadd.f32 %v1567, %v1599
        %v1632 = vadd.f32 %v1568, %v1600
        %v1633 = vadd.f32 %v1569, %v1601
        %v1634 = vadd.f32 %v1570, %v1602
        %v1635 = vadd.f32 %v1571, %v1603
        %v1636 = vadd.f32 %v1572, %v1604
        %v1637 = vadd.f32 %v1573, %v1605
        %v1638 = vadd.f32 %v1574, %v1606
        %v1639 = vadd.f32 %v1575, %v1607
        %v1640 = vadd.f32 %v1576, %v1608
        %v1641 = vadd.f32 %v1577, %v1609
        %v1642 = vadd.f32 %v1578, %v1610
        %v1643 = vadd.f32 %v1579, %v1611
        %v1644 = vadd.f32 %v1580, %v1612
        %v1645 = vadd.f32 %v1581, %v1613
        %v1646 = vadd.f32 %v1582, %v1614
        %v1647 = vadd.f32 %v1583, %v1615
        %v1648 = vadd.f32 %v1584, %v1616
        %v1649 = vadd.f32 %v1585, %v1617
        %v1650 = vadd.f32 %v1586, %v1618
        %v1651 = vadd.f32 %v1587, %v1619
        %v1652 = vadd.f32 %v1588, %v1620
        %v1653 = vadd.f32 %v1589, %v1621
        %v1654 = vadd.f32 %v1590, %v1622
        %v1655 = vadd.f32 %v1591, %v1623
        %v1656 = vadd.f32 %v1592, %v1624
        %v1657 = vadd.f32 %v1593, %v1625
        %v1658 = vadd.f32 %v1594, %v1626
        %v1659 = vadd.f32 %v1595, %v1627
        %v1660 = vadd.f32 %v1596, %v1628
        %v1661 = vadd.f32 %v1597, %v1629
        %v1662 = vrsqrt.pop %v1630
        %v1663 = vmul.f32 %v1630, %v1662
        %vm1664 = vcmp.eq.f32.partialorder %v1630, inf
        %v1665 = vsel %vm1664, %v1630, %v1663
        %vm1666 = vcmp.eq.f32.partialorder %v1630, 0.0
        %v1667 = vand.u32 %v1630, 2147483648
        %v1668 = vsel %vm1666, %v1667, %v1665
        %v1669 = vrsqrt.pop %v1631
        %v1670 = vmul.f32 %v1631, %v1669
        %vm1671 = vcmp.eq.f32.partialorder %v1631, inf
        %v1672 = vsel %vm1671, %v1631, %v1670
        %vm1673 = vcmp.eq.f32.partialorder %v1631, 0.0
        %v1674 = vand.u32 %v1631, 2147483648
        %v1675 = vsel %vm1673, %v1674, %v1672
        %v1676 = vrsqrt.pop %v1632
        %v1677 = vmul.f32 %v1632, %v1676
        %vm1678 = vcmp.eq.f32.partialorder %v1632, inf
        %v1679 = vsel %vm1678, %v1632, %v1677
        %vm1680 = vcmp.eq.f32.partialorder %v1632, 0.0
        %v1681 = vand.u32 %v1632, 2147483648
        %v1682 = vsel %vm1680, %v1681, %v1679
        %v1683 = vrsqrt.pop %v1633
        %v1684 = vmul.f32 %v1633, %v1683
        %vm1685 = vcmp.eq.f32.partialorder %v1633, inf
        %v1686 = vsel %vm1685, %v1633, %v1684
        %vm1687 = vcmp.eq.f32.partialorder %v1633, 0.0
        %v1688 = vand.u32 %v1633, 2147483648
        %v1689 = vsel %vm1687, %v1688, %v1686
        %v1690 = vrsqrt.pop %v1634
        %v1691 = vmul.f32 %v1634, %v1690
        %vm1692 = vcmp.eq.f32.partialorder %v1634, inf
        %v1693 = vsel %vm1692, %v1634, %v1691
        %vm1694 = vcmp.eq.f32.partialorder %v1634, 0.0
        %v1695 = vand.u32 %v1634, 2147483648
        %v1696 = vsel %vm1694, %v1695, %v1693
        %v1697 = vrsqrt.pop %v1635
        %v1698 = vmul.f32 %v1635, %v1697
        %vm1699 = vcmp.eq.f32.partialorder %v1635, inf
        %v1700 = vsel %vm1699, %v1635, %v1698
        %vm1701 = vcmp.eq.f32.partialorder %v1635, 0.0
        %v1702 = vand.u32 %v1635, 2147483648
        %v1703 = vsel %vm1701, %v1702, %v1700
        %v1704 = vrsqrt.pop %v1636
        %v1705 = vmul.f32 %v1636, %v1704
        %vm1706 = vcmp.eq.f32.partialorder %v1636, inf
        %v1707 = vsel %vm1706, %v1636, %v1705
        %vm1708 = vcmp.eq.f32.partialorder %v1636, 0.0
        %v1709 = vand.u32 %v1636, 2147483648
        %v1710 = vsel %vm1708, %v1709, %v1707
        %v1711 = vrsqrt.pop %v1637
        %v1712 = vmul.f32 %v1637, %v1711
        %vm1713 = vcmp.eq.f32.partialorder %v1637, inf
        %v1714 = vsel %vm1713, %v1637, %v1712
        %vm1715 = vcmp.eq.f32.partialorder %v1637, 0.0
        %v1716 = vand.u32 %v1637, 2147483648
        %v1717 = vsel %vm1715, %v1716, %v1714
        %v1718 = vrsqrt.pop %v1638
        %v1719 = vmul.f32 %v1638, %v1718
        %vm1720 = vcmp.eq.f32.partialorder %v1638, inf
        %v1721 = vsel %vm1720, %v1638, %v1719
        %vm1722 = vcmp.eq.f32.partialorder %v1638, 0.0
        %v1723 = vand.u32 %v1638, 2147483648
        %v1724 = vsel %vm1722, %v1723, %v1721
        %v1725 = vrsqrt.pop %v1639
        %v1726 = vmul.f32 %v1639, %v1725
        %vm1727 = vcmp.eq.f32.partialorder %v1639, inf
        %v1728 = vsel %vm1727, %v1639, %v1726
        %vm1729 = vcmp.eq.f32.partialorder %v1639, 0.0
        %v1730 = vand.u32 %v1639, 2147483648
        %v1731 = vsel %vm1729, %v1730, %v1728
        %v1732 = vrsqrt.pop %v1640
        %v1733 = vmul.f32 %v1640, %v1732
        %vm1734 = vcmp.eq.f32.partialorder %v1640, inf
        %v1735 = vsel %vm1734, %v1640, %v1733
        %vm1736 = vcmp.eq.f32.partialorder %v1640, 0.0
        %v1737 = vand.u32 %v1640, 2147483648
        %v1738 = vsel %vm1736, %v1737, %v1735
        %v1739 = vrsqrt.pop %v1641
        %v1740 = vmul.f32 %v1641, %v1739
        %vm1741 = vcmp.eq.f32.partialorder %v1641, inf
        %v1742 = vsel %vm1741, %v1641, %v1740
        %vm1743 = vcmp.eq.f32.partialorder %v1641, 0.0
        %v1744 = vand.u32 %v1641, 2147483648
        %v1745 = vsel %vm1743, %v1744, %v1742
        %v1746 = vrsqrt.pop %v1642
        %v1747 = vmul.f32 %v1642, %v1746
        %vm1748 = vcmp.eq.f32.partialorder %v1642, inf
        %v1749 = vsel %vm1748, %v1642, %v1747
        %vm1750 = vcmp.eq.f32.partialorder %v1642, 0.0
        %v1751 = vand.u32 %v1642, 2147483648
        %v1752 = vsel %vm1750, %v1751, %v1749
        %v1753 = vrsqrt.pop %v1643
        %v1754 = vmul.f32 %v1643, %v1753
        %vm1755 = vcmp.eq.f32.partialorder %v1643, inf
        %v1756 = vsel %vm1755, %v1643, %v1754
        %vm1757 = vcmp.eq.f32.partialorder %v1643, 0.0
        %v1758 = vand.u32 %v1643, 2147483648
        %v1759 = vsel %vm1757, %v1758, %v1756
        %v1760 = vrsqrt.pop %v1644
        %v1761 = vmul.f32 %v1644, %v1760
        %vm1762 = vcmp.eq.f32.partialorder %v1644, inf
        %v1763 = vsel %vm1762, %v1644, %v1761
        %vm1764 = vcmp.eq.f32.partialorder %v1644, 0.0
        %v1765 = vand.u32 %v1644, 2147483648
        %v1766 = vsel %vm1764, %v1765, %v1763
        %v1767 = vrsqrt.pop %v1645
        %v1768 = vmul.f32 %v1645, %v1767
        %vm1769 = vcmp.eq.f32.partialorder %v1645, inf
        %v1770 = vsel %vm1769, %v1645, %v1768
        %vm1771 = vcmp.eq.f32.partialorder %v1645, 0.0
        %v1772 = vand.u32 %v1645, 2147483648
        %v1773 = vsel %vm1771, %v1772, %v1770
        %v1774 = vrsqrt.pop %v1646
        %v1775 = vmul.f32 %v1646, %v1774
        %vm1776 = vcmp.eq.f32.partialorder %v1646, inf
        %v1777 = vsel %vm1776, %v1646, %v1775
        %vm1778 = vcmp.eq.f32.partialorder %v1646, 0.0
        %v1779 = vand.u32 %v1646, 2147483648
        %v1780 = vsel %vm1778, %v1779, %v1777
        %v1781 = vrsqrt.pop %v1647
        %v1782 = vmul.f32 %v1647, %v1781
        %vm1783 = vcmp.eq.f32.partialorder %v1647, inf
        %v1784 = vsel %vm1783, %v1647, %v1782
        %vm1785 = vcmp.eq.f32.partialorder %v1647, 0.0
        %v1786 = vand.u32 %v1647, 2147483648
        %v1787 = vsel %vm1785, %v1786, %v1784
        %v1788 = vrsqrt.pop %v1648
        %v1789 = vmul.f32 %v1648, %v1788
        %vm1790 = vcmp.eq.f32.partialorder %v1648, inf
        %v1791 = vsel %vm1790, %v1648, %v1789
        %vm1792 = vcmp.eq.f32.partialorder %v1648, 0.0
        %v1793 = vand.u32 %v1648, 2147483648
        %v1794 = vsel %vm1792, %v1793, %v1791
        %v1795 = vrsqrt.pop %v1649
        %v1796 = vmul.f32 %v1649, %v1795
        %vm1797 = vcmp.eq.f32.partialorder %v1649, inf
        %v1798 = vsel %vm1797, %v1649, %v1796
        %vm1799 = vcmp.eq.f32.partialorder %v1649, 0.0
        %v1800 = vand.u32 %v1649, 2147483648
        %v1801 = vsel %vm1799, %v1800, %v1798
        %v1802 = vrsqrt.pop %v1650
        %v1803 = vmul.f32 %v1650, %v1802
        %vm1804 = vcmp.eq.f32.partialorder %v1650, inf
        %v1805 = vsel %vm1804, %v1650, %v1803
        %vm1806 = vcmp.eq.f32.partialorder %v1650, 0.0
        %v1807 = vand.u32 %v1650, 2147483648
        %v1808 = vsel %vm1806, %v1807, %v1805
        %v1809 = vrsqrt.pop %v1651
        %v1810 = vmul.f32 %v1651, %v1809
        %vm1811 = vcmp.eq.f32.partialorder %v1651, inf
        %v1812 = vsel %vm1811, %v1651, %v1810
        %vm1813 = vcmp.eq.f32.partialorder %v1651, 0.0
        %v1814 = vand.u32 %v1651, 2147483648
        %v1815 = vsel %vm1813, %v1814, %v1812
        %v1816 = vrsqrt.pop %v1652
        %v1817 = vmul.f32 %v1652, %v1816
        %vm1818 = vcmp.eq.f32.partialorder %v1652, inf
        %v1819 = vsel %vm1818, %v1652, %v1817
        %vm1820 = vcmp.eq.f32.partialorder %v1652, 0.0
        %v1821 = vand.u32 %v1652, 2147483648
        %v1822 = vsel %vm1820, %v1821, %v1819
        %v1823 = vrsqrt.pop %v1653
        %v1824 = vmul.f32 %v1653, %v1823
        %vm1825 = vcmp.eq.f32.partialorder %v1653, inf
        %v1826 = vsel %vm1825, %v1653, %v1824
        %vm1827 = vcmp.eq.f32.partialorder %v1653, 0.0
        %v1828 = vand.u32 %v1653, 2147483648
        %v1829 = vsel %vm1827, %v1828, %v1826
        %v1830 = vrsqrt.pop %v1654
        %v1831 = vmul.f32 %v1654, %v1830
        %vm1832 = vcmp.eq.f32.partialorder %v1654, inf
        %v1833 = vsel %vm1832, %v1654, %v1831
        %vm1834 = vcmp.eq.f32.partialorder %v1654, 0.0
        %v1835 = vand.u32 %v1654, 2147483648
        %v1836 = vsel %vm1834, %v1835, %v1833
        %v1837 = vrsqrt.pop %v1655
        %v1838 = vmul.f32 %v1655, %v1837
        %vm1839 = vcmp.eq.f32.partialorder %v1655, inf
        %v1840 = vsel %vm1839, %v1655, %v1838
        %vm1841 = vcmp.eq.f32.partialorder %v1655, 0.0
        %v1842 = vand.u32 %v1655, 2147483648
        %v1843 = vsel %vm1841, %v1842, %v1840
        %v1844 = vrsqrt.pop %v1656
        %v1845 = vmul.f32 %v1656, %v1844
        %vm1846 = vcmp.eq.f32.partialorder %v1656, inf
        %v1847 = vsel %vm1846, %v1656, %v1845
        %vm1848 = vcmp.eq.f32.partialorder %v1656, 0.0
        %v1849 = vand.u32 %v1656, 2147483648
        %v1850 = vsel %vm1848, %v1849, %v1847
        %v1851 = vrsqrt.pop %v1657
        %v1852 = vmul.f32 %v1657, %v1851
        %vm1853 = vcmp.eq.f32.partialorder %v1657, inf
        %v1854 = vsel %vm1853, %v1657, %v1852
        %vm1855 = vcmp.eq.f32.partialorder %v1657, 0.0
        %v1856 = vand.u32 %v1657, 2147483648
        %v1857 = vsel %vm1855, %v1856, %v1854
        %v1858 = vrsqrt.pop %v1658
        %v1859 = vmul.f32 %v1658, %v1858
        %vm1860 = vcmp.eq.f32.partialorder %v1658, inf
        %v1861 = vsel %vm1860, %v1658, %v1859
        %vm1862 = vcmp.eq.f32.partialorder %v1658, 0.0
        %v1863 = vand.u32 %v1658, 2147483648
        %v1864 = vsel %vm1862, %v1863, %v1861
        %v1865 = vrsqrt.pop %v1659
        %v1866 = vmul.f32 %v1659, %v1865
        %vm1867 = vcmp.eq.f32.partialorder %v1659, inf
        %v1868 = vsel %vm1867, %v1659, %v1866
        %vm1869 = vcmp.eq.f32.partialorder %v1659, 0.0
        %v1870 = vand.u32 %v1659, 2147483648
        %v1871 = vsel %vm1869, %v1870, %v1868
        %v1872 = vrsqrt.pop %v1660
        %v1873 = vmul.f32 %v1660, %v1872
        %vm1874 = vcmp.eq.f32.partialorder %v1660, inf
        %v1875 = vsel %vm1874, %v1660, %v1873
        %vm1876 = vcmp.eq.f32.partialorder %v1660, 0.0
        %v1877 = vand.u32 %v1660, 2147483648
        %v1878 = vsel %vm1876, %v1877, %v1875
        %v1879 = vrsqrt.pop %v1661
        %v1880 = vmul.f32 %v1661, %v1879
        %vm1881 = vcmp.eq.f32.partialorder %v1661, inf
        %v1882 = vsel %vm1881, %v1661, %v1880
        %vm1883 = vcmp.eq.f32.partialorder %v1661, 0.0
        %v1884 = vand.u32 %v1661, 2147483648
        %v1885 = vsel %vm1883, %v1884, %v1882
        %v1886 = vld [vmem:[%s738] sm:$0xff]
        %v1887 = vld [vmem:[%s738 + $0x8] sm:$0xff]
        %v1888 = vld [vmem:[%s738 + $0x10] sm:$0xff]
        %v1889 = vld [vmem:[%s738 + $0x18] sm:$0xff]
        %v1890 = vld [vmem:[%s738 + $0x20] sm:$0xff]
        %v1891 = vld [vmem:[%s738 + $0x28] sm:$0xff]
        %v1892 = vld [vmem:[%s738 + $0x30] sm:$0xff]
        %v1893 = vld [vmem:[%s738 + $0x38] sm:$0xff]
        %v1894 = vld [vmem:[%s738 + $0x40] sm:$0xff]
        %v1895 = vld [vmem:[%s738 + $0x48] sm:$0xff]
        %v1896 = vld [vmem:[%s738 + $0x50] sm:$0xff]
        %v1897 = vld [vmem:[%s738 + $0x58] sm:$0xff]
        %v1898 = vld [vmem:[%s738 + $0x60] sm:$0xff]
        %v1899 = vld [vmem:[%s738 + $0x68] sm:$0xff]
        %v1900 = vld [vmem:[%s738 + $0x70] sm:$0xff]
        %v1901 = vld [vmem:[%s738 + $0x78] sm:$0xff]
        %v1902 = vld [vmem:[%s738 + $0x80] sm:$0xff]
        %v1903 = vld [vmem:[%s738 + $0x88] sm:$0xff]
        %v1904 = vld [vmem:[%s738 + $0x90] sm:$0xff]
        %v1905 = vld [vmem:[%s738 + $0x98] sm:$0xff]
        %v1906 = vld [vmem:[%s738 + $0xa0] sm:$0xff]
        %v1907 = vld [vmem:[%s738 + $0xa8] sm:$0xff]
        %v1908 = vld [vmem:[%s738 + $0xb0] sm:$0xff]
        %v1909 = vld [vmem:[%s738 + $0xb8] sm:$0xff]
        %v1910 = vld [vmem:[%s738 + $0xc0] sm:$0xff]
        %v1911 = vld [vmem:[%s738 + $0xc8] sm:$0xff]
        %v1912 = vld [vmem:[%s738 + $0xd0] sm:$0xff]
        %v1913 = vld [vmem:[%s738 + $0xd8] sm:$0xff]
        %v1914 = vld [vmem:[%s738 + $0xe0] sm:$0xff]
        %v1915 = vld [vmem:[%s738 + $0xe8] sm:$0xff]
        %v1916 = vld [vmem:[%s738 + $0xf0] sm:$0xff]
        %v1917 = vld [vmem:[%s738 + $0xf8] sm:$0xff]
        %v1918 = vpack.c.bf16 %v1887, %v1886
        %v1919 = vpack.c.bf16 %v1889, %v1888
        %v1920 = vpack.c.bf16 %v1891, %v1890
        %v1921 = vpack.c.bf16 %v1893, %v1892
        %v1922 = vpack.c.bf16 %v1895, %v1894
        %v1923 = vpack.c.bf16 %v1897, %v1896
        %v1924 = vpack.c.bf16 %v1899, %v1898
        %v1925 = vpack.c.bf16 %v1901, %v1900
        %v1926 = vpack.c.bf16 %v1903, %v1902
        %v1927 = vpack.c.bf16 %v1905, %v1904
        %v1928 = vpack.c.bf16 %v1907, %v1906
        %v1929 = vpack.c.bf16 %v1909, %v1908
        %v1930 = vpack.c.bf16 %v1911, %v1910
        %v1931 = vpack.c.bf16 %v1913, %v1912
        %v1932 = vpack.c.bf16 %v1915, %v1914
        %v1933 = vpack.c.bf16 %v1917, %v1916
        %v1934 = vld [vmem:[%s3] sm:$0xf]
        %v1935 = vld [vmem:[%s3 + $0x4] sm:$0xf]
        %v1936 = vld [vmem:[%s3 + $0x8] sm:$0xf]
        %v1937 = vld [vmem:[%s3 + $0xc] sm:$0xf]
        %v1938 = vld [vmem:[%s3 + $0x10] sm:$0xf]
        %v1939 = vld [vmem:[%s3 + $0x14] sm:$0xf]
        %v1940 = vld [vmem:[%s3 + $0x18] sm:$0xf]
        %v1941 = vld [vmem:[%s3 + $0x1c] sm:$0xf]
        %v1942 = vld [vmem:[%s3 + $0x20] sm:$0xf]
        %v1943 = vld [vmem:[%s3 + $0x24] sm:$0xf]
        %v1944 = vld [vmem:[%s3 + $0x28] sm:$0xf]
        %v1945 = vld [vmem:[%s3 + $0x2c] sm:$0xf]
        %v1946 = vld [vmem:[%s3 + $0x30] sm:$0xf]
        %v1947 = vld [vmem:[%s3 + $0x34] sm:$0xf]
        %v1948 = vld [vmem:[%s3 + $0x38] sm:$0xf]
        %v1949 = vld [vmem:[%s3 + $0x3c] sm:$0xf]
        %v1950 = vpack.c.bf16 %v1675, %v1668
        %v1951 = vpack.c.bf16 %v1689, %v1682
        %v1952 = vpack.c.bf16 %v1703, %v1696
        %v1953 = vpack.c.bf16 %v1717, %v1710
        %v1954 = vpack.c.bf16 %v1731, %v1724
        %v1955 = vpack.c.bf16 %v1745, %v1738
        %v1956 = vpack.c.bf16 %v1759, %v1752
        %v1957 = vpack.c.bf16 %v1773, %v1766
        %v1958 = vpack.c.bf16 %v1787, %v1780
        %v1959 = vpack.c.bf16 %v1801, %v1794
        %v1960 = vpack.c.bf16 %v1815, %v1808
        %v1961 = vpack.c.bf16 %v1829, %v1822
        %v1962 = vpack.c.bf16 %v1843, %v1836
        %v1963 = vpack.c.bf16 %v1857, %v1850
        %v1964 = vpack.c.bf16 %v1871, %v1864
        %v1965 = vpack.c.bf16 %v1885, %v1878
        %v1966 = vld [vmem:[%s4] sm:$0xf]
        %v1967 = vld [vmem:[%s4 + $0x4] sm:$0xf]
        %v1968 = vld [vmem:[%s4 + $0x8] sm:$0xf]
        %v1969 = vld [vmem:[%s4 + $0xc] sm:$0xf]
        %v1970 = vld [vmem:[%s4 + $0x10] sm:$0xf]
        %v1971 = vld [vmem:[%s4 + $0x14] sm:$0xf]
        %v1972 = vld [vmem:[%s4 + $0x18] sm:$0xf]
        %v1973 = vld [vmem:[%s4 + $0x1c] sm:$0xf]
        %v1974 = vld [vmem:[%s4 + $0x20] sm:$0xf]
        %v1975 = vld [vmem:[%s4 + $0x24] sm:$0xf]
        %v1976 = vld [vmem:[%s4 + $0x28] sm:$0xf]
        %v1977 = vld [vmem:[%s4 + $0x2c] sm:$0xf]
        %v1978 = vld [vmem:[%s4 + $0x30] sm:$0xf]
        %v1979 = vld [vmem:[%s4 + $0x34] sm:$0xf]
        %v1980 = vld [vmem:[%s4 + $0x38] sm:$0xf]
        %v1981 = vld [vmem:[%s4 + $0x3c] sm:$0xf]
        %v1998 = vunpack.c.l.b16 %v1966
        %v1999 = vunpack.c.l.b16 %v1967
        %v2000 = vunpack.c.l.b16 %v1968
        %v2001 = vunpack.c.l.b16 %v1969
        %v2002 = vunpack.c.l.b16 %v1970
        %v2003 = vunpack.c.l.b16 %v1971
        %v2004 = vunpack.c.l.b16 %v1972
        %v2005 = vunpack.c.l.b16 %v1973
        %v2006 = vunpack.c.l.b16 %v1974
        %v2007 = vunpack.c.l.b16 %v1975
        %v2008 = vunpack.c.l.b16 %v1976
        %v2009 = vunpack.c.l.b16 %v1977
        %v2010 = vunpack.c.l.b16 %v1978
        %v2011 = vunpack.c.l.b16 %v1979
        %v2012 = vunpack.c.l.b16 %v1980
        %v2013 = vunpack.c.l.b16 %v1981
        %v2014 = vpack.c.b16 %v1999, %v1998
        %v2015 = vpack.c.b16 %v2001, %v2000
        %v2016 = vpack.c.b16 %v2003, %v2002
        %v2017 = vpack.c.b16 %v2005, %v2004
        %v2018 = vpack.c.b16 %v2007, %v2006
        %v2019 = vpack.c.b16 %v2009, %v2008
        %v2020 = vpack.c.b16 %v2011, %v2010
        %v2021 = vpack.c.b16 %v2013, %v2012
        %2030 = vmatprep.subr.bf16.mxu0 0
        %2031 = vmatpush1.bf16.msra.mxu0 %v2021
        %2032 = vmatprep.subr.bf16.mxu0 0
        %2033 = vmatpush1.bf16.msra.mxu0 %v2020
        %2034 = vmatprep.subr.bf16.mxu0 0
        %2035 = vmatpush1.bf16.msra.mxu0 %v2019
        %2036 = vmatprep.subr.bf16.mxu0 0
        %2037 = vmatpush1.bf16.msra.mxu0 %v2018
        %2038 = vmatprep.subr.bf16.mxu0 0
        %2039 = vmatpush1.bf16.msra.mxu0 %v2017
        %2040 = vmatprep.subr.bf16.mxu0 0
        %2041 = vmatpush1.bf16.msra.mxu0 %v2016
        %2042 = vmatprep.subr.bf16.mxu0 0
        %2043 = vmatpush1.bf16.msra.mxu0 %v2015
        %2044 = vmatprep.subr.bf16.mxu0 0
        %2045 = vmatpush1.bf16.msra.mxu0 %v2014
        %2046 = vmatprep.subr.bf16.mxu0 0
        %2047 = vmatpush2.bf16.msra.mxu0 0
        %2048 = vmatprep.subr.bf16.mxu0 0
        %2049 = vmatpush2.bf16.msra.mxu0 0
        %2050 = vmatprep.subr.bf16.mxu0 0
        %2051 = vmatpush2.bf16.msra.mxu0 0
        %2052 = vmatprep.subr.bf16.mxu0 0
        %2053 = vmatpush2.bf16.msra.mxu0 0
        %2054 = vmatprep.subr.bf16.mxu0 0
        %2055 = vmatpush2.bf16.msra.mxu0 0
        %2056 = vmatprep.subr.bf16.mxu0 0
        %2057 = vmatpush2.bf16.msra.mxu0 0
        %2058 = vmatprep.subr.bf16.mxu0 0
        %2059 = vmatpush2.bf16.msra.mxu0 0
        %2060 = vmatprep.subr.bf16.mxu0 0
        %2061 = vmatpush2.bf16.msra.mxu0 0
        %2062 = vmatprep.mubr.bf16.mxu0 0
        %2063 = vmatmul.mubr.bf16.gmra.mxu0 %v1950
        %v2064 = vpop.f32.mrf.mxu0
        %v2065 = vadd.f32 0.0, %v2064
        %v2066 = vpop.f32.mrf.mxu0
        %v2067 = vpop.f32.mrf.mxu0
        %v2068 = vadd.f32 0.0, %v2067
        %v2069 = vpop.f32.mrf.mxu0
        %2070 = vmatprep.mubr.bf16.mxu0 0
        %2071 = vmatmul.mubr.bf16.gmra.mxu0 %v1951
        %v2072 = vpop.f32.mrf.mxu0
        %v2073 = vadd.f32 0.0, %v2072
        %v2074 = vpop.f32.mrf.mxu0
        %v2075 = vpop.f32.mrf.mxu0
        %v2076 = vadd.f32 0.0, %v2075
        %v2077 = vpop.f32.mrf.mxu0
        %2078 = vmatprep.mubr.bf16.mxu0 0
        %2079 = vmatmul.mubr.bf16.gmra.mxu0 %v1952
        %v2080 = vpop.f32.mrf.mxu0
        %v2081 = vadd.f32 0.0, %v2080
        %v2082 = vpop.f32.mrf.mxu0
        %v2083 = vpop.f32.mrf.mxu0
        %v2084 = vadd.f32 0.0, %v2083
        %v2085 = vpop.f32.mrf.mxu0
        %2086 = vmatprep.mubr.bf16.mxu0 0
        %2087 = vmatmul.mubr.bf16.gmra.mxu0 %v1953
        %v2088 = vpop.f32.mrf.mxu0
        %v2089 = vadd.f32 0.0, %v2088
        %v2090 = vpop.f32.mrf.mxu0
        %v2091 = vpop.f32.mrf.mxu0
        %v2092 = vadd.f32 0.0, %v2091
        %v2093 = vpop.f32.mrf.mxu0
        %2094 = vmatprep.mubr.bf16.mxu0 0
        %2095 = vmatmul.mubr.bf16.gmra.mxu0 %v1954
        %v2096 = vpop.f32.mrf.mxu0
        %v2097 = vadd.f32 0.0, %v2096
        %v2098 = vpop.f32.mrf.mxu0
        %v2099 = vpop.f32.mrf.mxu0
        %v2100 = vadd.f32 0.0, %v2099
        %v2101 = vpop.f32.mrf.mxu0
        %2102 = vmatprep.mubr.bf16.mxu0 0
        %2103 = vmatmul.mubr.bf16.gmra.mxu0 %v1955
        %v2104 = vpop.f32.mrf.mxu0
        %v2105 = vadd.f32 0.0, %v2104
        %v2106 = vpop.f32.mrf.mxu0
        %v2107 = vpop.f32.mrf.mxu0
        %v2108 = vadd.f32 0.0, %v2107
        %v2109 = vpop.f32.mrf.mxu0
        %2110 = vmatprep.mubr.bf16.mxu0 0
        %2111 = vmatmul.mubr.bf16.gmra.mxu0 %v1956
        %v2112 = vpop.f32.mrf.mxu0
        %v2113 = vadd.f32 0.0, %v2112
        %v2114 = vpop.f32.mrf.mxu0
        %v2115 = vpop.f32.mrf.mxu0
        %v2116 = vadd.f32 0.0, %v2115
        %v2117 = vpop.f32.mrf.mxu0
        %2118 = vmatprep.mubr.bf16.mxu0 0
        %2119 = vmatmul.mubr.bf16.gmra.mxu0 %v1957
        %v2120 = vpop.f32.mrf.mxu0
        %v2121 = vadd.f32 0.0, %v2120
        %v2122 = vpop.f32.mrf.mxu0
        %v2123 = vpop.f32.mrf.mxu0
        %v2124 = vadd.f32 0.0, %v2123
        %v2125 = vpop.f32.mrf.mxu0
        %2126 = vmatprep.mubr.bf16.mxu0 0
        %2127 = vmatmul.mubr.bf16.gmra.mxu0 %v1958
        %v2128 = vpop.f32.mrf.mxu0
        %v2129 = vadd.f32 0.0, %v2128
        %v2130 = vpop.f32.mrf.mxu0
        %v2131 = vpop.f32.mrf.mxu0
        %v2132 = vadd.f32 0.0, %v2131
        %v2133 = vpop.f32.mrf.mxu0
        %2134 = vmatprep.mubr.bf16.mxu0 0
        %2135 = vmatmul.mubr.bf16.gmra.mxu0 %v1959
        %v2136 = vpop.f32.mrf.mxu0
        %v2137 = vadd.f32 0.0, %v2136
        %v2138 = vpop.f32.mrf.mxu0
        %v2139 = vpop.f32.mrf.mxu0
        %v2140 = vadd.f32 0.0, %v2139
        %v2141 = vpop.f32.mrf.mxu0
        %2142 = vmatprep.mubr.bf16.mxu0 0
        %2143 = vmatmul.mubr.bf16.gmra.mxu0 %v1960
        %v2144 = vpop.f32.mrf.mxu0
        %v2145 = vadd.f32 0.0, %v2144
        %v2146 = vpop.f32.mrf.mxu0
        %v2147 = vpop.f32.mrf.mxu0
        %v2148 = vadd.f32 0.0, %v2147
        %v2149 = vpop.f32.mrf.mxu0
        %2150 = vmatprep.mubr.bf16.mxu0 0
        %2151 = vmatmul.mubr.bf16.gmra.mxu0 %v1961
        %v2152 = vpop.f32.mrf.mxu0
        %v2153 = vadd.f32 0.0, %v2152
        %v2154 = vpop.f32.mrf.mxu0
        %v2155 = vpop.f32.mrf.mxu0
        %v2156 = vadd.f32 0.0, %v2155
        %v2157 = vpop.f32.mrf.mxu0
        %2158 = vmatprep.mubr.bf16.mxu0 0
        %2159 = vmatmul.mubr.bf16.gmra.mxu0 %v1962
        %v2160 = vpop.f32.mrf.mxu0
        %v2161 = vadd.f32 0.0, %v2160
        %v2162 = vpop.f32.mrf.mxu0
        %v2163 = vpop.f32.mrf.mxu0
        %v2164 = vadd.f32 0.0, %v2163
        %v2165 = vpop.f32.mrf.mxu0
        %2166 = vmatprep.mubr.bf16.mxu0 0
        %2167 = vmatmul.mubr.bf16.gmra.mxu0 %v1963
        %v2168 = vpop.f32.mrf.mxu0
        %v2169 = vadd.f32 0.0, %v2168
        %v2170 = vpop.f32.mrf.mxu0
        %v2171 = vpop.f32.mrf.mxu0
        %v2172 = vadd.f32 0.0, %v2171
        %v2173 = vpop.f32.mrf.mxu0
        %2174 = vmatprep.mubr.bf16.mxu0 0
        %2175 = vmatmul.mubr.bf16.gmra.mxu0 %v1964
        %v2176 = vpop.f32.mrf.mxu0
        %v2177 = vadd.f32 0.0, %v2176
        %v2178 = vpop.f32.mrf.mxu0
        %v2179 = vpop.f32.mrf.mxu0
        %v2180 = vadd.f32 0.0, %v2179
        %v2181 = vpop.f32.mrf.mxu0
        %2182 = vmatprep.mubr.bf16.mxu0 0
        %2183 = vmatmul.mubr.bf16.gmra.mxu0 %v1965
        %v2184 = vpop.f32.mrf.mxu0
        %v2185 = vadd.f32 0.0, %v2184
        %v2186 = vpop.f32.mrf.mxu0
        %v2187 = vpop.f32.mrf.mxu0
        %v2188 = vadd.f32 0.0, %v2187
        %v2189 = vpop.f32.mrf.mxu0
        %2190 = vdwg.mxu0
        %v2207 = vunpack.c.l.b16 %v1934
        %v2208 = vunpack.c.l.b16 %v1935
        %v2209 = vunpack.c.l.b16 %v1936
        %v2210 = vunpack.c.l.b16 %v1937
        %v2211 = vunpack.c.l.b16 %v1938
        %v2212 = vunpack.c.l.b16 %v1939
        %v2213 = vunpack.c.l.b16 %v1940
        %v2214 = vunpack.c.l.b16 %v1941
        %v2215 = vunpack.c.l.b16 %v1942
        %v2216 = vunpack.c.l.b16 %v1943
        %v2217 = vunpack.c.l.b16 %v1944
        %v2218 = vunpack.c.l.b16 %v1945
        %v2219 = vunpack.c.l.b16 %v1946
        %v2220 = vunpack.c.l.b16 %v1947
        %v2221 = vunpack.c.l.b16 %v1948
        %v2222 = vunpack.c.l.b16 %v1949
        %v2223 = vpack.c.b16 %v2208, %v2207
        %v2224 = vpack.c.b16 %v2210, %v2209
        %v2225 = vpack.c.b16 %v2212, %v2211
        %v2226 = vpack.c.b16 %v2214, %v2213
        %v2227 = vpack.c.b16 %v2216, %v2215
        %v2228 = vpack.c.b16 %v2218, %v2217
        %v2229 = vpack.c.b16 %v2220, %v2219
        %v2230 = vpack.c.b16 %v2222, %v2221
        %2239 = vmatprep.subr.bf16.mxu0 0
        %2240 = vmatpush1.bf16.msra.mxu0 %v2230
        %2241 = vmatprep.subr.bf16.mxu0 0
        %2242 = vmatpush1.bf16.msra.mxu0 %v2229
        %2243 = vmatprep.subr.bf16.mxu0 0
        %2244 = vmatpush1.bf16.msra.mxu0 %v2228
        %2245 = vmatprep.subr.bf16.mxu0 0
        %2246 = vmatpush1.bf16.msra.mxu0 %v2227
        %2247 = vmatprep.subr.bf16.mxu0 0
        %2248 = vmatpush1.bf16.msra.mxu0 %v2226
        %2249 = vmatprep.subr.bf16.mxu0 0
        %2250 = vmatpush1.bf16.msra.mxu0 %v2225
        %2251 = vmatprep.subr.bf16.mxu0 0
        %2252 = vmatpush1.bf16.msra.mxu0 %v2224
        %2253 = vmatprep.subr.bf16.mxu0 0
        %2254 = vmatpush1.bf16.msra.mxu0 %v2223
        %2255 = vmatprep.subr.bf16.mxu0 0
        %2256 = vmatpush2.bf16.msra.mxu0 0
        %2257 = vmatprep.subr.bf16.mxu0 0
        %2258 = vmatpush2.bf16.msra.mxu0 0
        %2259 = vmatprep.subr.bf16.mxu0 0
        %2260 = vmatpush2.bf16.msra.mxu0 0
        %2261 = vmatprep.subr.bf16.mxu0 0
        %2262 = vmatpush2.bf16.msra.mxu0 0
        %2263 = vmatprep.subr.bf16.mxu0 0
        %2264 = vmatpush2.bf16.msra.mxu0 0
        %2265 = vmatprep.subr.bf16.mxu0 0
        %2266 = vmatpush2.bf16.msra.mxu0 0
        %2267 = vmatprep.subr.bf16.mxu0 0
        %2268 = vmatpush2.bf16.msra.mxu0 0
        %2269 = vmatprep.subr.bf16.mxu0 0
        %2270 = vmatpush2.bf16.msra.mxu0 0
        %2271 = vmatprep.mubr.bf16.mxu0 0
        %2272 = vmatmul.mubr.bf16.gmra.mxu0 %v1918
        %v2273 = vpop.f32.mrf.mxu0
        %v2274 = vadd.f32 %v2065, %v2273
        %v2275 = vpop.f32.mrf.mxu0
        %v2276 = vpop.f32.mrf.mxu0
        %v2277 = vadd.f32 %v2068, %v2276
        %v2278 = vpop.f32.mrf.mxu0
        %2279 = vmatprep.mubr.bf16.mxu0 0
        %2280 = vmatmul.mubr.bf16.gmra.mxu0 %v1919
        %v2281 = vpop.f32.mrf.mxu0
        %v2282 = vadd.f32 %v2073, %v2281
        %v2283 = vpop.f32.mrf.mxu0
        %v2284 = vpop.f32.mrf.mxu0
        %v2285 = vadd.f32 %v2076, %v2284
        %v2286 = vpop.f32.mrf.mxu0
        %2287 = vmatprep.mubr.bf16.mxu0 0
        %2288 = vmatmul.mubr.bf16.gmra.mxu0 %v1920
        %v2289 = vpop.f32.mrf.mxu0
        %v2290 = vadd.f32 %v2081, %v2289
        %v2291 = vpop.f32.mrf.mxu0
        %v2292 = vpop.f32.mrf.mxu0
        %v2293 = vadd.f32 %v2084, %v2292
        %v2294 = vpop.f32.mrf.mxu0
        %2295 = vmatprep.mubr.bf16.mxu0 0
        %2296 = vmatmul.mubr.bf16.gmra.mxu0 %v1921
        %v2297 = vpop.f32.mrf.mxu0
        %v2298 = vadd.f32 %v2089, %v2297
        %v2299 = vpop.f32.mrf.mxu0
        %v2300 = vpop.f32.mrf.mxu0
        %v2301 = vadd.f32 %v2092, %v2300
        %v2302 = vpop.f32.mrf.mxu0
        %2303 = vmatprep.mubr.bf16.mxu0 0
        %2304 = vmatmul.mubr.bf16.gmra.mxu0 %v1922
        %v2305 = vpop.f32.mrf.mxu0
        %v2306 = vadd.f32 %v2097, %v2305
        %v2307 = vpop.f32.mrf.mxu0
        %v2308 = vpop.f32.mrf.mxu0
        %v2309 = vadd.f32 %v2100, %v2308
        %v2310 = vpop.f32.mrf.mxu0
        %2311 = vmatprep.mubr.bf16.mxu0 0
        %2312 = vmatmul.mubr.bf16.gmra.mxu0 %v1923
        %v2313 = vpop.f32.mrf.mxu0
        %v2314 = vadd.f32 %v2105, %v2313
        %v2315 = vpop.f32.mrf.mxu0
        %v2316 = vpop.f32.mrf.mxu0
        %v2317 = vadd.f32 %v2108, %v2316
        %v2318 = vpop.f32.mrf.mxu0
        %2319 = vmatprep.mubr.bf16.mxu0 0
        %2320 = vmatmul.mubr.bf16.gmra.mxu0 %v1924
        %v2321 = vpop.f32.mrf.mxu0
        %v2322 = vadd.f32 %v2113, %v2321
        %v2323 = vpop.f32.mrf.mxu0
        %v2324 = vpop.f32.mrf.mxu0
        %v2325 = vadd.f32 %v2116, %v2324
        %v2326 = vpop.f32.mrf.mxu0
        %2327 = vmatprep.mubr.bf16.mxu0 0
        %2328 = vmatmul.mubr.bf16.gmra.mxu0 %v1925
        %v2329 = vpop.f32.mrf.mxu0
        %v2330 = vadd.f32 %v2121, %v2329
        %v2331 = vpop.f32.mrf.mxu0
        %v2332 = vpop.f32.mrf.mxu0
        %v2333 = vadd.f32 %v2124, %v2332
        %v2334 = vpop.f32.mrf.mxu0
        %2335 = vmatprep.mubr.bf16.mxu0 0
        %2336 = vmatmul.mubr.bf16.gmra.mxu0 %v1926
        %v2337 = vpop.f32.mrf.mxu0
        %v2338 = vadd.f32 %v2129, %v2337
        %v2339 = vpop.f32.mrf.mxu0
        %v2340 = vpop.f32.mrf.mxu0
        %v2341 = vadd.f32 %v2132, %v2340
        %v2342 = vpop.f32.mrf.mxu0
        %2343 = vmatprep.mubr.bf16.mxu0 0
        %2344 = vmatmul.mubr.bf16.gmra.mxu0 %v1927
        %v2345 = vpop.f32.mrf.mxu0
        %v2346 = vadd.f32 %v2137, %v2345
        %v2347 = vpop.f32.mrf.mxu0
        %v2348 = vpop.f32.mrf.mxu0
        %v2349 = vadd.f32 %v2140, %v2348
        %v2350 = vpop.f32.mrf.mxu0
        %2351 = vmatprep.mubr.bf16.mxu0 0
        %2352 = vmatmul.mubr.bf16.gmra.mxu0 %v1928
        %v2353 = vpop.f32.mrf.mxu0
        %v2354 = vadd.f32 %v2145, %v2353
        %v2355 = vpop.f32.mrf.mxu0
        %v2356 = vpop.f32.mrf.mxu0
        %v2357 = vadd.f32 %v2148, %v2356
        %v2358 = vpop.f32.mrf.mxu0
        %2359 = vmatprep.mubr.bf16.mxu0 0
        %2360 = vmatmul.mubr.bf16.gmra.mxu0 %v1929
        %v2361 = vpop.f32.mrf.mxu0
        %v2362 = vadd.f32 %v2153, %v2361
        %v2363 = vpop.f32.mrf.mxu0
        %v2364 = vpop.f32.mrf.mxu0
        %v2365 = vadd.f32 %v2156, %v2364
        %v2366 = vpop.f32.mrf.mxu0
        %2367 = vmatprep.mubr.bf16.mxu0 0
        %2368 = vmatmul.mubr.bf16.gmra.mxu0 %v1930
        %v2369 = vpop.f32.mrf.mxu0
        %v2370 = vadd.f32 %v2161, %v2369
        %v2371 = vpop.f32.mrf.mxu0
        %v2372 = vpop.f32.mrf.mxu0
        %v2373 = vadd.f32 %v2164, %v2372
        %v2374 = vpop.f32.mrf.mxu0
        %2375 = vmatprep.mubr.bf16.mxu0 0
        %2376 = vmatmul.mubr.bf16.gmra.mxu0 %v1931
        %v2377 = vpop.f32.mrf.mxu0
        %v2378 = vadd.f32 %v2169, %v2377
        %v2379 = vpop.f32.mrf.mxu0
        %v2380 = vpop.f32.mrf.mxu0
        %v2381 = vadd.f32 %v2172, %v2380
        %v2382 = vpop.f32.mrf.mxu0
        %2383 = vmatprep.mubr.bf16.mxu0 0
        %2384 = vmatmul.mubr.bf16.gmra.mxu0 %v1932
        %v2385 = vpop.f32.mrf.mxu0
        %v2386 = vadd.f32 %v2177, %v2385
        %v2387 = vpop.f32.mrf.mxu0
        %v2388 = vpop.f32.mrf.mxu0
        %v2389 = vadd.f32 %v2180, %v2388
        %v2390 = vpop.f32.mrf.mxu0
        %2391 = vmatprep.mubr.bf16.mxu0 0
        %2392 = vmatmul.mubr.bf16.gmra.mxu0 %v1933
        %v2393 = vpop.f32.mrf.mxu0
        %v2394 = vadd.f32 %v2185, %v2393
        %v2395 = vpop.f32.mrf.mxu0
        %v2396 = vpop.f32.mrf.mxu0
        %v2397 = vadd.f32 %v2188, %v2396
        %v2398 = vpop.f32.mrf.mxu0
        %2399 = vdwg.mxu0
        %v2400 = vld [vmem:[%s5] sm:$0x1]
        %v2402 = vlaneseq
        %v2403 = vshrl.u32 %v2402, 7
        %v2404 = vsub.s32 0, %v2403
        %v2405 = vrot.slane %v2400, %v2404
        %v2407 = vadd.f32 %v2274, %v2405
        %v2408 = vadd.f32 %v2277, %v2405
        %v2409 = vadd.f32 %v2282, %v2405
        %v2410 = vadd.f32 %v2285, %v2405
        %v2411 = vadd.f32 %v2290, %v2405
        %v2412 = vadd.f32 %v2293, %v2405
        %v2413 = vadd.f32 %v2298, %v2405
        %v2414 = vadd.f32 %v2301, %v2405
        %v2415 = vadd.f32 %v2306, %v2405
        %v2416 = vadd.f32 %v2309, %v2405
        %v2417 = vadd.f32 %v2314, %v2405
        %v2418 = vadd.f32 %v2317, %v2405
        %v2419 = vadd.f32 %v2322, %v2405
        %v2420 = vadd.f32 %v2325, %v2405
        %v2421 = vadd.f32 %v2330, %v2405
        %v2422 = vadd.f32 %v2333, %v2405
        %v2423 = vadd.f32 %v2338, %v2405
        %v2424 = vadd.f32 %v2341, %v2405
        %v2425 = vadd.f32 %v2346, %v2405
        %v2426 = vadd.f32 %v2349, %v2405
        %v2427 = vadd.f32 %v2354, %v2405
        %v2428 = vadd.f32 %v2357, %v2405
        %v2429 = vadd.f32 %v2362, %v2405
        %v2430 = vadd.f32 %v2365, %v2405
        %v2431 = vadd.f32 %v2370, %v2405
        %v2432 = vadd.f32 %v2373, %v2405
        %v2433 = vadd.f32 %v2378, %v2405
        %v2434 = vadd.f32 %v2381, %v2405
        %v2435 = vadd.f32 %v2386, %v2405
        %v2436 = vadd.f32 %v2389, %v2405
        %v2437 = vadd.f32 %v2394, %v2405
        %v2438 = vadd.f32 %v2397, %v2405
        %v2439 = vxor.u32 %v2407, 2147483648
        %v2440 = vxor.u32 %v2408, 2147483648
        %v2441 = vxor.u32 %v2409, 2147483648
        %v2442 = vxor.u32 %v2410, 2147483648
        %v2443 = vxor.u32 %v2411, 2147483648
        %v2444 = vxor.u32 %v2412, 2147483648
        %v2445 = vxor.u32 %v2413, 2147483648
        %v2446 = vxor.u32 %v2414, 2147483648
        %v2447 = vxor.u32 %v2415, 2147483648
        %v2448 = vxor.u32 %v2416, 2147483648
        %v2449 = vxor.u32 %v2417, 2147483648
        %v2450 = vxor.u32 %v2418, 2147483648
        %v2451 = vxor.u32 %v2419, 2147483648
        %v2452 = vxor.u32 %v2420, 2147483648
        %v2453 = vxor.u32 %v2421, 2147483648
        %v2454 = vxor.u32 %v2422, 2147483648
        %v2455 = vxor.u32 %v2423, 2147483648
        %v2456 = vxor.u32 %v2424, 2147483648
        %v2457 = vxor.u32 %v2425, 2147483648
        %v2458 = vxor.u32 %v2426, 2147483648
        %v2459 = vxor.u32 %v2427, 2147483648
        %v2460 = vxor.u32 %v2428, 2147483648
        %v2461 = vxor.u32 %v2429, 2147483648
        %v2462 = vxor.u32 %v2430, 2147483648
        %v2463 = vxor.u32 %v2431, 2147483648
        %v2464 = vxor.u32 %v2432, 2147483648
        %v2465 = vxor.u32 %v2433, 2147483648
        %v2466 = vxor.u32 %v2434, 2147483648
        %v2467 = vxor.u32 %v2435, 2147483648
        %v2468 = vxor.u32 %v2436, 2147483648
        %v2469 = vxor.u32 %v2437, 2147483648
        %v2470 = vxor.u32 %v2438, 2147483648
        %v2471 = vmul.f32 %v2439, 1.442695
        %v2472 = vpow.pop %v2471
        %v2473 = vmul.f32 %v2440, 1.442695
        %v2474 = vpow.pop %v2473
        %v2475 = vmul.f32 %v2441, 1.442695
        %v2476 = vpow.pop %v2475
        %v2477 = vmul.f32 %v2442, 1.442695
        %v2478 = vpow.pop %v2477
        %v2479 = vmul.f32 %v2443, 1.442695
        %v2480 = vpow.pop %v2479
        %v2481 = vmul.f32 %v2444, 1.442695
        %v2482 = vpow.pop %v2481
        %v2483 = vmul.f32 %v2445, 1.442695
        %v2484 = vpow.pop %v2483
        %v2485 = vmul.f32 %v2446, 1.442695
        %v2486 = vpow.pop %v2485
        %v2487 = vmul.f32 %v2447, 1.442695
        %v2488 = vpow.pop %v2487
        %v2489 = vmul.f32 %v2448, 1.442695
        %v2490 = vpow.pop %v2489
        %v2491 = vmul.f32 %v2449, 1.442695
        %v2492 = vpow.pop %v2491
        %v2493 = vmul.f32 %v2450, 1.442695
        %v2494 = vpow.pop %v2493
        %v2495 = vmul.f32 %v2451, 1.442695
        %v2496 = vpow.pop %v2495
        %v2497 = vmul.f32 %v2452, 1.442695
        %v2498 = vpow.pop %v2497
        %v2499 = vmul.f32 %v2453, 1.442695
        %v2500 = vpow.pop %v2499
        %v2501 = vmul.f32 %v2454, 1.442695
        %v2502 = vpow.pop %v2501
        %v2503 = vmul.f32 %v2455, 1.442695
        %v2504 = vpow.pop %v2503
        %v2505 = vmul.f32 %v2456, 1.442695
        %v2506 = vpow.pop %v2505
        %v2507 = vmul.f32 %v2457, 1.442695
        %v2508 = vpow.pop %v2507
        %v2509 = vmul.f32 %v2458, 1.442695
        %v2510 = vpow.pop %v2509
        %v2511 = vmul.f32 %v2459, 1.442695
        %v2512 = vpow.pop %v2511
        %v2513 = vmul.f32 %v2460, 1.442695
        %v2514 = vpow.pop %v2513
        %v2515 = vmul.f32 %v2461, 1.442695
        %v2516 = vpow.pop %v2515
        %v2517 = vmul.f32 %v2462, 1.442695
        %v2518 = vpow.pop %v2517
        %v2519 = vmul.f32 %v2463, 1.442695
        %v2520 = vpow.pop %v2519
        %v2521 = vmul.f32 %v2464, 1.442695
        %v2522 = vpow.pop %v2521
        %v2523 = vmul.f32 %v2465, 1.442695
        %v2524 = vpow.pop %v2523
        %v2525 = vmul.f32 %v2466, 1.442695
        %v2526 = vpow.pop %v2525
        %v2527 = vmul.f32 %v2467, 1.442695
        %v2528 = vpow.pop %v2527
        %v2529 = vmul.f32 %v2468, 1.442695
        %v2530 = vpow.pop %v2529
        %v2531 = vmul.f32 %v2469, 1.442695
        %v2532 = vpow.pop %v2531
        %v2533 = vmul.f32 %v2470, 1.442695
        %v2534 = vpow.pop %v2533
        %v2535 = vadd.f32 %v2472, 1.0
        %v2536 = vadd.f32 %v2474, 1.0
        %v2537 = vadd.f32 %v2476, 1.0
        %v2538 = vadd.f32 %v2478, 1.0
        %v2539 = vadd.f32 %v2480, 1.0
        %v2540 = vadd.f32 %v2482, 1.0
        %v2541 = vadd.f32 %v2484, 1.0
        %v2542 = vadd.f32 %v2486, 1.0
        %v2543 = vadd.f32 %v2488, 1.0
        %v2544 = vadd.f32 %v2490, 1.0
        %v2545 = vadd.f32 %v2492, 1.0
        %v2546 = vadd.f32 %v2494, 1.0
        %v2547 = vadd.f32 %v2496, 1.0
        %v2548 = vadd.f32 %v2498, 1.0
        %v2549 = vadd.f32 %v2500, 1.0
        %v2550 = vadd.f32 %v2502, 1.0
        %v2551 = vadd.f32 %v2504, 1.0
        %v2552 = vadd.f32 %v2506, 1.0
        %v2553 = vadd.f32 %v2508, 1.0
        %v2554 = vadd.f32 %v2510, 1.0
        %v2555 = vadd.f32 %v2512, 1.0
        %v2556 = vadd.f32 %v2514, 1.0
        %v2557 = vadd.f32 %v2516, 1.0
        %v2558 = vadd.f32 %v2518, 1.0
        %v2559 = vadd.f32 %v2520, 1.0
        %v2560 = vadd.f32 %v2522, 1.0
        %v2561 = vadd.f32 %v2524, 1.0
        %v2562 = vadd.f32 %v2526, 1.0
        %v2563 = vadd.f32 %v2528, 1.0
        %v2564 = vadd.f32 %v2530, 1.0
        %v2565 = vadd.f32 %v2532, 1.0
        %v2566 = vadd.f32 %v2534, 1.0
        %v2567 = vrcp.pop %v2535
        %v2568 = vmul.f32 1.0, %v2567
        %v2569 = vrcp.pop %v2536
        %v2570 = vmul.f32 1.0, %v2569
        %v2571 = vrcp.pop %v2537
        %v2572 = vmul.f32 1.0, %v2571
        %v2573 = vrcp.pop %v2538
        %v2574 = vmul.f32 1.0, %v2573
        %v2575 = vrcp.pop %v2539
        %v2576 = vmul.f32 1.0, %v2575
        %v2577 = vrcp.pop %v2540
        %v2578 = vmul.f32 1.0, %v2577
        %v2579 = vrcp.pop %v2541
        %v2580 = vmul.f32 1.0, %v2579
        %v2581 = vrcp.pop %v2542
        %v2582 = vmul.f32 1.0, %v2581
        %v2583 = vrcp.pop %v2543
        %v2584 = vmul.f32 1.0, %v2583
        %v2585 = vrcp.pop %v2544
        %v2586 = vmul.f32 1.0, %v2585
        %v2587 = vrcp.pop %v2545
        %v2588 = vmul.f32 1.0, %v2587
        %v2589 = vrcp.pop %v2546
        %v2590 = vmul.f32 1.0, %v2589
        %v2591 = vrcp.pop %v2547
        %v2592 = vmul.f32 1.0, %v2591
        %v2593 = vrcp.pop %v2548
        %v2594 = vmul.f32 1.0, %v2593
        %v2595 = vrcp.pop %v2549
        %v2596 = vmul.f32 1.0, %v2595
        %v2597 = vrcp.pop %v2550
        %v2598 = vmul.f32 1.0, %v2597
        %v2599 = vrcp.pop %v2551
        %v2600 = vmul.f32 1.0, %v2599
        %v2601 = vrcp.pop %v2552
        %v2602 = vmul.f32 1.0, %v2601
        %v2603 = vrcp.pop %v2553
        %v2604 = vmul.f32 1.0, %v2603
        %v2605 = vrcp.pop %v2554
        %v2606 = vmul.f32 1.0, %v2605
        %v2607 = vrcp.pop %v2555
        %v2608 = vmul.f32 1.0, %v2607
        %v2609 = vrcp.pop %v2556
        %v2610 = vmul.f32 1.0, %v2609
        %v2611 = vrcp.pop %v2557
        %v2612 = vmul.f32 1.0, %v2611
        %v2613 = vrcp.pop %v2558
        %v2614 = vmul.f32 1.0, %v2613
        %v2615 = vrcp.pop %v2559
        %v2616 = vmul.f32 1.0, %v2615
        %v2617 = vrcp.pop %v2560
        %v2618 = vmul.f32 1.0, %v2617
        %v2619 = vrcp.pop %v2561
        %v2620 = vmul.f32 1.0, %v2619
        %v2621 = vrcp.pop %v2562
        %v2622 = vmul.f32 1.0, %v2621
        %v2623 = vrcp.pop %v2563
        %v2624 = vmul.f32 1.0, %v2623
        %v2625 = vrcp.pop %v2564
        %v2626 = vmul.f32 1.0, %v2625
        %v2627 = vrcp.pop %v2565
        %v2628 = vmul.f32 1.0, %v2627
        %v2629 = vrcp.pop %v2566
        %v2630 = vmul.f32 1.0, %v2629
        %v2631 = vmul.f32 %v2407, %v2568
        %v2632 = vmul.f32 %v2408, %v2570
        %v2633 = vmul.f32 %v2409, %v2572
        %v2634 = vmul.f32 %v2410, %v2574
        %v2635 = vmul.f32 %v2411, %v2576
        %v2636 = vmul.f32 %v2412, %v2578
        %v2637 = vmul.f32 %v2413, %v2580
        %v2638 = vmul.f32 %v2414, %v2582
        %v2639 = vmul.f32 %v2415, %v2584
        %v2640 = vmul.f32 %v2416, %v2586
        %v2641 = vmul.f32 %v2417, %v2588
        %v2642 = vmul.f32 %v2418, %v2590
        %v2643 = vmul.f32 %v2419, %v2592
        %v2644 = vmul.f32 %v2420, %v2594
        %v2645 = vmul.f32 %v2421, %v2596
        %v2646 = vmul.f32 %v2422, %v2598
        %v2647 = vmul.f32 %v2423, %v2600
        %v2648 = vmul.f32 %v2424, %v2602
        %v2649 = vmul.f32 %v2425, %v2604
        %v2650 = vmul.f32 %v2426, %v2606
        %v2651 = vmul.f32 %v2427, %v2608
        %v2652 = vmul.f32 %v2428, %v2610
        %v2653 = vmul.f32 %v2429, %v2612
        %v2654 = vmul.f32 %v2430, %v2614
        %v2655 = vmul.f32 %v2431, %v2616
        %v2656 = vmul.f32 %v2432, %v2618
        %v2657 = vmul.f32 %v2433, %v2620
        %v2658 = vmul.f32 %v2434, %v2622
        %v2659 = vmul.f32 %v2435, %v2624
        %v2660 = vmul.f32 %v2436, %v2626
        %v2661 = vmul.f32 %v2437, %v2628
        %v2662 = vmul.f32 %v2438, %v2630
        %v2663 = vpack.c.bf16 %v2632, %v2631
        %v2664 = vpack.c.bf16 %v2634, %v2633
        %v2665 = vpack.c.bf16 %v2636, %v2635
        %v2666 = vpack.c.bf16 %v2638, %v2637
        %v2667 = vpack.c.bf16 %v2640, %v2639
        %v2668 = vpack.c.bf16 %v2642, %v2641
        %v2669 = vpack.c.bf16 %v2644, %v2643
        %v2670 = vpack.c.bf16 %v2646, %v2645
        %v2671 = vpack.c.bf16 %v2648, %v2647
        %v2672 = vpack.c.bf16 %v2650, %v2649
        %v2673 = vpack.c.bf16 %v2652, %v2651
        %v2674 = vpack.c.bf16 %v2654, %v2653
        %v2675 = vpack.c.bf16 %v2656, %v2655
        %v2676 = vpack.c.bf16 %v2658, %v2657
        %v2677 = vpack.c.bf16 %v2660, %v2659
        %v2678 = vpack.c.bf16 %v2662, %v2661
        %v2679 = vld [vmem:[%s6] sm:$0xf]
        %v2680 = vld [vmem:[%s6 + $0x4] sm:$0xf]
        %v2681 = vld [vmem:[%s6 + $0x8] sm:$0xf]
        %v2682 = vld [vmem:[%s6 + $0xc] sm:$0xf]
        %v2683 = vld [vmem:[%s6 + $0x10] sm:$0xf]
        %v2684 = vld [vmem:[%s6 + $0x14] sm:$0xf]
        %v2685 = vld [vmem:[%s6 + $0x18] sm:$0xf]
        %v2686 = vld [vmem:[%s6 + $0x1c] sm:$0xf]
        %v2687 = vld [vmem:[%s6 + $0x20] sm:$0xf]
        %v2688 = vld [vmem:[%s6 + $0x24] sm:$0xf]
        %v2689 = vld [vmem:[%s6 + $0x28] sm:$0xf]
        %v2690 = vld [vmem:[%s6 + $0x2c] sm:$0xf]
        %v2691 = vld [vmem:[%s6 + $0x30] sm:$0xf]
        %v2692 = vld [vmem:[%s6 + $0x34] sm:$0xf]
        %v2693 = vld [vmem:[%s6 + $0x38] sm:$0xf]
        %v2694 = vld [vmem:[%s6 + $0x3c] sm:$0xf]
        %v2695 = vld [vmem:[%s7] sm:$0x1]
        %v2697 = vlaneseq
        %v2698 = vshrl.u32 %v2697, 7
        %v2699 = vsub.s32 0, %v2698
        %v2700 = vrot.slane %v2695, %v2699
        %v2718 = vunpack.c.l.b16 %v2679
        %v2719 = vunpack.c.l.b16 %v2680
        %v2720 = vunpack.c.l.b16 %v2681
        %v2721 = vunpack.c.l.b16 %v2682
        %v2722 = vunpack.c.l.b16 %v2683
        %v2723 = vunpack.c.l.b16 %v2684
        %v2724 = vunpack.c.l.b16 %v2685
        %v2725 = vunpack.c.l.b16 %v2686
        %v2726 = vunpack.c.l.b16 %v2687
        %v2727 = vunpack.c.l.b16 %v2688
        %v2728 = vunpack.c.l.b16 %v2689
        %v2729 = vunpack.c.l.b16 %v2690
        %v2730 = vunpack.c.l.b16 %v2691
        %v2731 = vunpack.c.l.b16 %v2692
        %v2732 = vunpack.c.l.b16 %v2693
        %v2733 = vunpack.c.l.b16 %v2694
        %v2734 = vpack.c.b16 %v2719, %v2718
        %v2735 = vpack.c.b16 %v2721, %v2720
        %v2736 = vpack.c.b16 %v2723, %v2722
        %v2737 = vpack.c.b16 %v2725, %v2724
        %v2738 = vpack.c.b16 %v2727, %v2726
        %v2739 = vpack.c.b16 %v2729, %v2728
        %v2740 = vpack.c.b16 %v2731, %v2730
        %v2741 = vpack.c.b16 %v2733, %v2732
        %2750 = vmatprep.subr.bf16.mxu0 0
        %2751 = vmatpush1.bf16.msra.mxu0 %v2741
        %2752 = vmatprep.subr.bf16.mxu0 0
        %2753 = vmatpush1.bf16.msra.mxu0 %v2740
        %2754 = vmatprep.subr.bf16.mxu0 0
        %2755 = vmatpush1.bf16.msra.mxu0 %v2739
        %2756 = vmatprep.subr.bf16.mxu0 0
        %2757 = vmatpush1.bf16.msra.mxu0 %v2738
        %2758 = vmatprep.subr.bf16.mxu0 0
        %2759 = vmatpush1.bf16.msra.mxu0 %v2737
        %2760 = vmatprep.subr.bf16.mxu0 0
        %2761 = vmatpush1.bf16.msra.mxu0 %v2736
        %2762 = vmatprep.subr.bf16.mxu0 0
        %2763 = vmatpush1.bf16.msra.mxu0 %v2735
        %2764 = vmatprep.subr.bf16.mxu0 0
        %2765 = vmatpush1.bf16.msra.mxu0 %v2734
        %2766 = vmatprep.subr.bf16.mxu0 0
        %2767 = vmatpush2.bf16.msra.mxu0 0
        %2768 = vmatprep.subr.bf16.mxu0 0
        %2769 = vmatpush2.bf16.msra.mxu0 0
        %2770 = vmatprep.subr.bf16.mxu0 0
        %2771 = vmatpush2.bf16.msra.mxu0 0
        %2772 = vmatprep.subr.bf16.mxu0 0
        %2773 = vmatpush2.bf16.msra.mxu0 0
        %2774 = vmatprep.subr.bf16.mxu0 0
        %2775 = vmatpush2.bf16.msra.mxu0 0
        %2776 = vmatprep.subr.bf16.mxu0 0
        %2777 = vmatpush2.bf16.msra.mxu0 0
        %2778 = vmatprep.subr.bf16.mxu0 0
        %2779 = vmatpush2.bf16.msra.mxu0 0
        %2780 = vmatprep.subr.bf16.mxu0 0
        %2781 = vmatpush2.bf16.msra.mxu0 0
        %2782 = vmatprep.mubr.bf16.mxu0 0
        %2783 = vmatmul.mubr.bf16.gmra.mxu0 %v2663
        %v2784 = vpop.f32.mrf.mxu0
        %v2785 = vadd.f32 %v2700, %v2784
        %v2786 = vpop.f32.mrf.mxu0
        %v2787 = vpop.f32.mrf.mxu0
        %v2788 = vadd.f32 %v2700, %v2787
        %v2789 = vpop.f32.mrf.mxu0
        %2790 = vmatprep.mubr.bf16.mxu0 0
        %2791 = vmatmul.mubr.bf16.gmra.mxu0 %v2664
        %v2792 = vpop.f32.mrf.mxu0
        %v2793 = vadd.f32 %v2700, %v2792
        %v2794 = vpop.f32.mrf.mxu0
        %v2795 = vpop.f32.mrf.mxu0
        %v2796 = vadd.f32 %v2700, %v2795
        %v2797 = vpop.f32.mrf.mxu0
        %2798 = vmatprep.mubr.bf16.mxu0 0
        %2799 = vmatmul.mubr.bf16.gmra.mxu0 %v2665
        %v2800 = vpop.f32.mrf.mxu0
        %v2801 = vadd.f32 %v2700, %v2800
        %v2802 = vpop.f32.mrf.mxu0
        %v2803 = vpop.f32.mrf.mxu0
        %v2804 = vadd.f32 %v2700, %v2803
        %v2805 = vpop.f32.mrf.mxu0
        %2806 = vmatprep.mubr.bf16.mxu0 0
        %2807 = vmatmul.mubr.bf16.gmra.mxu0 %v2666
        %v2808 = vpop.f32.mrf.mxu0
        %v2809 = vadd.f32 %v2700, %v2808
        %v2810 = vpop.f32.mrf.mxu0
        %v2811 = vpop.f32.mrf.mxu0
        %v2812 = vadd.f32 %v2700, %v2811
        %v2813 = vpop.f32.mrf.mxu0
        %2814 = vmatprep.mubr.bf16.mxu0 0
        %2815 = vmatmul.mubr.bf16.gmra.mxu0 %v2667
        %v2816 = vpop.f32.mrf.mxu0
        %v2817 = vadd.f32 %v2700, %v2816
        %v2818 = vpop.f32.mrf.mxu0
        %v2819 = vpop.f32.mrf.mxu0
        %v2820 = vadd.f32 %v2700, %v2819
        %v2821 = vpop.f32.mrf.mxu0
        %2822 = vmatprep.mubr.bf16.mxu0 0
        %2823 = vmatmul.mubr.bf16.gmra.mxu0 %v2668
        %v2824 = vpop.f32.mrf.mxu0
        %v2825 = vadd.f32 %v2700, %v2824
        %v2826 = vpop.f32.mrf.mxu0
        %v2827 = vpop.f32.mrf.mxu0
        %v2828 = vadd.f32 %v2700, %v2827
        %v2829 = vpop.f32.mrf.mxu0
        %2830 = vmatprep.mubr.bf16.mxu0 0
        %2831 = vmatmul.mubr.bf16.gmra.mxu0 %v2669
        %v2832 = vpop.f32.mrf.mxu0
        %v2833 = vadd.f32 %v2700, %v2832
        %v2834 = vpop.f32.mrf.mxu0
        %v2835 = vpop.f32.mrf.mxu0
        %v2836 = vadd.f32 %v2700, %v2835
        %v2837 = vpop.f32.mrf.mxu0
        %2838 = vmatprep.mubr.bf16.mxu0 0
        %2839 = vmatmul.mubr.bf16.gmra.mxu0 %v2670
        %v2840 = vpop.f32.mrf.mxu0
        %v2841 = vadd.f32 %v2700, %v2840
        %v2842 = vpop.f32.mrf.mxu0
        %v2843 = vpop.f32.mrf.mxu0
        %v2844 = vadd.f32 %v2700, %v2843
        %v2845 = vpop.f32.mrf.mxu0
        %2846 = vmatprep.mubr.bf16.mxu0 0
        %2847 = vmatmul.mubr.bf16.gmra.mxu0 %v2671
        %v2848 = vpop.f32.mrf.mxu0
        %v2849 = vadd.f32 %v2700, %v2848
        %v2850 = vpop.f32.mrf.mxu0
        %v2851 = vpop.f32.mrf.mxu0
        %v2852 = vadd.f32 %v2700, %v2851
        %v2853 = vpop.f32.mrf.mxu0
        %2854 = vmatprep.mubr.bf16.mxu0 0
        %2855 = vmatmul.mubr.bf16.gmra.mxu0 %v2672
        %v2856 = vpop.f32.mrf.mxu0
        %v2857 = vadd.f32 %v2700, %v2856
        %v2858 = vpop.f32.mrf.mxu0
        %v2859 = vpop.f32.mrf.mxu0
        %v2860 = vadd.f32 %v2700, %v2859
        %v2861 = vpop.f32.mrf.mxu0
        %2862 = vmatprep.mubr.bf16.mxu0 0
        %2863 = vmatmul.mubr.bf16.gmra.mxu0 %v2673
        %v2864 = vpop.f32.mrf.mxu0
        %v2865 = vadd.f32 %v2700, %v2864
        %v2866 = vpop.f32.mrf.mxu0
        %v2867 = vpop.f32.mrf.mxu0
        %v2868 = vadd.f32 %v2700, %v2867
        %v2869 = vpop.f32.mrf.mxu0
        %2870 = vmatprep.mubr.bf16.mxu0 0
        %2871 = vmatmul.mubr.bf16.gmra.mxu0 %v2674
        %v2872 = vpop.f32.mrf.mxu0
        %v2873 = vadd.f32 %v2700, %v2872
        %v2874 = vpop.f32.mrf.mxu0
        %v2875 = vpop.f32.mrf.mxu0
        %v2876 = vadd.f32 %v2700, %v2875
        %v2877 = vpop.f32.mrf.mxu0
        %2878 = vmatprep.mubr.bf16.mxu0 0
        %2879 = vmatmul.mubr.bf16.gmra.mxu0 %v2675
        %v2880 = vpop.f32.mrf.mxu0
        %v2881 = vadd.f32 %v2700, %v2880
        %v2882 = vpop.f32.mrf.mxu0
        %v2883 = vpop.f32.mrf.mxu0
        %v2884 = vadd.f32 %v2700, %v2883
        %v2885 = vpop.f32.mrf.mxu0
        %2886 = vmatprep.mubr.bf16.mxu0 0
        %2887 = vmatmul.mubr.bf16.gmra.mxu0 %v2676
        %v2888 = vpop.f32.mrf.mxu0
        %v2889 = vadd.f32 %v2700, %v2888
        %v2890 = vpop.f32.mrf.mxu0
        %v2891 = vpop.f32.mrf.mxu0
        %v2892 = vadd.f32 %v2700, %v2891
        %v2893 = vpop.f32.mrf.mxu0
        %2894 = vmatprep.mubr.bf16.mxu0 0
        %2895 = vmatmul.mubr.bf16.gmra.mxu0 %v2677
        %v2896 = vpop.f32.mrf.mxu0
        %v2897 = vadd.f32 %v2700, %v2896
        %v2898 = vpop.f32.mrf.mxu0
        %v2899 = vpop.f32.mrf.mxu0
        %v2900 = vadd.f32 %v2700, %v2899
        %v2901 = vpop.f32.mrf.mxu0
        %2902 = vmatprep.mubr.bf16.mxu0 0
        %2903 = vmatmul.mubr.bf16.gmra.mxu0 %v2678
        %v2904 = vpop.f32.mrf.mxu0
        %v2905 = vadd.f32 %v2700, %v2904
        %v2906 = vpop.f32.mrf.mxu0
        %v2907 = vpop.f32.mrf.mxu0
        %v2908 = vadd.f32 %v2700, %v2907
        %v2909 = vpop.f32.mrf.mxu0
        %2910 = vdwg.mxu0
        %2943 = vrot.lane.b32.xlu0 %v1026, 64
        %v2944 = vpop.permute.xlu0 %2943
        %2945 = vrot.lane.b32.xlu0 %v1030, 64
        %v2946 = vpop.permute.xlu0 %2945
        %2947 = vrot.lane.b32.xlu0 %v1036, 64
        %v2948 = vpop.permute.xlu0 %2947
        %2949 = vrot.lane.b32.xlu0 %v1040, 64
        %v2950 = vpop.permute.xlu0 %2949
        %2951 = vrot.lane.b32.xlu0 %v1046, 64
        %v2952 = vpop.permute.xlu0 %2951
        %2953 = vrot.lane.b32.xlu0 %v1050, 64
        %v2954 = vpop.permute.xlu0 %2953
        %2955 = vrot.lane.b32.xlu0 %v1056, 64
        %v2956 = vpop.permute.xlu0 %2955
        %2957 = vrot.lane.b32.xlu0 %v1060, 64
        %v2958 = vpop.permute.xlu0 %2957
        %2959 = vrot.lane.b32.xlu0 %v1066, 64
        %v2960 = vpop.permute.xlu0 %2959
        %2961 = vrot.lane.b32.xlu0 %v1070, 64
        %v2962 = vpop.permute.xlu0 %2961
        %2963 = vrot.lane.b32.xlu0 %v1076, 64
        %v2964 = vpop.permute.xlu0 %2963
        %2965 = vrot.lane.b32.xlu0 %v1080, 64
        %v2966 = vpop.permute.xlu0 %2965
        %2967 = vrot.lane.b32.xlu0 %v1086, 64
        %v2968 = vpop.permute.xlu0 %2967
        %2969 = vrot.lane.b32.xlu0 %v1090, 64
        %v2970 = vpop.permute.xlu0 %2969
        %2971 = vrot.lane.b32.xlu0 %v1096, 64
        %v2972 = vpop.permute.xlu0 %2971
        %2973 = vrot.lane.b32.xlu0 %v1100, 64
        %v2974 = vpop.permute.xlu0 %2973
        %2975 = vrot.lane.b32.xlu0 %v1106, 64
        %v2976 = vpop.permute.xlu0 %2975
        %2977 = vrot.lane.b32.xlu0 %v1110, 64
        %v2978 = vpop.permute.xlu0 %2977
        %2979 = vrot.lane.b32.xlu0 %v1116, 64
        %v2980 = vpop.permute.xlu0 %2979
        %2981 = vrot.lane.b32.xlu0 %v1120, 64
        %v2982 = vpop.permute.xlu0 %2981
        %2983 = vrot.lane.b32.xlu0 %v1126, 64
        %v2984 = vpop.permute.xlu0 %2983
        %2985 = vrot.lane.b32.xlu0 %v1130, 64
        %v2986 = vpop.permute.xlu0 %2985
        %2987 = vrot.lane.b32.xlu0 %v1136, 64
        %v2988 = vpop.permute.xlu0 %2987
        %2989 = vrot.lane.b32.xlu0 %v1140, 64
        %v2990 = vpop.permute.xlu0 %2989
        %2991 = vrot.lane.b32.xlu0 %v1146, 64
        %v2992 = vpop.permute.xlu0 %2991
        %2993 = vrot.lane.b32.xlu0 %v1150, 64
        %v2994 = vpop.permute.xlu0 %2993
        %2995 = vrot.lane.b32.xlu0 %v1156, 64
        %v2996 = vpop.permute.xlu0 %2995
        %2997 = vrot.lane.b32.xlu0 %v1160, 64
        %v2998 = vpop.permute.xlu0 %2997
        %2999 = vrot.lane.b32.xlu0 %v1166, 64
        %v3000 = vpop.permute.xlu0 %2999
        %3001 = vrot.lane.b32.xlu0 %v1170, 64
        %v3002 = vpop.permute.xlu0 %3001
        %3003 = vrot.lane.b32.xlu0 %v1176, 64
        %v3004 = vpop.permute.xlu0 %3003
        %3005 = vrot.lane.b32.xlu0 %v1180, 64
        %v3006 = vpop.permute.xlu0 %3005
        %v3039 = vmul.f32 %v2785, %v2944
        %v3040 = vmul.f32 %v2788, %v2946
        %v3041 = vmul.f32 %v2793, %v2948
        %v3042 = vmul.f32 %v2796, %v2950
        %v3043 = vmul.f32 %v2801, %v2952
        %v3044 = vmul.f32 %v2804, %v2954
        %v3045 = vmul.f32 %v2809, %v2956
        %v3046 = vmul.f32 %v2812, %v2958
        %v3047 = vmul.f32 %v2817, %v2960
        %v3048 = vmul.f32 %v2820, %v2962
        %v3049 = vmul.f32 %v2825, %v2964
        %v3050 = vmul.f32 %v2828, %v2966
        %v3051 = vmul.f32 %v2833, %v2968
        %v3052 = vmul.f32 %v2836, %v2970
        %v3053 = vmul.f32 %v2841, %v2972
        %v3054 = vmul.f32 %v2844, %v2974
        %v3055 = vmul.f32 %v2849, %v2976
        %v3056 = vmul.f32 %v2852, %v2978
        %v3057 = vmul.f32 %v2857, %v2980
        %v3058 = vmul.f32 %v2860, %v2982
        %v3059 = vmul.f32 %v2865, %v2984
        %v3060 = vmul.f32 %v2868, %v2986
        %v3061 = vmul.f32 %v2873, %v2988
        %v3062 = vmul.f32 %v2876, %v2990
        %v3063 = vmul.f32 %v2881, %v2992
        %v3064 = vmul.f32 %v2884, %v2994
        %v3065 = vmul.f32 %v2889, %v2996
        %v3066 = vmul.f32 %v2892, %v2998
        %v3067 = vmul.f32 %v2897, %v3000
        %v3068 = vmul.f32 %v2900, %v3002
        %v3069 = vmul.f32 %v2905, %v3004
        %v3070 = vmul.f32 %v2908, %v3006
        %3103 = vrot.lane.b32.xlu0 %v1186, 64
        %v3104 = vpop.permute.xlu0 %3103
        %3105 = vrot.lane.b32.xlu0 %v1190, 64
        %v3106 = vpop.permute.xlu0 %3105
        %3107 = vrot.lane.b32.xlu0 %v1196, 64
        %v3108 = vpop.permute.xlu0 %3107
        %3109 = vrot.lane.b32.xlu0 %v1200, 64
        %v3110 = vpop.permute.xlu0 %3109
        %3111 = vrot.lane.b32.xlu0 %v1206, 64
        %v3112 = vpop.permute.xlu0 %3111
        %3113 = vrot.lane.b32.xlu0 %v1210, 64
        %v3114 = vpop.permute.xlu0 %3113
        %3115 = vrot.lane.b32.xlu0 %v1216, 64
        %v3116 = vpop.permute.xlu0 %3115
        %3117 = vrot.lane.b32.xlu0 %v1220, 64
        %v3118 = vpop.permute.xlu0 %3117
        %3119 = vrot.lane.b32.xlu0 %v1226, 64
        %v3120 = vpop.permute.xlu0 %3119
        %3121 = vrot.lane.b32.xlu0 %v1230, 64
        %v3122 = vpop.permute.xlu0 %3121
        %3123 = vrot.lane.b32.xlu0 %v1236, 64
        %v3124 = vpop.permute.xlu0 %3123
        %3125 = vrot.lane.b32.xlu0 %v1240, 64
        %v3126 = vpop.permute.xlu0 %3125
        %3127 = vrot.lane.b32.xlu0 %v1246, 64
        %v3128 = vpop.permute.xlu0 %3127
        %3129 = vrot.lane.b32.xlu0 %v1250, 64
        %v3130 = vpop.permute.xlu0 %3129
        %3131 = vrot.lane.b32.xlu0 %v1256, 64
        %v3132 = vpop.permute.xlu0 %3131
        %3133 = vrot.lane.b32.xlu0 %v1260, 64
        %v3134 = vpop.permute.xlu0 %3133
        %3135 = vrot.lane.b32.xlu0 %v1266, 64
        %v3136 = vpop.permute.xlu0 %3135
        %3137 = vrot.lane.b32.xlu0 %v1270, 64
        %v3138 = vpop.permute.xlu0 %3137
        %3139 = vrot.lane.b32.xlu0 %v1276, 64
        %v3140 = vpop.permute.xlu0 %3139
        %3141 = vrot.lane.b32.xlu0 %v1280, 64
        %v3142 = vpop.permute.xlu0 %3141
        %3143 = vrot.lane.b32.xlu0 %v1286, 64
        %v3144 = vpop.permute.xlu0 %3143
        %3145 = vrot.lane.b32.xlu0 %v1290, 64
        %v3146 = vpop.permute.xlu0 %3145
        %3147 = vrot.lane.b32.xlu0 %v1296, 64
        %v3148 = vpop.permute.xlu0 %3147
        %3149 = vrot.lane.b32.xlu0 %v1300, 64
        %v3150 = vpop.permute.xlu0 %3149
        %3151 = vrot.lane.b32.xlu0 %v1306, 64
        %v3152 = vpop.permute.xlu0 %3151
        %3153 = vrot.lane.b32.xlu0 %v1310, 64
        %v3154 = vpop.permute.xlu0 %3153
        %3155 = vrot.lane.b32.xlu0 %v1316, 64
        %v3156 = vpop.permute.xlu0 %3155
        %3157 = vrot.lane.b32.xlu0 %v1320, 64
        %v3158 = vpop.permute.xlu0 %3157
        %3159 = vrot.lane.b32.xlu0 %v1326, 64
        %v3160 = vpop.permute.xlu0 %3159
        %3161 = vrot.lane.b32.xlu0 %v1330, 64
        %v3162 = vpop.permute.xlu0 %3161
        %3163 = vrot.lane.b32.xlu0 %v1336, 64
        %v3164 = vpop.permute.xlu0 %3163
        %3165 = vrot.lane.b32.xlu0 %v1340, 64
        %v3166 = vpop.permute.xlu0 %3165
        %v3199 = vmul.f32 %v2785, %v3104
        %v3200 = vmul.f32 %v2788, %v3106
        %v3201 = vmul.f32 %v2793, %v3108
        %v3202 = vmul.f32 %v2796, %v3110
        %v3203 = vmul.f32 %v2801, %v3112
        %v3204 = vmul.f32 %v2804, %v3114
        %v3205 = vmul.f32 %v2809, %v3116
        %v3206 = vmul.f32 %v2812, %v3118
        %v3207 = vmul.f32 %v2817, %v3120
        %v3208 = vmul.f32 %v2820, %v3122
        %v3209 = vmul.f32 %v2825, %v3124
        %v3210 = vmul.f32 %v2828, %v3126
        %v3211 = vmul.f32 %v2833, %v3128
        %v3212 = vmul.f32 %v2836, %v3130
        %v3213 = vmul.f32 %v2841, %v3132
        %v3214 = vmul.f32 %v2844, %v3134
        %v3215 = vmul.f32 %v2849, %v3136
        %v3216 = vmul.f32 %v2852, %v3138
        %v3217 = vmul.f32 %v2857, %v3140
        %v3218 = vmul.f32 %v2860, %v3142
        %v3219 = vmul.f32 %v2865, %v3144
        %v3220 = vmul.f32 %v2868, %v3146
        %v3221 = vmul.f32 %v2873, %v3148
        %v3222 = vmul.f32 %v2876, %v3150
        %v3223 = vmul.f32 %v2881, %v3152
        %v3224 = vmul.f32 %v2884, %v3154
        %v3225 = vmul.f32 %v2889, %v3156
        %v3226 = vmul.f32 %v2892, %v3158
        %v3227 = vmul.f32 %v2897, %v3160
        %v3228 = vmul.f32 %v2900, %v3162
        %v3229 = vmul.f32 %v2905, %v3164
        %v3230 = vmul.f32 %v2908, %v3166
        %3263 = vrot.lane.b32.xlu0 %v1346, 64
        %v3264 = vpop.permute.xlu0 %3263
        %3265 = vrot.lane.b32.xlu0 %v1350, 64
        %v3266 = vpop.permute.xlu0 %3265
        %3267 = vrot.lane.b32.xlu0 %v1356, 64
        %v3268 = vpop.permute.xlu0 %3267
        %3269 = vrot.lane.b32.xlu0 %v1360, 64
        %v3270 = vpop.permute.xlu0 %3269
        %3271 = vrot.lane.b32.xlu0 %v1366, 64
        %v3272 = vpop.permute.xlu0 %3271
        %3273 = vrot.lane.b32.xlu0 %v1370, 64
        %v3274 = vpop.permute.xlu0 %3273
        %3275 = vrot.lane.b32.xlu0 %v1376, 64
        %v3276 = vpop.permute.xlu0 %3275
        %3277 = vrot.lane.b32.xlu0 %v1380, 64
        %v3278 = vpop.permute.xlu0 %3277
        %3279 = vrot.lane.b32.xlu0 %v1386, 64
        %v3280 = vpop.permute.xlu0 %3279
        %3281 = vrot.lane.b32.xlu0 %v1390, 64
        %v3282 = vpop.permute.xlu0 %3281
        %3283 = vrot.lane.b32.xlu0 %v1396, 64
        %v3284 = vpop.permute.xlu0 %3283
        %3285 = vrot.lane.b32.xlu0 %v1400, 64
        %v3286 = vpop.permute.xlu0 %3285
        %3287 = vrot.lane.b32.xlu0 %v1406, 64
        %v3288 = vpop.permute.xlu0 %3287
        %3289 = vrot.lane.b32.xlu0 %v1410, 64
        %v3290 = vpop.permute.xlu0 %3289
        %3291 = vrot.lane.b32.xlu0 %v1416, 64
        %v3292 = vpop.permute.xlu0 %3291
        %3293 = vrot.lane.b32.xlu0 %v1420, 64
        %v3294 = vpop.permute.xlu0 %3293
        %3295 = vrot.lane.b32.xlu0 %v1426, 64
        %v3296 = vpop.permute.xlu0 %3295
        %3297 = vrot.lane.b32.xlu0 %v1430, 64
        %v3298 = vpop.permute.xlu0 %3297
        %3299 = vrot.lane.b32.xlu0 %v1436, 64
        %v3300 = vpop.permute.xlu0 %3299
        %3301 = vrot.lane.b32.xlu0 %v1440, 64
        %v3302 = vpop.permute.xlu0 %3301
        %3303 = vrot.lane.b32.xlu0 %v1446, 64
        %v3304 = vpop.permute.xlu0 %3303
        %3305 = vrot.lane.b32.xlu0 %v1450, 64
        %v3306 = vpop.permute.xlu0 %3305
        %3307 = vrot.lane.b32.xlu0 %v1456, 64
        %v3308 = vpop.permute.xlu0 %3307
        %3309 = vrot.lane.b32.xlu0 %v1460, 64
        %v3310 = vpop.permute.xlu0 %3309
        %3311 = vrot.lane.b32.xlu0 %v1466, 64
        %v3312 = vpop.permute.xlu0 %3311
        %3313 = vrot.lane.b32.xlu0 %v1470, 64
        %v3314 = vpop.permute.xlu0 %3313
        %3315 = vrot.lane.b32.xlu0 %v1476, 64
        %v3316 = vpop.permute.xlu0 %3315
        %3317 = vrot.lane.b32.xlu0 %v1480, 64
        %v3318 = vpop.permute.xlu0 %3317
        %3319 = vrot.lane.b32.xlu0 %v1486, 64
        %v3320 = vpop.permute.xlu0 %3319
        %3321 = vrot.lane.b32.xlu0 %v1490, 64
        %v3322 = vpop.permute.xlu0 %3321
        %3323 = vrot.lane.b32.xlu0 %v1496, 64
        %v3324 = vpop.permute.xlu0 %3323
        %3325 = vrot.lane.b32.xlu0 %v1500, 64
        %v3326 = vpop.permute.xlu0 %3325
        %v3359 = vmul.f32 %v2785, %v3264
        %v3360 = vmul.f32 %v2788, %v3266
        %v3361 = vmul.f32 %v2793, %v3268
        %v3362 = vmul.f32 %v2796, %v3270
        %v3363 = vmul.f32 %v2801, %v3272
        %v3364 = vmul.f32 %v2804, %v3274
        %v3365 = vmul.f32 %v2809, %v3276
        %v3366 = vmul.f32 %v2812, %v3278
        %v3367 = vmul.f32 %v2817, %v3280
        %v3368 = vmul.f32 %v2820, %v3282
        %v3369 = vmul.f32 %v2825, %v3284
        %v3370 = vmul.f32 %v2828, %v3286
        %v3371 = vmul.f32 %v2833, %v3288
        %v3372 = vmul.f32 %v2836, %v3290
        %v3373 = vmul.f32 %v2841, %v3292
        %v3374 = vmul.f32 %v2844, %v3294
        %v3375 = vmul.f32 %v2849, %v3296
        %v3376 = vmul.f32 %v2852, %v3298
        %v3377 = vmul.f32 %v2857, %v3300
        %v3378 = vmul.f32 %v2860, %v3302
        %v3379 = vmul.f32 %v2865, %v3304
        %v3380 = vmul.f32 %v2868, %v3306
        %v3381 = vmul.f32 %v2873, %v3308
        %v3382 = vmul.f32 %v2876, %v3310
        %v3383 = vmul.f32 %v2881, %v3312
        %v3384 = vmul.f32 %v2884, %v3314
        %v3385 = vmul.f32 %v2889, %v3316
        %v3386 = vmul.f32 %v2892, %v3318
        %v3387 = vmul.f32 %v2897, %v3320
        %v3388 = vmul.f32 %v2900, %v3322
        %v3389 = vmul.f32 %v2905, %v3324
        %v3390 = vmul.f32 %v2908, %v3326
        %3423 = vrot.lane.b32.xlu0 %v3199, 64
        %v3424 = vpop.permute.xlu0 %3423
        %3425 = vrot.lane.b32.xlu0 %v3200, 64
        %v3426 = vpop.permute.xlu0 %3425
        %3427 = vrot.lane.b32.xlu0 %v3201, 64
        %v3428 = vpop.permute.xlu0 %3427
        %3429 = vrot.lane.b32.xlu0 %v3202, 64
        %v3430 = vpop.permute.xlu0 %3429
        %3431 = vrot.lane.b32.xlu0 %v3203, 64
        %v3432 = vpop.permute.xlu0 %3431
        %3433 = vrot.lane.b32.xlu0 %v3204, 64
        %v3434 = vpop.permute.xlu0 %3433
        %3435 = vrot.lane.b32.xlu0 %v3205, 64
        %v3436 = vpop.permute.xlu0 %3435
        %3437 = vrot.lane.b32.xlu0 %v3206, 64
        %v3438 = vpop.permute.xlu0 %3437
        %3439 = vrot.lane.b32.xlu0 %v3207, 64
        %v3440 = vpop.permute.xlu0 %3439
        %3441 = vrot.lane.b32.xlu0 %v3208, 64
        %v3442 = vpop.permute.xlu0 %3441
        %3443 = vrot.lane.b32.xlu0 %v3209, 64
        %v3444 = vpop.permute.xlu0 %3443
        %3445 = vrot.lane.b32.xlu0 %v3210, 64
        %v3446 = vpop.permute.xlu0 %3445
        %3447 = vrot.lane.b32.xlu0 %v3211, 64
        %v3448 = vpop.permute.xlu0 %3447
        %3449 = vrot.lane.b32.xlu0 %v3212, 64
        %v3450 = vpop.permute.xlu0 %3449
        %3451 = vrot.lane.b32.xlu0 %v3213, 64
        %v3452 = vpop.permute.xlu0 %3451
        %3453 = vrot.lane.b32.xlu0 %v3214, 64
        %v3454 = vpop.permute.xlu0 %3453
        %3455 = vrot.lane.b32.xlu0 %v3215, 64
        %v3456 = vpop.permute.xlu0 %3455
        %3457 = vrot.lane.b32.xlu0 %v3216, 64
        %v3458 = vpop.permute.xlu0 %3457
        %3459 = vrot.lane.b32.xlu0 %v3217, 64
        %v3460 = vpop.permute.xlu0 %3459
        %3461 = vrot.lane.b32.xlu0 %v3218, 64
        %v3462 = vpop.permute.xlu0 %3461
        %3463 = vrot.lane.b32.xlu0 %v3219, 64
        %v3464 = vpop.permute.xlu0 %3463
        %3465 = vrot.lane.b32.xlu0 %v3220, 64
        %v3466 = vpop.permute.xlu0 %3465
        %3467 = vrot.lane.b32.xlu0 %v3221, 64
        %v3468 = vpop.permute.xlu0 %3467
        %3469 = vrot.lane.b32.xlu0 %v3222, 64
        %v3470 = vpop.permute.xlu0 %3469
        %3471 = vrot.lane.b32.xlu0 %v3223, 64
        %v3472 = vpop.permute.xlu0 %3471
        %3473 = vrot.lane.b32.xlu0 %v3224, 64
        %v3474 = vpop.permute.xlu0 %3473
        %3475 = vrot.lane.b32.xlu0 %v3225, 64
        %v3476 = vpop.permute.xlu0 %3475
        %3477 = vrot.lane.b32.xlu0 %v3226, 64
        %v3478 = vpop.permute.xlu0 %3477
        %3479 = vrot.lane.b32.xlu0 %v3227, 64
        %v3480 = vpop.permute.xlu0 %3479
        %3481 = vrot.lane.b32.xlu0 %v3228, 64
        %v3482 = vpop.permute.xlu0 %3481
        %3483 = vrot.lane.b32.xlu0 %v3229, 64
        %v3484 = vpop.permute.xlu0 %3483
        %3485 = vrot.lane.b32.xlu0 %v3230, 64
        %v3486 = vpop.permute.xlu0 %3485
        %vm3519 = vcmask 523264
        %v3520 = vsel %vm3519, %v2785, %v3039
        %v3521 = vsel %vm3519, %v2788, %v3040
        %v3522 = vsel %vm3519, %v2793, %v3041
        %v3523 = vsel %vm3519, %v2796, %v3042
        %v3524 = vsel %vm3519, %v2801, %v3043
        %v3525 = vsel %vm3519, %v2804, %v3044
        %v3526 = vsel %vm3519, %v2809, %v3045
        %v3527 = vsel %vm3519, %v2812, %v3046
        %v3528 = vsel %vm3519, %v2817, %v3047
        %v3529 = vsel %vm3519, %v2820, %v3048
        %v3530 = vsel %vm3519, %v2825, %v3049
        %v3531 = vsel %vm3519, %v2828, %v3050
        %v3532 = vsel %vm3519, %v2833, %v3051
        %v3533 = vsel %vm3519, %v2836, %v3052
        %v3534 = vsel %vm3519, %v2841, %v3053
        %v3535 = vsel %vm3519, %v2844, %v3054
        %v3536 = vsel %vm3519, %v2849, %v3055
        %v3537 = vsel %vm3519, %v2852, %v3056
        %v3538 = vsel %vm3519, %v2857, %v3057
        %v3539 = vsel %vm3519, %v2860, %v3058
        %v3540 = vsel %vm3519, %v2865, %v3059
        %v3541 = vsel %vm3519, %v2868, %v3060
        %v3542 = vsel %vm3519, %v2873, %v3061
        %v3543 = vsel %vm3519, %v2876, %v3062
        %v3544 = vsel %vm3519, %v2881, %v3063
        %v3545 = vsel %vm3519, %v2884, %v3064
        %v3546 = vsel %vm3519, %v2889, %v3065
        %v3547 = vsel %vm3519, %v2892, %v3066
        %v3548 = vsel %vm3519, %v2897, %v3067
        %v3549 = vsel %vm3519, %v2900, %v3068
        %v3550 = vsel %vm3519, %v2905, %v3069
        %v3551 = vsel %vm3519, %v2908, %v3070
        %v3552 = vsel %vm3519, %v3424, %v3359
        %v3553 = vsel %vm3519, %v3426, %v3360
        %v3554 = vsel %vm3519, %v3428, %v3361
        %v3555 = vsel %vm3519, %v3430, %v3362
        %v3556 = vsel %vm3519, %v3432, %v3363
        %v3557 = vsel %vm3519, %v3434, %v3364
        %v3558 = vsel %vm3519, %v3436, %v3365
        %v3559 = vsel %vm3519, %v3438, %v3366
        %v3560 = vsel %vm3519, %v3440, %v3367
        %v3561 = vsel %vm3519, %v3442, %v3368
        %v3562 = vsel %vm3519, %v3444, %v3369
        %v3563 = vsel %vm3519, %v3446, %v3370
        %v3564 = vsel %vm3519, %v3448, %v3371
        %v3565 = vsel %vm3519, %v3450, %v3372
        %v3566 = vsel %vm3519, %v3452, %v3373
        %v3567 = vsel %vm3519, %v3454, %v3374
        %v3568 = vsel %vm3519, %v3456, %v3375
        %v3569 = vsel %vm3519, %v3458, %v3376
        %v3570 = vsel %vm3519, %v3460, %v3377
        %v3571 = vsel %vm3519, %v3462, %v3378
        %v3572 = vsel %vm3519, %v3464, %v3379
        %v3573 = vsel %vm3519, %v3466, %v3380
        %v3574 = vsel %vm3519, %v3468, %v3381
        %v3575 = vsel %vm3519, %v3470, %v3382
        %v3576 = vsel %vm3519, %v3472, %v3383
        %v3577 = vsel %vm3519, %v3474, %v3384
        %v3578 = vsel %vm3519, %v3476, %v3385
        %v3579 = vsel %vm3519, %v3478, %v3386
        %v3580 = vsel %vm3519, %v3480, %v3387
        %v3581 = vsel %vm3519, %v3482, %v3388
        %v3582 = vsel %vm3519, %v3484, %v3389
        %v3583 = vsel %vm3519, %v3486, %v3390
        %3584 = vst [vmem:[%s746] sm:$0xff] %v3520
        %3585 = vst [vmem:[%s746 + $0x8] sm:$0xff] %v3552
        %3586 = vst [vmem:[%s746 + $0x10] sm:$0xff] %v3521
        %3587 = vst [vmem:[%s746 + $0x18] sm:$0xff] %v3553
        %3588 = vst [vmem:[%s746 + $0x20] sm:$0xff] %v3522
        %3589 = vst [vmem:[%s746 + $0x28] sm:$0xff] %v3554
        %3590 = vst [vmem:[%s746 + $0x30] sm:$0xff] %v3523
        %3591 = vst [vmem:[%s746 + $0x38] sm:$0xff] %v3555
        %3592 = vst [vmem:[%s746 + $0x40] sm:$0xff] %v3524
        %3593 = vst [vmem:[%s746 + $0x48] sm:$0xff] %v3556
        %3594 = vst [vmem:[%s746 + $0x50] sm:$0xff] %v3525
        %3595 = vst [vmem:[%s746 + $0x58] sm:$0xff] %v3557
        %3596 = vst [vmem:[%s746 + $0x60] sm:$0xff] %v3526
        %3597 = vst [vmem:[%s746 + $0x68] sm:$0xff] %v3558
        %3598 = vst [vmem:[%s746 + $0x70] sm:$0xff] %v3527
        %3599 = vst [vmem:[%s746 + $0x78] sm:$0xff] %v3559
        %3600 = vst [vmem:[%s746 + $0x80] sm:$0xff] %v3528
        %3601 = vst [vmem:[%s746 + $0x88] sm:$0xff] %v3560
        %3602 = vst [vmem:[%s746 + $0x90] sm:$0xff] %v3529
        %3603 = vst [vmem:[%s746 + $0x98] sm:$0xff] %v3561
        %3604 = vst [vmem:[%s746 + $0xa0] sm:$0xff] %v3530
        %3605 = vst [vmem:[%s746 + $0xa8] sm:$0xff] %v3562
        %3606 = vst [vmem:[%s746 + $0xb0] sm:$0xff] %v3531
        %3607 = vst [vmem:[%s746 + $0xb8] sm:$0xff] %v3563
        %3608 = vst [vmem:[%s746 + $0xc0] sm:$0xff] %v3532
        %3609 = vst [vmem:[%s746 + $0xc8] sm:$0xff] %v3564
        %3610 = vst [vmem:[%s746 + $0xd0] sm:$0xff] %v3533
        %3611 = vst [vmem:[%s746 + $0xd8] sm:$0xff] %v3565
        %3612 = vst [vmem:[%s746 + $0xe0] sm:$0xff] %v3534
        %3613 = vst [vmem:[%s746 + $0xe8] sm:$0xff] %v3566
        %3614 = vst [vmem:[%s746 + $0xf0] sm:$0xff] %v3535
        %3615 = vst [vmem:[%s746 + $0xf8] sm:$0xff] %v3567
        %3616 = vst [vmem:[%s746 + $0x100] sm:$0xff] %v3536
        %3617 = vst [vmem:[%s746 + $0x108] sm:$0xff] %v3568
        %3618 = vst [vmem:[%s746 + $0x110] sm:$0xff] %v3537
        %3619 = vst [vmem:[%s746 + $0x118] sm:$0xff] %v3569
        %3620 = vst [vmem:[%s746 + $0x120] sm:$0xff] %v3538
        %3621 = vst [vmem:[%s746 + $0x128] sm:$0xff] %v3570
        %3622 = vst [vmem:[%s746 + $0x130] sm:$0xff] %v3539
        %3623 = vst [vmem:[%s746 + $0x138] sm:$0xff] %v3571
        %3624 = vst [vmem:[%s746 + $0x140] sm:$0xff] %v3540
        %3625 = vst [vmem:[%s746 + $0x148] sm:$0xff] %v3572
        %3626 = vst [vmem:[%s746 + $0x150] sm:$0xff] %v3541
        %3627 = vst [vmem:[%s746 + $0x158] sm:$0xff] %v3573
        %3628 = vst [vmem:[%s746 + $0x160] sm:$0xff] %v3542
        %3629 = vst [vmem:[%s746 + $0x168] sm:$0xff] %v3574
        %3630 = vst [vmem:[%s746 + $0x170] sm:$0xff] %v3543
        %3631 = vst [vmem:[%s746 + $0x178] sm:$0xff] %v3575
        %3632 = vst [vmem:[%s746 + $0x180] sm:$0xff] %v3544
        %3633 = vst [vmem:[%s746 + $0x188] sm:$0xff] %v3576
        %3634 = vst [vmem:[%s746 + $0x190] sm:$0xff] %v3545
        %3635 = vst [vmem:[%s746 + $0x198] sm:$0xff] %v3577
        %3636 = vst [vmem:[%s746 + $0x1a0] sm:$0xff] %v3546
        %3637 = vst [vmem:[%s746 + $0x1a8] sm:$0xff] %v3578
        %3638 = vst [vmem:[%s746 + $0x1b0] sm:$0xff] %v3547
        %3639 = vst [vmem:[%s746 + $0x1b8] sm:$0xff] %v3579
        %3640 = vst [vmem:[%s746 + $0x1c0] sm:$0xff] %v3548
        %3641 = vst [vmem:[%s746 + $0x1c8] sm:$0xff] %v3580
        %3642 = vst [vmem:[%s746 + $0x1d0] sm:$0xff] %v3549
        %3643 = vst [vmem:[%s746 + $0x1d8] sm:$0xff] %v3581
        %3644 = vst [vmem:[%s746 + $0x1e0] sm:$0xff] %v3550
        %3645 = vst [vmem:[%s746 + $0x1e8] sm:$0xff] %v3582
        %3646 = vst [vmem:[%s746 + $0x1f0] sm:$0xff] %v3551
        %3647 = vst [vmem:[%s746 + $0x1f8] sm:$0xff] %v3583
        %s3648 = smul.u32 32, %s19
        %p3649 = scmp.lt.s32.totalorder %s3648, 63
        %s3650 = scalar_select %p3649, %s3648, 63
        %s3651 = smul.addr %s3650, 2
        %s3652 = smul.addr %s3651, 8
        %s3653 = scalar_lea.vmem %s8, %s3652
        // Predicated region
        $region91: #{gated_equivariant_block.1} parent=85 // pred_check
          %p3654 = pneg %p215
        $region92: #{gated_equivariant_block.1} parent=85 // pred_check_branch
          %3656 = sbr.rel (%p3654) target = $region94
        $region93: #{gated_equivariant_block.1} parent=85 // pred_region
          %s3657 = smul.u32 32, %s19
        $region94: #{gated_equivariant_block.1} parent=85 // pred_fallthru
          _
      $region86: #{gated_equivariant_block.1} parent=5 // pred_fallthru
        _
      %p3658 = scmp.le.s32.totalorder 2, %s14
      // Predicated region
      $region95: #{gated_equivariant_block.1} parent=5 // pred_check
        %p3659 = pneg %p3658
      $region96: #{gated_equivariant_block.1} parent=5 // pred_check_branch
        %3661 = sbr.rel (%p3659) target = $region98
      $region97: #{gated_equivariant_block.1} parent=5 // pred_region
        %s3662 = ssub.s32 %s14, 2
        // Predicated region
        $region99: #{gated_equivariant_block.1} parent=97 // pred_check
          %p3663 = pneg %p221
        $region100: #{gated_equivariant_block.1} parent=97 // pred_check_branch
          %3665 = sbr.rel (%p3663) target = $region102
        $region101: #{gated_equivariant_block.1} parent=97 // pred_region
          %s3666 = smul.u32 32, %s20
          %p3667 = scmp.lt.s32.totalorder %s3666, 63
          %s3668 = scalar_select %p3667, %s3666, 63
          %s3669 = smul.addr %s3668, 2
          %s3670 = smul.addr %s3669, 8
          %s3671 = scalar_lea.vmem %s8, %s3670
        $region102: #{gated_equivariant_block.1} parent=97 // pred_fallthru
          _
      $region98: #{gated_equivariant_block.1} parent=5 // pred_fallthru
        _
    $region6: #{gated_equivariant_block.1} parent=1 // loop_footer
      %s18 = sadd.s32 1, %s14
    $region7: #{gated_equivariant_block.1} parent=1 // loop_footer_branch
      %13 = sbr.rel target = $region3
    $region8: #{gated_equivariant_block.1} parent=1 // loop_exit
      _

</llo_original>
